<compile_context>
chip_gen: v6e
topology: v6e:2x2x1
jax: 0.10.0
libtpu: 0.0.40
codegen_flags: <defaults>
</compile_context>

<pallas_src>
import functools

import jax
import jax.numpy as jnp
from jax import lax
from jax.experimental import pallas as pl
from jax.experimental.pallas import tpu as pltpu


def _round_up(x, m):
    return ((x + m - 1) // m) * m


def clam_mb_kernel(n_ref,                     # scalar prefetch: [1] int32 (valid N)
                   h_ref, wfc_ref, bfc_ref,
                   wab_ref, bab_ref, wcd_ref, bcd_ref,
                   whdt_ref, bhd_ref, wcls_ref, bcls_ref,
                   a_ref, m_ref, logits_ref,
                   m_sc, l_sc, acc_sc,
                   *, num_heads, Mdim, D, per_head, gate_dtype, compute_dtype):
    f32 = jnp.float32
    i = pl.program_id(0)
    T = h_ref.shape[0]
    C_pad = m_sc.shape[0]

    @pl.when(i == 0)
    def _init():
        m_sc[...] = jnp.full_like(m_sc, -jnp.inf)
        l_sc[...] = jnp.zeros_like(l_sc)
        acc_sc[...] = jnp.zeros_like(acc_sc)

    # number of valid rows in this tile (>= 1 always; may exceed T on full tiles)
    rem = n_ref[0] - i * T

    # fc + ReLU (+ Dropout(p) == identity in eval/forward).  h is cast to the
    # compute dtype in-kernel (no host pre-pass / padded copy of h).
    h = h_ref[...].astype(compute_dtype)                               # [T, E]
    h1 = jnp.maximum(
        jnp.dot(h, wfc_ref[...], preferred_element_type=f32) + bfc_ref[...], 0.0)
    # Zero rows past the valid range.  Only the ragged last tile has such rows
    # (Pallas loads unspecified data there); the select also kills NaN/Inf.
    # Kept unconditional: ~T*H1 VPU selects, far below the per-tile MXU work.
    row_ids = lax.broadcasted_iota(jnp.int32, (T, 1), 0)
    h1 = jnp.where(row_ids < rem, h1, 0.0)
    h1_b = h1.astype(compute_dtype)                                    # [T, H1p]

    # fused a/b gates across all heads: one matmul, lane width 2*heads*M
    gab = (jnp.dot(h1_b, wab_ref[...], preferred_element_type=f32)
           + bab_ref[...]).astype(gate_dtype)
    HM = gab.shape[1] // 2
    ab = (jnp.tanh(gab[:, :HM]) * jax.nn.sigmoid(gab[:, HM:])).astype(compute_dtype)

    if per_head:
        # Per-head c/d gates (statically unrolled): heads x ([T,M] @ [M,2D]).
        # Avoids the (heads-1)/heads wasted MXU FLOPs of the block-diagonal form.
        a_acc = jnp.zeros((C_pad, T), f32)
        for k in range(num_heads):
            ab_k = ab[:, k * Mdim:(k + 1) * Mdim]                      # [T, M]
            g = (jnp.dot(ab_k, wcd_ref[k], preferred_element_type=f32)
                 + bcd_ref[k]).astype(gate_dtype)                      # [T, 2D]
            cd_k = (jnp.tanh(g[:, :D]) * jax.nn.sigmoid(g[:, D:])).astype(compute_dtype)
            # A_T contribution: whdt[k] is [C_pad, D] with 1/heads folded in.
            a_acc = a_acc + lax.dot_general(
                whdt_ref[k], cd_k, (((1,), (1,)), ((), ())),
                preferred_element_type=f32)                            # [C_pad, T]
        A_T = a_acc + bhd_ref[...]
    else:
        # Fallback for sub-128 per-head dims: block-diagonal fused c/d gate.
        gcd = (jnp.dot(ab, wcd_ref[...], preferred_element_type=f32)
               + bcd_ref[...]).astype(gate_dtype)
        HD = gcd.shape[1] // 2
        cd = (jnp.tanh(gcd[:, :HD]) * jax.nn.sigmoid(gcd[:, HD:])).astype(compute_dtype)
        A_T = lax.dot_general(whdt_ref[...], cd, (((1,), (1,)), ((), ())),
                              preferred_element_type=f32) + bhd_ref[...]

    a_ref[...] = A_T                # pre-softmax attention (lane-dense store)

    # mask padded columns (global index >= N) with -inf for the online softmax
    col_ids = lax.broadcasted_iota(jnp.int32, (1, T), 1)
    A_m = jnp.where(col_ids < rem, A_T, -jnp.inf)

    # online softmax over instances (lane axis), per class
    tile_max = jnp.max(A_m, axis=1, keepdims=True)                     # [C_pad, 1]
    m_new = jnp.maximum(m_sc[...], tile_max)
    alpha = jnp.exp(m_sc[...] - m_new)
    p = jnp.exp(A_m - m_new)                                           # [C_pad, T]
    l_sc[...] = alpha * l_sc[...] + jnp.sum(p, axis=1, keepdims=True)
    acc_sc[...] = alpha * acc_sc[...] + jnp.dot(
        p.astype(compute_dtype), h1_b, preferred_element_type=f32)     # [C_pad, H1p]
    m_sc[...] = m_new

    @pl.when(i == pl.num_programs(0) - 1)
    def _finalize():
        inv_l = pl.reciprocal(l_sc[...], approx=False)   # exact; runs once
        M = acc_sc[...] * inv_l                                        # [C_pad, H1p]
        m_ref[...] = M
        # per-class bag classifiers: logits[c] = M[c] . wcls[c] + bcls[c]
        logits_ref[...] = (jnp.sum(M * wcls_ref[...], axis=1, keepdims=True)
                           + bcls_ref[...])                            # [C_pad, 1]


def _prep_params(params, compute_dtype):
    """Fuse per-head weights, pad C->8 sublanes and H1->128 lanes, cast to bf16."""
    (wfc, bfc, wa, ba, wb, bb, wc, bc, wd, bd, whd, bhd, wcls, bcls) = params
    num_heads, H1, Mdim = wa.shape
    D = wc.shape[2]
    n_classes = whd.shape[2]

    C_pad = _round_up(n_classes, 8)
    H1p = _round_up(H1, 128)
    dH1 = H1p - H1
    dC = C_pad - n_classes
    per_head = (Mdim % 128 == 0) and ((2 * D) % 128 == 0)

    wfc_p = jnp.pad(wfc, ((0, 0), (0, dH1)))
    bfc_p = jnp.pad(bfc, ((0, 0), (0, dH1)))

    # first gate, fused over heads: [H1p, 2*heads*M] (a-heads then b-heads)
    w_a = jnp.transpose(wa, (1, 0, 2)).reshape(H1, num_heads * Mdim)
    w_b = jnp.transpose(wb, (1, 0, 2)).reshape(H1, num_heads * Mdim)
    w_ab = jnp.pad(jnp.concatenate([w_a, w_b], axis=1), ((0, dH1), (0, 0)))
    b_a = jnp.transpose(ba, (1, 0, 2)).reshape(1, num_heads * Mdim)
    b_b = jnp.transpose(bb, (1, 0, 2)).reshape(1, num_heads * Mdim)
    b_ab = jnp.concatenate([b_a, b_b], axis=1)

    if per_head:
        # second gate per head: [heads, M, 2D] (c then d), no zero padding waste
        w_cd = jnp.concatenate([wc, wd], axis=2)                  # [heads, M, 2D]
        b_cd = jnp.concatenate([bc, bd], axis=2)                  # [heads, 1, 2D]
        # per-head, head-averaged classifier rows: whdt[k, c, d] = whd[k, d, c]/heads
        whd_t = jnp.transpose(whd, (2, 0, 1)) / num_heads          # [C, heads, D]
        whd_t = jnp.pad(whd_t, ((0, dC), (0, 0), (0, 0)))
        whd_t = jnp.transpose(whd_t, (1, 0, 2))                    # [heads, C_pad, D]
    else:
        # fallback: block-diagonal fused c/d weights [heads*M, 2*heads*D]
        eye = jnp.eye(num_heads, dtype=wc.dtype)

        def blockdiag(w):  # [heads, M, D] -> [heads*M, heads*D]
            bd_ = w[:, :, None, :] * eye[:, None, :, None]
            return bd_.reshape(num_heads * Mdim, num_heads * D)

        w_cd = jnp.concatenate([blockdiag(wc), blockdiag(wd)], axis=1)
        b_c = jnp.transpose(bc, (1, 0, 2)).reshape(1, num_heads * D)
        b_d = jnp.transpose(bd, (1, 0, 2)).reshape(1, num_heads * D)
        b_cd = jnp.concatenate([b_c, b_d], axis=1)
        whd_t = (whd.reshape(num_heads * D, n_classes) / num_heads).T  # [C, heads*D]
        whd_t = jnp.pad(whd_t, ((0, dC), (0, 0)))

    bhd_col = (jnp.sum(bhd, axis=0) / num_heads).reshape(n_classes, 1)
    bhd_col = jnp.pad(bhd_col, ((0, dC), (0, 0)))                  # [C_pad, 1]

    wcls_p = jnp.pad(wcls, ((0, dC), (0, dH1)))                    # [C_pad, H1p]
    bcls_p = jnp.pad(bcls, ((0, dC), (0, 0)))                      # [C_pad, 1]

    weights = (wfc_p.astype(compute_dtype), bfc_p,
               w_ab.astype(compute_dtype), b_ab,
               w_cd.astype(compute_dtype), b_cd,
               whd_t.astype(compute_dtype), bhd_col,
               wcls_p, bcls_p)
    dims = dict(num_heads=num_heads, Mdim=Mdim, D=D, H1=H1, H1p=H1p,
                n_classes=n_classes, C_pad=C_pad, per_head=per_head)
    return weights, dims


def clam_mb_forward(h, params, return_features=False, attention_only=False,
                    tile_n=1024, compute_dtype=jnp.bfloat16,
                    gate_dtype=jnp.float32, h_buffers=2):
    """CLAM_MB forward.  Returns (logits, Y_prob, Y_hat, A_raw, results_dict).

    tile_n: sweep 2048-4096 on v6e, 1024-2048 on v7x (64 MiB VMEM), any on v5e.
    gate_dtype: set jnp.bfloat16 on v6e/v7x (bf16 EUP path); keep f32 on v5e.
    h_buffers: set 3 on v6e if the bundle shows exposed h DMA.
    """
    N, E = h.shape
    weights, dims = _prep_params(params, compute_dtype)
    H1, H1p = dims['H1'], dims['H1p']
    C, C_pad = dims['n_classes'], dims['C_pad']

    tile_n = max(128, min(_round_up(tile_n, 128), _round_up(N, 128)))
    grid = pl.cdiv(N, tile_n)
    n_valid = jnp.array([N], jnp.int32)

    def const_spec(arr):
        nd = arr.ndim
        return pl.BlockSpec(arr.shape, lambda i, n, nd=nd: (0,) * nd)

    h_spec_kwargs = {}
    if h_buffers is not None and h_buffers > 2:
        h_spec_kwargs = dict(pipeline_mode=pl.Buffered(h_buffers))
    h_spec = pl.BlockSpec((tile_n, E), lambda i, n: (i, 0), **h_spec_kwargs)

    # VMEM budget (weights x2 for safety, h buffers, A out buffers, per-tile
    # intermediates, scratch); clamp to [32, 64] MiB (valid on v5e/v6e/v7x).
    nh, Md, Dd = dims['num_heads'], dims['Mdim'], dims['D']
    weight_bytes = sum(int(w.size) * w.dtype.itemsize for w in weights)
    cd_lanes = 2 * (Dd if dims['per_head'] else nh * Dd)
    per_tile_bytes = tile_n * (2 * E + 6 * H1p + 6 * 2 * nh * Md
                               + 6 * cd_lanes + 8 * C_pad)
    est = (2 * weight_bytes
           + max(2, h_buffers or 2) * tile_n * E * h.dtype.itemsize
           + 2 * C_pad * tile_n * 4
           + per_tile_bytes
           + 2 * C_pad * (H1p + 2) * 4)
    vmem_limit = int(min(max(est, 32 * 1024 * 1024), 64 * 1024 * 1024))

    kernel = functools.partial(
        clam_mb_kernel,
        num_heads=nh, Mdim=Md, D=Dd, per_head=dims['per_head'],
        gate_dtype=gate_dtype, compute_dtype=compute_dtype)

    grid_spec = pltpu.PrefetchScalarGridSpec(
        num_scalar_prefetch=1,
        grid=(grid,),
        in_specs=[h_spec] + [const_spec(w) for w in weights],
        out_specs=(
            pl.BlockSpec((C_pad, tile_n), lambda i, n: (0, i)),   # A^T (lane-dense)
            pl.BlockSpec((C_pad, H1p), lambda i, n: (0, 0)),      # M
            pl.BlockSpec((C_pad, 1), lambda i, n: (0, 0)),        # logits column
        ),
        scratch_shapes=[
            pltpu.VMEM((C_pad, 1), jnp.float32),    # running max
            pltpu.VMEM((C_pad, 1), jnp.float32),    # running denominator
            pltpu.VMEM((C_pad, H1p), jnp.float32),  # running pooled-feature acc
        ],
    )

    out_shape = (
        jax.ShapeDtypeStruct((C_pad, N), jnp.float32),
        jax.ShapeDtypeStruct((C_pad, H1p), jnp.float32),
        jax.ShapeDtypeStruct((C_pad, 1), jnp.float32),
    )

    A_T, M_pad, logits_col = pl.pallas_call(
        kernel,
        out_shape=out_shape,
        grid_spec=grid_spec,
        compiler_params=pltpu.CompilerParams(
            dimension_semantics=("arbitrary",),     # N carries the softmax/M reduction
            vmem_limit_bytes=vmem_limit),
    )(n_valid, h, *weights)

    A_raw = A_T[:C, :]                     # [n_classes, N] — matches torch A_raw
    if attention_only:
        return A_raw
    logits = logits_col[:C].T              # [1, n_classes]
    Y_prob = jax.nn.softmax(logits, axis=1)
    Y_hat = jnp.argmax(logits, axis=1)[:, None]          # torch.topk(., 1)[1]
    results_dict = {'features': M_pad[:C, :H1]} if return_features else {}
    return logits, Y_prob, Y_hat, A_raw, results_dict


def clam_mb_reference(h, params, compute_dtype=jnp.bfloat16):
    """Pure-JAX reference with the same bf16-matmul / f32-accumulate numerics."""
    def mm(x, w):
        return jnp.dot(x.astype(compute_dtype), w.astype(compute_dtype),
                       preferred_element_type=jnp.float32)

    (wfc, bfc, wa, ba, wb, bb, wc, bc, wd, bd, whd, bhd, wcls, bcls) = params
    h1 = jnp.maximum(mm(h, wfc) + bfc, 0.0)
    heads = []
    for k in range(wa.shape[0]):
        a = jnp.tanh(mm(h1, wa[k]) + ba[k])
        b = jax.nn.sigmoid(mm(h1, wb[k]) + bb[k])
        ab = a * b
        c = jnp.tanh(mm(ab, wc[k]) + bc[k])
        d = jax.nn.sigmoid(mm(ab, wd[k]) + bd[k])
        heads.append(mm(c * d, whd[k]) + bhd[k])
    A = jnp.mean(jnp.stack(heads), axis=0)        # [N, C]
    A_raw = A.T                                   # [C, N]
    A_sm = jax.nn.softmax(A_raw, axis=1)
    M = mm(A_sm, h1)                              # [C, H1]
    logits = (jnp.sum(M * wcls, axis=1, keepdims=True) + bcls).T
    return logits, A_raw, M


def init_params(key, E, H1, Mdim, D, num_heads, n_classes):
    ks = jax.random.split(key, 14)
    w = lambda k, shape, fan_in: jax.random.normal(k, shape, jnp.float32) / jnp.sqrt(fan_in)
    wfc  = w(ks[0],  (E, H1), E);                     bfc  = w(ks[1],  (1, H1), H1)
    wa   = w(ks[2],  (num_heads, H1, Mdim), H1);      ba   = w(ks[3],  (num_heads, 1, Mdim), H1)
    wb   = w(ks[4],  (num_heads, H1, Mdim), H1);      bb   = w(ks[5],  (num_heads, 1, Mdim), H1)
    wc   = w(ks[6],  (num_heads, Mdim, D), Mdim);     bc   = w(ks[7],  (num_heads, 1, D), Mdim)
    wd   = w(ks[8],  (num_heads, Mdim, D), Mdim);     bd   = w(ks[9],  (num_heads, 1, D), Mdim)
    whd  = w(ks[10], (num_heads, D, n_classes), D);   bhd  = w(ks[11], (num_heads, 1, n_classes), D)
    wcls = w(ks[12], (n_classes, H1), H1);            bcls = w(ks[13], (n_classes, 1), H1)
    return (wfc, bfc, wa, ba, wb, bb, wc, bc, wd, bd, whd, bhd, wcls, bcls)


if __name__ == "__main__":
    def run_case(name, N, E, H1, Mdim, D, heads, C, tile_n, seed=0):
        key = jax.random.PRNGKey(seed)
        k_h, k_p = jax.random.split(key)
        h = jax.random.normal(k_h, (N, E), jnp.float32)
        params = init_params(k_p, E, H1, Mdim, D, heads, C)
        logits, Y_prob, Y_hat, A_raw, results = clam_mb_forward(
            h, params, return_features=True, tile_n=tile_n)
        jax.block_until_ready((logits, Y_prob, Y_hat, A_raw, results['features']))

        ref_logits, ref_A_raw, ref_M = clam_mb_reference(h, params)
        assert jnp.allclose(A_raw, ref_A_raw, atol=2e-2, rtol=2e-2), name
        assert jnp.allclose(results['features'], ref_M, atol=2e-2, rtol=2e-2), name
        assert jnp.allclose(logits, ref_logits, atol=2e-2, rtol=2e-2), name
        assert logits.shape == (1, C)
        assert Y_prob.shape == (1, C)
        assert Y_hat.shape == (1, 1)
        assert A_raw.shape == (C, N)
        assert results['features'].shape == (C, H1)

    # Case 1: per-head c/d gate path (lane-aligned per-head dims), with a ragged
    # last tile (400 = 3*128 + 16) exercising the in-kernel edge masking.
    run_case("per_head", N=400, E=256, H1=128, Mdim=128, D=64, heads=4, C=2,
             tile_n=128)
    # Case 2: block-diagonal fallback path (sub-128 per-head dims), C padded 3->8.
    run_case("blockdiag", N=300, E=64, H1=32, Mdim=32, D=16, heads=4, C=3,
             tile_n=128)

    print("KERNEL_OK")
</pallas_src>

<mosaic_0001>
module attributes {stable_mosaic.version = 11 : i64} {
  func.func @clam_mb_kernel(%arg0: i32, %arg1: memref<1xi32, #tpu.memory_space<smem>>, %arg2: memref<128x256xf32, #tpu.memory_space<vmem>>, %arg3: memref<256x128xbf16, #tpu.memory_space<vmem>>, %arg4: memref<1x128xf32, #tpu.memory_space<vmem>>, %arg5: memref<128x1024xbf16, #tpu.memory_space<vmem>>, %arg6: memref<1x1024xf32, #tpu.memory_space<vmem>>, %arg7: memref<4x128x128xbf16, #tpu.memory_space<vmem>>, %arg8: memref<4x1x128xf32, #tpu.memory_space<vmem>>, %arg9: memref<4x8x64xbf16, #tpu.memory_space<vmem>>, %arg10: memref<8x1xf32, #tpu.memory_space<vmem>>, %arg11: memref<8x128xf32, #tpu.memory_space<vmem>>, %arg12: memref<8x1xf32, #tpu.memory_space<vmem>>, %arg13: memref<8x128xf32, #tpu.memory_space<vmem>>, %arg14: memref<8x128xf32, #tpu.memory_space<vmem>>, %arg15: memref<8x1xf32, #tpu.memory_space<vmem>>, %arg16: memref<8x1xf32, #tpu.memory_space<vmem>>, %arg17: memref<8x1xf32, #tpu.memory_space<vmem>>, %arg18: memref<8x128xf32, #tpu.memory_space<vmem>>) attributes {dimension_semantics = [#tpu.dimension_semantics<arbitrary>], iteration_bounds = array<i64: 4>, scalar_prefetch = 1 : i64, scratch_operands = 3 : i64, tpu.core_type = #tpu.core_type<tc>, window_params = [{transform_indices = @transform_0, window_bounds = array<i64: 128, 256>}, {pipeline_mode = #tpu.pipeline_mode<synchronous>, transform_indices = @transform_1, window_bounds = array<i64: 256, 128>}, {pipeline_mode = #tpu.pipeline_mode<synchronous>, transform_indices = @transform_2, window_bounds = array<i64: 1, 128>}, {pipeline_mode = #tpu.pipeline_mode<synchronous>, transform_indices = @transform_3, window_bounds = array<i64: 128, 1024>}, {pipeline_mode = #tpu.pipeline_mode<synchronous>, transform_indices = @transform_4, window_bounds = array<i64: 1, 1024>}, {pipeline_mode = #tpu.pipeline_mode<synchronous>, transform_indices = @transform_5, window_bounds = array<i64: 4, 128, 128>}, {pipeline_mode = #tpu.pipeline_mode<synchronous>, transform_indices = @transform_6, window_bounds = array<i64: 4, 1, 128>}, {pipeline_mode = #tpu.pipeline_mode<synchronous>, transform_indices = @transform_7, window_bounds = array<i64: 4, 8, 64>}, {pipeline_mode = #tpu.pipeline_mode<synchronous>, transform_indices = @transform_8, window_bounds = array<i64: 8, 1>}, {pipeline_mode = #tpu.pipeline_mode<synchronous>, transform_indices = @transform_9, window_bounds = array<i64: 8, 128>}, {pipeline_mode = #tpu.pipeline_mode<synchronous>, transform_indices = @transform_10, window_bounds = array<i64: 8, 1>}, {transform_indices = @transform_11, window_bounds = array<i64: 8, 128>}, {pipeline_mode = #tpu.pipeline_mode<synchronous>, transform_indices = @transform_12, window_bounds = array<i64: 8, 128>}, {pipeline_mode = #tpu.pipeline_mode<synchronous>, transform_indices = @transform_13, window_bounds = array<i64: 8, 1>}]} {
    %c0_i32 = arith.constant 0 : i32
    %0 = arith.cmpi eq, %arg0, %c0_i32 : i32
    %1 = arith.extui %0 : i1 to i32
    %c0_i32_0 = arith.constant 0 : i32
    %2 = arith.cmpi ne, %1, %c0_i32_0 : i32
    scf.if %2 {
      %cst_84 = arith.constant 0xFF800000 : f32
      %165 = vector.broadcast %cst_84 : f32 to vector<8x1xf32>
      %c0_85 = arith.constant 0 : index
      %c0_86 = arith.constant 0 : index
      %166 = vector.load %arg16[%c0_85, %c0_86] : memref<8x1xf32, #tpu.memory_space<vmem>>, vector<8x1xf32>
      tpu.vector_store %arg16[%c0_85, %c0_86], %165 {strides = array<i32>} : memref<8x1xf32, #tpu.memory_space<vmem>>, vector<8x1xf32>,
      %cst_87 = arith.constant 0.000000e+00 : f32
      %167 = vector.broadcast %cst_87 : f32 to vector<8x1xf32>
      %c0_88 = arith.constant 0 : index
      %c0_89 = arith.constant 0 : index
      %168 = vector.load %arg17[%c0_88, %c0_89] : memref<8x1xf32, #tpu.memory_space<vmem>>, vector<8x1xf32>
      tpu.vector_store %arg17[%c0_88, %c0_89], %167 {strides = array<i32>} : memref<8x1xf32, #tpu.memory_space<vmem>>, vector<8x1xf32>,
      %cst_90 = arith.constant 0.000000e+00 : f32
      %169 = vector.broadcast %cst_90 : f32 to vector<8x128xf32>
      %c0_91 = arith.constant 0 : index
      %c0_92 = arith.constant 0 : index
      %170 = vector.load %arg18[%c0_91, %c0_92] : memref<8x128xf32, #tpu.memory_space<vmem>>, vector<8x128xf32>
      tpu.vector_store %arg18[%c0_91, %c0_92], %169 {strides = array<i32>} : memref<8x128xf32, #tpu.memory_space<vmem>>, vector<8x128xf32>,
    } else {
    }
    %c0 = arith.constant 0 : index
    %3 = memref.load %arg1[%c0] : memref<1xi32, #tpu.memory_space<smem>>
    %c128_i32 = arith.constant 128 : i32
    %4 = arith.muli %arg0, %c128_i32 : i32
    %5 = arith.subi %3, %4 : i32
    %c0_1 = arith.constant 0 : index
    %c0_2 = arith.constant 0 : index
    %6 = vector.load %arg2[%c0_1, %c0_2] : memref<128x256xf32, #tpu.memory_space<vmem>>, vector<128x256xf32>
    %7 = arith.truncf %6 : vector<128x256xf32> to vector<128x256xbf16>
    %c0_3 = arith.constant 0 : index
    %c0_4 = arith.constant 0 : index
    %8 = vector.load %arg3[%c0_3, %c0_4] : memref<256x128xbf16, #tpu.memory_space<vmem>>, vector<256x128xbf16>
    %cst = arith.constant dense<0.000000e+00> : vector<128x128xf32>
    %9 = tpu.matmul %7, %8, %cst {dimension_numbers = #tpu.dot_dimension_numbers<[1], [0], [0], [1], [0, 0, 1, 1], [], []>} : vector<128x256xbf16>, vector<256x128xbf16>, vector<128x128xf32> -> vector<128x128xf32>
    %c0_5 = arith.constant 0 : index
    %c0_6 = arith.constant 0 : index
    %10 = vector.load %arg4[%c0_5, %c0_6] : memref<1x128xf32, #tpu.memory_space<vmem>>, vector<1x128xf32>
    %11 = vector.broadcast %10 : vector<1x128xf32> to vector<128x128xf32>
    %12 = arith.addf %9, %11 : vector<128x128xf32>
    %cst_7 = arith.constant 0.000000e+00 : f32
    %13 = vector.broadcast %cst_7 : f32 to vector<128x128xf32>
    %14 = arith.maximumf %12, %13 : vector<128x128xf32>
    %15 = tpu.iota {dimensions = array<i32: 0>} : vector<128x1xi32>
    %16 = vector.broadcast %5 : i32 to vector<128x1xi32>
    %17 = arith.cmpi slt, %15, %16 : vector<128x1xi32>
    %cst_8 = arith.constant 0.000000e+00 : f32
    %18 = vector.shape_cast %17 : vector<128x1xi1> to vector<128x1xi1>
    %19 = vector.broadcast %18 : vector<128x1xi1> to vector<128x128xi1>
    %20 = vector.broadcast %cst_8 : f32 to vector<128x128xf32>
    %21 = arith.select %19, %14, %20 : vector<128x128xi1>, vector<128x128xf32>
    %22 = arith.truncf %21 : vector<128x128xf32> to vector<128x128xbf16>
    %c0_9 = arith.constant 0 : index
    %c0_10 = arith.constant 0 : index
    %23 = vector.load %arg5[%c0_9, %c0_10] : memref<128x1024xbf16, #tpu.memory_space<vmem>>, vector<128x1024xbf16>
    %cst_11 = arith.constant dense<0.000000e+00> : vector<128x1024xf32>
    %24 = tpu.matmul %22, %23, %cst_11 {dimension_numbers = #tpu.dot_dimension_numbers<[1], [0], [0], [1], [0, 0, 1, 1], [], []>} : vector<128x128xbf16>, vector<128x1024xbf16>, vector<128x1024xf32> -> vector<128x1024xf32>
    %c0_12 = arith.constant 0 : index
    %c0_13 = arith.constant 0 : index
    %25 = vector.load %arg6[%c0_12, %c0_13] : memref<1x1024xf32, #tpu.memory_space<vmem>>, vector<1x1024xf32>
    %26 = vector.broadcast %25 : vector<1x1024xf32> to vector<128x1024xf32>
    %27 = arith.addf %24, %26 : vector<128x1024xf32>
    %28 = vector.extract_strided_slice %27 {offsets = [0, 0], sizes = [128, 512], strides = [1, 1]} : vector<128x1024xf32> to vector<128x512xf32>
    %29 = math.tanh %28 : vector<128x512xf32>
    %30 = vector.extract_strided_slice %27 {offsets = [0, 512], sizes = [128, 512], strides = [1, 1]} : vector<128x1024xf32> to vector<128x512xf32>
    %31 = arith.negf %30 : vector<128x512xf32>
    %32 = math.exp %31 : vector<128x512xf32>
    %cst_14 = arith.constant 1.000000e+00 : f32
    %33 = vector.broadcast %cst_14 : f32 to vector<128x512xf32>
    %34 = arith.addf %33, %32 : vector<128x512xf32>
    %35 = arith.divf %33, %34 : vector<128x512xf32>
    %36 = arith.mulf %29, %35 : vector<128x512xf32>
    %37 = arith.truncf %36 : vector<128x512xf32> to vector<128x512xbf16>
    %cst_15 = arith.constant 0.000000e+00 : f32
    %38 = vector.broadcast %cst_15 : f32 to vector<8x128xf32>
    %39 = vector.extract_strided_slice %37 {offsets = [0, 0], sizes = [128, 128], strides = [1, 1]} : vector<128x512xbf16> to vector<128x128xbf16>
    %c0_16 = arith.constant 0 : index
    %c0_17 = arith.constant 0 : index
    %c0_18 = arith.constant 0 : index
    %40 = vector.load %arg7[%c0_16, %c0_17, %c0_18] : memref<4x128x128xbf16, #tpu.memory_space<vmem>>, vector<1x128x128xbf16>
    %41 = vector.shape_cast %40 : vector<1x128x128xbf16> to vector<128x128xbf16>
    %cst_19 = arith.constant dense<0.000000e+00> : vector<128x128xf32>
    %42 = tpu.matmul %39, %41, %cst_19 {dimension_numbers = #tpu.dot_dimension_numbers<[1], [0], [0], [1], [0, 0, 1, 1], [], []>} : vector<128x128xbf16>, vector<128x128xbf16>, vector<128x128xf32> -> vector<128x128xf32>
    %c0_20 = arith.constant 0 : index
    %c0_21 = arith.constant 0 : index
    %c0_22 = arith.constant 0 : index
    %43 = vector.load %arg8[%c0_20, %c0_21, %c0_22] : memref<4x1x128xf32, #tpu.memory_space<vmem>>, vector<1x1x128xf32>
    %44 = vector.shape_cast %43 : vector<1x1x128xf32> to vector<1x128xf32>
    %45 = vector.broadcast %44 : vector<1x128xf32> to vector<128x128xf32>
    %46 = arith.addf %42, %45 : vector<128x128xf32>
    %47 = vector.extract_strided_slice %46 {offsets = [0, 0], sizes = [128, 64], strides = [1, 1]} : vector<128x128xf32> to vector<128x64xf32>
    %48 = math.tanh %47 : vector<128x64xf32>
    %49 = vector.extract_strided_slice %46 {offsets = [0, 64], sizes = [128, 64], strides = [1, 1]} : vector<128x128xf32> to vector<128x64xf32>
    %50 = arith.negf %49 : vector<128x64xf32>
    %51 = math.exp %50 : vector<128x64xf32>
    %cst_23 = arith.constant 1.000000e+00 : f32
    %52 = vector.broadcast %cst_23 : f32 to vector<128x64xf32>
    %53 = arith.addf %52, %51 : vector<128x64xf32>
    %54 = arith.divf %52, %53 : vector<128x64xf32>
    %55 = arith.mulf %48, %54 : vector<128x64xf32>
    %56 = arith.truncf %55 : vector<128x64xf32> to vector<128x64xbf16>
    %c0_24 = arith.constant 0 : index
    %c0_25 = arith.constant 0 : index
    %c0_26 = arith.constant 0 : index
    %57 = vector.load %arg9[%c0_24, %c0_25, %c0_26] : memref<4x8x64xbf16, #tpu.memory_space<vmem>>, vector<1x8x64xbf16>
    %58 = vector.shape_cast %57 : vector<1x8x64xbf16> to vector<8x64xbf16>
    %cst_27 = arith.constant dense<0.000000e+00> : vector<8x128xf32>
    %59 = tpu.matmul %58, %56, %cst_27 {dimension_numbers = #tpu.dot_dimension_numbers<[1], [1], [0], [0], [0, 0, 1, 0], [], []>} : vector<8x64xbf16>, vector<128x64xbf16>, vector<8x128xf32> -> vector<8x128xf32>
    %60 = arith.addf %38, %59 : vector<8x128xf32>
    %61 = vector.extract_strided_slice %37 {offsets = [0, 128], sizes = [128, 128], strides = [1, 1]} : vector<128x512xbf16> to vector<128x128xbf16>
    %c1 = arith.constant 1 : index
    %c0_28 = arith.constant 0 : index
    %c0_29 = arith.constant 0 : index
    %62 = vector.load %arg7[%c1, %c0_28, %c0_29] : memref<4x128x128xbf16, #tpu.memory_space<vmem>>, vector<1x128x128xbf16>
    %63 = vector.shape_cast %62 : vector<1x128x128xbf16> to vector<128x128xbf16>
    %cst_30 = arith.constant dense<0.000000e+00> : vector<128x128xf32>
    %64 = tpu.matmul %61, %63, %cst_30 {dimension_numbers = #tpu.dot_dimension_numbers<[1], [0], [0], [1], [0, 0, 1, 1], [], []>} : vector<128x128xbf16>, vector<128x128xbf16>, vector<128x128xf32> -> vector<128x128xf32>
    %c1_31 = arith.constant 1 : index
    %c0_32 = arith.constant 0 : index
    %c0_33 = arith.constant 0 : index
    %65 = vector.load %arg8[%c1_31, %c0_32, %c0_33] : memref<4x1x128xf32, #tpu.memory_space<vmem>>, vector<1x1x128xf32>
    %66 = vector.shape_cast %65 : vector<1x1x128xf32> to vector<1x128xf32>
    %67 = vector.broadcast %66 : vector<1x128xf32> to vector<128x128xf32>
    %68 = arith.addf %64, %67 : vector<128x128xf32>
    %69 = vector.extract_strided_slice %68 {offsets = [0, 0], sizes = [128, 64], strides = [1, 1]} : vector<128x128xf32> to vector<128x64xf32>
    %70 = math.tanh %69 : vector<128x64xf32>
    %71 = vector.extract_strided_slice %68 {offsets = [0, 64], sizes = [128, 64], strides = [1, 1]} : vector<128x128xf32> to vector<128x64xf32>
    %72 = arith.negf %71 : vector<128x64xf32>
    %73 = math.exp %72 : vector<128x64xf32>
    %cst_34 = arith.constant 1.000000e+00 : f32
    %74 = vector.broadcast %cst_34 : f32 to vector<128x64xf32>
    %75 = arith.addf %74, %73 : vector<128x64xf32>
    %76 = arith.divf %74, %75 : vector<128x64xf32>
    %77 = arith.mulf %70, %76 : vector<128x64xf32>
    %78 = arith.truncf %77 : vector<128x64xf32> to vector<128x64xbf16>
    %c1_35 = arith.constant 1 : index
    %c0_36 = arith.constant 0 : index
    %c0_37 = arith.constant 0 : index
    %79 = vector.load %arg9[%c1_35, %c0_36, %c0_37] : memref<4x8x64xbf16, #tpu.memory_space<vmem>>, vector<1x8x64xbf16>
    %80 = vector.shape_cast %79 : vector<1x8x64xbf16> to vector<8x64xbf16>
    %cst_38 = arith.constant dense<0.000000e+00> : vector<8x128xf32>
    %81 = tpu.matmul %80, %78, %cst_38 {dimension_numbers = #tpu.dot_dimension_numbers<[1], [1], [0], [0], [0, 0, 1, 0], [], []>} : vector<8x64xbf16>, vector<128x64xbf16>, vector<8x128xf32> -> vector<8x128xf32>
    %82 = arith.addf %60, %81 : vector<8x128xf32>
    %83 = vector.extract_strided_slice %37 {offsets = [0, 256], sizes = [128, 128], strides = [1, 1]} : vector<128x512xbf16> to vector<128x128xbf16>
    %c2 = arith.constant 2 : index
    %c0_39 = arith.constant 0 : index
    %c0_40 = arith.constant 0 : index
    %84 = vector.load %arg7[%c2, %c0_39, %c0_40] : memref<4x128x128xbf16, #tpu.memory_space<vmem>>, vector<1x128x128xbf16>
    %85 = vector.shape_cast %84 : vector<1x128x128xbf16> to vector<128x128xbf16>
    %cst_41 = arith.constant dense<0.000000e+00> : vector<128x128xf32>
    %86 = tpu.matmul %83, %85, %cst_41 {dimension_numbers = #tpu.dot_dimension_numbers<[1], [0], [0], [1], [0, 0, 1, 1], [], []>} : vector<128x128xbf16>, vector<128x128xbf16>, vector<128x128xf32> -> vector<128x128xf32>
    %c2_42 = arith.constant 2 : index
    %c0_43 = arith.constant 0 : index
    %c0_44 = arith.constant 0 : index
    %87 = vector.load %arg8[%c2_42, %c0_43, %c0_44] : memref<4x1x128xf32, #tpu.memory_space<vmem>>, vector<1x1x128xf32>
    %88 = vector.shape_cast %87 : vector<1x1x128xf32> to vector<1x128xf32>
    %89 = vector.broadcast %88 : vector<1x128xf32> to vector<128x128xf32>
    %90 = arith.addf %86, %89 : vector<128x128xf32>
    %91 = vector.extract_strided_slice %90 {offsets = [0, 0], sizes = [128, 64], strides = [1, 1]} : vector<128x128xf32> to vector<128x64xf32>
    %92 = math.tanh %91 : vector<128x64xf32>
    %93 = vector.extract_strided_slice %90 {offsets = [0, 64], sizes = [128, 64], strides = [1, 1]} : vector<128x128xf32> to vector<128x64xf32>
    %94 = arith.negf %93 : vector<128x64xf32>
    %95 = math.exp %94 : vector<128x64xf32>
    %cst_45 = arith.constant 1.000000e+00 : f32
    %96 = vector.broadcast %cst_45 : f32 to vector<128x64xf32>
    %97 = arith.addf %96, %95 : vector<128x64xf32>
    %98 = arith.divf %96, %97 : vector<128x64xf32>
    %99 = arith.mulf %92, %98 : vector<128x64xf32>
    %100 = arith.truncf %99 : vector<128x64xf32> to vector<128x64xbf16>
    %c2_46 = arith.constant 2 : index
    %c0_47 = arith.constant 0 : index
    %c0_48 = arith.constant 0 : index
    %101 = vector.load %arg9[%c2_46, %c0_47, %c0_48] : memref<4x8x64xbf16, #tpu.memory_space<vmem>>, vector<1x8x64xbf16>
    %102 = vector.shape_cast %101 : vector<1x8x64xbf16> to vector<8x64xbf16>
    %cst_49 = arith.constant dense<0.000000e+00> : vector<8x128xf32>
    %103 = tpu.matmul %102, %100, %cst_49 {dimension_numbers = #tpu.dot_dimension_numbers<[1], [1], [0], [0], [0, 0, 1, 0], [], []>} : vector<8x64xbf16>, vector<128x64xbf16>, vector<8x128xf32> -> vector<8x128xf32>
    %104 = arith.addf %82, %103 : vector<8x128xf32>
    %105 = vector.extract_strided_slice %37 {offsets = [0, 384], sizes = [128, 128], strides = [1, 1]} : vector<128x512xbf16> to vector<128x128xbf16>
    %c3 = arith.constant 3 : index
    %c0_50 = arith.constant 0 : index
    %c0_51 = arith.constant 0 : index
    %106 = vector.load %arg7[%c3, %c0_50, %c0_51] : memref<4x128x128xbf16, #tpu.memory_space<vmem>>, vector<1x128x128xbf16>
    %107 = vector.shape_cast %106 : vector<1x128x128xbf16> to vector<128x128xbf16>
    %cst_52 = arith.constant dense<0.000000e+00> : vector<128x128xf32>
    %108 = tpu.matmul %105, %107, %cst_52 {dimension_numbers = #tpu.dot_dimension_numbers<[1], [0], [0], [1], [0, 0, 1, 1], [], []>} : vector<128x128xbf16>, vector<128x128xbf16>, vector<128x128xf32> -> vector<128x128xf32>
    %c3_53 = arith.constant 3 : index
    %c0_54 = arith.constant 0 : index
    %c0_55 = arith.constant 0 : index
    %109 = vector.load %arg8[%c3_53, %c0_54, %c0_55] : memref<4x1x128xf32, #tpu.memory_space<vmem>>, vector<1x1x128xf32>
    %110 = vector.shape_cast %109 : vector<1x1x128xf32> to vector<1x128xf32>
    %111 = vector.broadcast %110 : vector<1x128xf32> to vector<128x128xf32>
    %112 = arith.addf %108, %111 : vector<128x128xf32>
    %113 = vector.extract_strided_slice %112 {offsets = [0, 0], sizes = [128, 64], strides = [1, 1]} : vector<128x128xf32> to vector<128x64xf32>
    %114 = math.tanh %113 : vector<128x64xf32>
    %115 = vector.extract_strided_slice %112 {offsets = [0, 64], sizes = [128, 64], strides = [1, 1]} : vector<128x128xf32> to vector<128x64xf32>
    %116 = arith.negf %115 : vector<128x64xf32>
    %117 = math.exp %116 : vector<128x64xf32>
    %cst_56 = arith.constant 1.000000e+00 : f32
    %118 = vector.broadcast %cst_56 : f32 to vector<128x64xf32>
    %119 = arith.addf %118, %117 : vector<128x64xf32>
    %120 = arith.divf %118, %119 : vector<128x64xf32>
    %121 = arith.mulf %114, %120 : vector<128x64xf32>
    %122 = arith.truncf %121 : vector<128x64xf32> to vector<128x64xbf16>
    %c3_57 = arith.constant 3 : index
    %c0_58 = arith.constant 0 : index
    %c0_59 = arith.constant 0 : index
    %123 = vector.load %arg9[%c3_57, %c0_58, %c0_59] : memref<4x8x64xbf16, #tpu.memory_space<vmem>>, vector<1x8x64xbf16>
    %124 = vector.shape_cast %123 : vector<1x8x64xbf16> to vector<8x64xbf16>
    %cst_60 = arith.constant dense<0.000000e+00> : vector<8x128xf32>
    %125 = tpu.matmul %124, %122, %cst_60 {dimension_numbers = #tpu.dot_dimension_numbers<[1], [1], [0], [0], [0, 0, 1, 0], [], []>} : vector<8x64xbf16>, vector<128x64xbf16>, vector<8x128xf32> -> vector<8x128xf32>
    %126 = arith.addf %104, %125 : vector<8x128xf32>
    %c0_61 = arith.constant 0 : index
    %c0_62 = arith.constant 0 : index
    %127 = vector.load %arg10[%c0_61, %c0_62] : memref<8x1xf32, #tpu.memory_space<vmem>>, vector<8x1xf32>
    %128 = vector.broadcast %127 : vector<8x1xf32> to vector<8x128xf32>
    %129 = arith.addf %126, %128 : vector<8x128xf32>
    %c0_63 = arith.constant 0 : index
    %c0_64 = arith.constant 0 : index
    %130 = vector.load %arg13[%c0_63, %c0_64] : memref<8x128xf32, #tpu.memory_space<vmem>>, vector<8x128xf32>
    tpu.vector_store %arg13[%c0_63, %c0_64], %129 {strides = array<i32>} : memref<8x128xf32, #tpu.memory_space<vmem>>, vector<8x128xf32>,
    %131 = tpu.iota {dimensions = array<i32: 1>} : vector<1x128xi32>
    %132 = vector.broadcast %5 : i32 to vector<1x128xi32>
    %133 = arith.cmpi slt, %131, %132 : vector<1x128xi32>
    %cst_65 = arith.constant 0xFF800000 : f32
    %134 = vector.shape_cast %133 : vector<1x128xi1> to vector<1x128xi1>
    %135 = vector.broadcast %134 : vector<1x128xi1> to vector<8x128xi1>
    %136 = vector.broadcast %cst_65 : f32 to vector<8x128xf32>
    %137 = arith.select %135, %129, %136 : vector<8x128xi1>, vector<8x128xf32>
    %cst_66 = arith.constant dense<0xFF800000> : vector<8xf32>
    %138 = vector.multi_reduction <maximumf>, %137, %cst_66 [1] : vector<8x128xf32> to vector<8xf32>
    %139 = vector.shape_cast %138 : vector<8xf32> to vector<8x1xf32>
    %c0_67 = arith.constant 0 : index
    %c0_68 = arith.constant 0 : index
    %140 = vector.load %arg16[%c0_67, %c0_68] : memref<8x1xf32, #tpu.memory_space<vmem>>, vector<8x1xf32>
    %141 = arith.maximumf %140, %139 : vector<8x1xf32>
    %c0_69 = arith.constant 0 : index
    %c0_70 = arith.constant 0 : index
    %142 = vector.load %arg16[%c0_69, %c0_70] : memref<8x1xf32, #tpu.memory_space<vmem>>, vector<8x1xf32>
    %143 = arith.subf %142, %141 : vector<8x1xf32>
    %144 = math.exp %143 : vector<8x1xf32>
    %145 = vector.broadcast %141 : vector<8x1xf32> to vector<8x128xf32>
    %146 = arith.subf %137, %145 : vector<8x128xf32>
    %147 = math.exp %146 : vector<8x128xf32>
    %c0_71 = arith.constant 0 : index
    %c0_72 = arith.constant 0 : index
    %148 = vector.load %arg17[%c0_71, %c0_72] : memref<8x1xf32, #tpu.memory_space<vmem>>, vector<8x1xf32>
    %149 = arith.mulf %144, %148 : vector<8x1xf32>
    %cst_73 = arith.constant dense<0.000000e+00> : vector<8xf32>
    %150 = vector.multi_reduction <add>, %147, %cst_73 [1] : vector<8x128xf32> to vector<8xf32>
    %151 = vector.shape_cast %150 : vector<8xf32> to vector<8x1xf32>
    %152 = arith.addf %149, %151 : vector<8x1xf32>
    %c0_74 = arith.constant 0 : index
    %c0_75 = arith.constant 0 : index
    %153 = vector.load %arg17[%c0_74, %c0_75] : memref<8x1xf32, #tpu.memory_space<vmem>>, vector<8x1xf32>
    tpu.vector_store %arg17[%c0_74, %c0_75], %152 {strides = array<i32>} : memref<8x1xf32, #tpu.memory_space<vmem>>, vector<8x1xf32>,
    %c0_76 = arith.constant 0 : index
    %c0_77 = arith.constant 0 : index
    %154 = vector.load %arg18[%c0_76, %c0_77] : memref<8x128xf32, #tpu.memory_space<vmem>>, vector<8x128xf32>
    %155 = vector.broadcast %144 : vector<8x1xf32> to vector<8x128xf32>
    %156 = arith.mulf %155, %154 : vector<8x128xf32>
    %157 = arith.truncf %147 : vector<8x128xf32> to vector<8x128xbf16>
    %cst_78 = arith.constant dense<0.000000e+00> : vector<8x128xf32>
    %158 = tpu.matmul %157, %22, %cst_78 {dimension_numbers = #tpu.dot_dimension_numbers<[1], [0], [0], [1], [0, 0, 1, 1], [], []>} : vector<8x128xbf16>, vector<128x128xbf16>, vector<8x128xf32> -> vector<8x128xf32>
    %159 = arith.addf %156, %158 : vector<8x128xf32>
    %c0_79 = arith.constant 0 : index
    %c0_80 = arith.constant 0 : index
    %160 = vector.load %arg18[%c0_79, %c0_80] : memref<8x128xf32, #tpu.memory_space<vmem>>, vector<8x128xf32>
    tpu.vector_store %arg18[%c0_79, %c0_80], %159 {strides = array<i32>} : memref<8x128xf32, #tpu.memory_space<vmem>>, vector<8x128xf32>,
    %c0_81 = arith.constant 0 : index
    %c0_82 = arith.constant 0 : index
    %161 = vector.load %arg16[%c0_81, %c0_82] : memref<8x1xf32, #tpu.memory_space<vmem>>, vector<8x1xf32>
    tpu.vector_store %arg16[%c0_81, %c0_82], %141 {strides = array<i32>} : memref<8x1xf32, #tpu.memory_space<vmem>>, vector<8x1xf32>,
    %c3_i32 = arith.constant 3 : i32
    %162 = arith.cmpi eq, %arg0, %c3_i32 : i32
    %163 = arith.extui %162 : i1 to i32
    %c0_i32_83 = arith.constant 0 : i32
    %164 = arith.cmpi ne, %163, %c0_i32_83 : i32
    scf.if %164 {
      %c0_84 = arith.constant 0 : index
      %c0_85 = arith.constant 0 : index
      %165 = vector.load %arg17[%c0_84, %c0_85] : memref<8x1xf32, #tpu.memory_space<vmem>>, vector<8x1xf32>
      %166 = tpu.reciprocal %165 : vector<8x1xf32> -> vector<8x1xf32>
      %c0_86 = arith.constant 0 : index
      %c0_87 = arith.constant 0 : index
      %167 = vector.load %arg18[%c0_86, %c0_87] : memref<8x128xf32, #tpu.memory_space<vmem>>, vector<8x128xf32>
      %168 = vector.broadcast %166 : vector<8x1xf32> to vector<8x128xf32>
      %169 = arith.mulf %167, %168 : vector<8x128xf32>
      %c0_88 = arith.constant 0 : index
      %c0_89 = arith.constant 0 : index
      %170 = vector.load %arg14[%c0_88, %c0_89] : memref<8x128xf32, #tpu.memory_space<vmem>>, vector<8x128xf32>
      tpu.vector_store %arg14[%c0_88, %c0_89], %169 {strides = array<i32>} : memref<8x128xf32, #tpu.memory_space<vmem>>, vector<8x128xf32>,
      %c0_90 = arith.constant 0 : index
      %c0_91 = arith.constant 0 : index
      %171 = vector.load %arg11[%c0_90, %c0_91] : memref<8x128xf32, #tpu.memory_space<vmem>>, vector<8x128xf32>
      %172 = arith.mulf %169, %171 : vector<8x128xf32>
      %cst_92 = arith.constant dense<0.000000e+00> : vector<8xf32>
      %173 = vector.multi_reduction <add>, %172, %cst_92 [1] : vector<8x128xf32> to vector<8xf32>
      %174 = vector.shape_cast %173 : vector<8xf32> to vector<8x1xf32>
      %c0_93 = arith.constant 0 : index
      %c0_94 = arith.constant 0 : index
      %175 = vector.load %arg12[%c0_93, %c0_94] : memref<8x1xf32, #tpu.memory_space<vmem>>, vector<8x1xf32>
      %176 = arith.addf %174, %175 : vector<8x1xf32>
      %c0_95 = arith.constant 0 : index
      %c0_96 = arith.constant 0 : index
      %177 = vector.load %arg15[%c0_95, %c0_96] : memref<8x1xf32, #tpu.memory_space<vmem>>, vector<8x1xf32>
      tpu.vector_store %arg15[%c0_95, %c0_96], %176 {strides = array<i32>} : memref<8x1xf32, #tpu.memory_space<vmem>>, vector<8x1xf32>,
    } else {
    }
    return
  }
  func.func @transform_0(%arg0: i32, %arg1: memref<1xi32, #tpu.memory_space<smem>>) -> (i32, i32) {
    %c0_i32 = arith.constant 0 : i32
    %c0_i32_0 = arith.constant 0 : i32
    return %arg0, %c0_i32 : i32, i32
  }
  func.func @transform_1(%arg0: i32, %arg1: memref<1xi32, #tpu.memory_space<smem>>) -> (i32, i32) {
    %c0_i32 = arith.constant 0 : i32
    %c0_i32_0 = arith.constant 0 : i32
    %c0_i32_1 = arith.constant 0 : i32
    return %c0_i32, %c0_i32_0 : i32, i32
  }
  func.func @transform_2(%arg0: i32, %arg1: memref<1xi32, #tpu.memory_space<smem>>) -> (i32, i32) {
    %c0_i32 = arith.constant 0 : i32
    %c0_i32_0 = arith.constant 0 : i32
    %c0_i32_1 = arith.constant 0 : i32
    return %c0_i32, %c0_i32_0 : i32, i32
  }
  func.func @transform_3(%arg0: i32, %arg1: memref<1xi32, #tpu.memory_space<smem>>) -> (i32, i32) {
    %c0_i32 = arith.constant 0 : i32
    %c0_i32_0 = arith.constant 0 : i32
    %c0_i32_1 = arith.constant 0 : i32
    return %c0_i32, %c0_i32_0 : i32, i32
  }
  func.func @transform_4(%arg0: i32, %arg1: memref<1xi32, #tpu.memory_space<smem>>) -> (i32, i32) {
    %c0_i32 = arith.constant 0 : i32
    %c0_i32_0 = arith.constant 0 : i32
    %c0_i32_1 = arith.constant 0 : i32
    return %c0_i32, %c0_i32_0 : i32, i32
  }
  func.func @transform_5(%arg0: i32, %arg1: memref<1xi32, #tpu.memory_space<smem>>) -> (i32, i32, i32) {
    %c0_i32 = arith.constant 0 : i32
    %c0_i32_0 = arith.constant 0 : i32
    %c0_i32_1 = arith.constant 0 : i32
    %c0_i32_2 = arith.constant 0 : i32
    return %c0_i32, %c0_i32_0, %c0_i32_1 : i32, i32, i32
  }
  func.func @transform_6(%arg0: i32, %arg1: memref<1xi32, #tpu.memory_space<smem>>) -> (i32, i32, i32) {
    %c0_i32 = arith.constant 0 : i32
    %c0_i32_0 = arith.constant 0 : i32
    %c0_i32_1 = arith.constant 0 : i32
    %c0_i32_2 = arith.constant 0 : i32
    return %c0_i32, %c0_i32_0, %c0_i32_1 : i32, i32, i32
  }
  func.func @transform_7(%arg0: i32, %arg1: memref<1xi32, #tpu.memory_space<smem>>) -> (i32, i32, i32) {
    %c0_i32 = arith.constant 0 : i32
    %c0_i32_0 = arith.constant 0 : i32
    %c0_i32_1 = arith.constant 0 : i32
    %c0_i32_2 = arith.constant 0 : i32
    return %c0_i32, %c0_i32_0, %c0_i32_1 : i32, i32, i32
  }
  func.func @transform_8(%arg0: i32, %arg1: memref<1xi32, #tpu.memory_space<smem>>) -> (i32, i32) {
    %c0_i32 = arith.constant 0 : i32
    %c0_i32_0 = arith.constant 0 : i32
    %c0_i32_1 = arith.constant 0 : i32
    return %c0_i32, %c0_i32_0 : i32, i32
  }
  func.func @transform_9(%arg0: i32, %arg1: memref<1xi32, #tpu.memory_space<smem>>) -> (i32, i32) {
    %c0_i32 = arith.constant 0 : i32
    %c0_i32_0 = arith.constant 0 : i32
    %c0_i32_1 = arith.constant 0 : i32
    return %c0_i32, %c0_i32_0 : i32, i32
  }
  func.func @transform_10(%arg0: i32, %arg1: memref<1xi32, #tpu.memory_space<smem>>) -> (i32, i32) {
    %c0_i32 = arith.constant 0 : i32
    %c0_i32_0 = arith.constant 0 : i32
    %c0_i32_1 = arith.constant 0 : i32
    return %c0_i32, %c0_i32_0 : i32, i32
  }
  func.func @transform_11(%arg0: i32, %arg1: memref<1xi32, #tpu.memory_space<smem>>) -> (i32, i32) {
    %c0_i32 = arith.constant 0 : i32
    %c0_i32_0 = arith.constant 0 : i32
    return %c0_i32, %arg0 : i32, i32
  }
  func.func @transform_12(%arg0: i32, %arg1: memref<1xi32, #tpu.memory_space<smem>>) -> (i32, i32) {
    %c0_i32 = arith.constant 0 : i32
    %c0_i32_0 = arith.constant 0 : i32
    %c0_i32_1 = arith.constant 0 : i32
    return %c0_i32, %c0_i32_0 : i32, i32
  }
  func.func @transform_13(%arg0: i32, %arg1: memref<1xi32, #tpu.memory_space<smem>>) -> (i32, i32) {
    %c0_i32 = arith.constant 0 : i32
    %c0_i32_0 = arith.constant 0 : i32
    %c0_i32_1 = arith.constant 0 : i32
    return %c0_i32, %c0_i32_0 : i32, i32
  }
}

</mosaic_0001>

<llo_original>
// kernel: tpu_custom_call.1
$region0: #{tpu_custom_call.1}
  #allocation0 [shape = 'u32[]', space=smem, size = 0x4, offset = 0x4, fixed_abs, tag = 'smem constant byte address 0x4 - core index']
  #allocation1 [shape = 'u32[144,128]{1,0:T(1,128)}', space=vmem, size = 0x12000, scoped, tag = 'internal scratch']
  #allocation2 [shape = 'f32[8,1]{1,0:T(8,128)}', space=vmem, size = 0x1000, scoped, tag = 'scratch operand']
  #allocation3 [shape = 'f32[8,1]{1,0:T(8,128)}', space=vmem, size = 0x1000, scoped, tag = 'scratch operand']
  #allocation4 [shape = 'f32[8,128]{1,0:T(8,128)}', space=vmem, size = 0x1000, scoped, tag = 'scratch operand']
  #allocation5 [shape = 's32[1]{0}', space=sflag, size = 0x4, scoped, tag = 'scoped memory for tpu_custom_call.1']
  #allocation6 [shape = 's32[1]{0:T(128)S(6)}', space=smem, size = 0x200, scoped, tag = 'prefetched SMEM operand 0']
  %s0 = inlined_call_operand.<no memory space> [shape: s32[1], index: 0, kind: input, shape index: {}]
  %s1 = inlined_call_operand.hbm [shape: f32[400,256], index: 1, kind: input, shape index: {}]
  %s2 = inlined_call_operand.hbm [shape: bf16[256,128], index: 2, kind: input, shape index: {}]
  %s3 = inlined_call_operand.hbm [shape: f32[1,128], index: 3, kind: input, shape index: {}]
  %s4 = inlined_call_operand.hbm [shape: bf16[128,1024], index: 4, kind: input, shape index: {}]
  %s5 = inlined_call_operand.vmem [shape: f32[1,1024], index: 5, kind: input, shape index: {}]
  %s6 = inlined_call_operand.hbm [shape: bf16[4,128,128], index: 6, kind: input, shape index: {}]
  %s7 = inlined_call_operand.hbm [shape: f32[4,1,128], index: 7, kind: input, shape index: {}]
  %s8 = inlined_call_operand.vmem [shape: bf16[4,8,64], index: 8, kind: input, shape index: {}]
  %s9 = inlined_call_operand.vmem [shape: f32[8,1], index: 9, kind: input, shape index: {}]
  %s10 = inlined_call_operand.vmem [shape: f32[8,128], index: 10, kind: input, shape index: {}]
  %s11 = inlined_call_operand.vmem [shape: f32[8,1], index: 11, kind: input, shape index: {}]
  %s12 = inlined_call_operand.hbm [shape: f32[8,400], index: 12, kind: output, shape index: {0}]
  %s13 = inlined_call_operand.hbm [shape: f32[8,128], index: 13, kind: output, shape index: {1}]
  %s14 = inlined_call_operand.vmem [shape: f32[8,1], index: 14, kind: output, shape index: {2}]
  %15 = xla_tuple %s12, %s13, %s14
  %s16 = sld [smem:[#allocation0]]
  $region125: #{tpu_custom_call.1} parent=0
    _
  %s18 = ssub.s32 1, %s16
  %s19 = scalar_select 0, %s18, %s16
  %20 = sst [smem:[#allocation6]] %s0
  $region1: #{tpu_custom_call.1} parent=0
    #allocation7 [shape = 'u8[262144]{0}', space=vmem, size = 0x40000, scoped, tag = 'input window, operand 1']
    #allocation8 [shape = 's32[2]{0}', space=sflag, size = 0x8, scoped, tag = 'scoped memory for tpu_custom_call.1']
    #allocation9 [shape = 's32[2]{0}', space=sflag, size = 0x8, scoped, tag = 'scoped memory for tpu_custom_call.1']
    #allocation10 [shape = 'u8[65536]{0}', space=vmem, size = 0x10000, scoped, tag = 'input window, operand 2, single buffered']
    #allocation11 [shape = 's32[1]{0}', space=sflag, size = 0x4, scoped, tag = 'scoped memory for tpu_custom_call.1']
    #allocation12 [shape = 'u8[512]{0}', space=vmem, size = 0x400, scoped, tag = 'input window, operand 3, single buffered']
    #allocation13 [shape = 'u8[262144]{0}', space=vmem, size = 0x40000, scoped, tag = 'input window, operand 4, single buffered']
    #allocation14 [shape = 's32[1]{0}', space=sflag, size = 0x4, scoped, tag = 'scoped memory for tpu_custom_call.1']
    #allocation15 [shape = 'u8[131072]{0}', space=vmem, size = 0x20000, scoped, tag = 'input window, operand 6, single buffered']
    #allocation16 [shape = 'u8[2048]{0}', space=vmem, size = 0x800, scoped, tag = 'input window, operand 7, single buffered']
    #allocation17 [shape = 's32[1]{0}', space=sflag, size = 0x4, scoped, tag = 'scoped memory for tpu_custom_call.1']
    #allocation18 [shape = 'u8[8192]{0}', space=vmem, size = 0x2000, scoped, tag = 'output window, operand 0']
    #allocation19 [shape = 'u8[4096]{0}', space=vmem, size = 0x1000, scoped, tag = 'output window, operand 1, single buffered']
    #allocation20 [shape = 's32[1]{0}', space=sflag, size = 0x4, scoped, tag = 'scoped memory for tpu_custom_call.1']
    %21 = vsyncpa [#allocation8], 0
    %s22 = scalar_lea.sflag [#allocation8], 1
    %23 = vsyncpa %s22, 0
    %24 = vsyncpa [#allocation11], 0
    %25 = vsyncpa [#allocation14], 0
    %26 = vsyncpa [#allocation17], 0
    %27 = vsyncpa [#allocation9], 0
    %s28 = scalar_lea.sflag [#allocation9], 1
    %29 = vsyncpa %s28, 0
    %30 = vsyncpa [#allocation20], 0
    loop: start=0, step=1, limit=6
    $region2: #{tpu_custom_call.1} parent=1 // loop_pre_header
      _
    $region3: #{tpu_custom_call.1} parent=1 // loop_header
      %s32 = sphi 0, %s36
      %p33 = scmp.ge.s32.totalorder %s32, 6
      %s42 = sphi 0, %s44
      %s45 = sphi 0, %s42
      %s46 = sphi 0, %s45
      %s62 = sphi 0, %s46
      %s66 = sphi 0, %s66
      %s68 = sphi 0, %s66
      %s69 = sphi 0, %s68
      %s83 = sphi 0, %s69
      %s87 = sphi 0, %s87
      %s89 = sphi 0, %s87
      %s90 = sphi 0, %s89
      %s104 = sphi 0, %s90
      %s108 = sphi 0, %s108
      %s110 = sphi 0, %s108
      %s111 = sphi 0, %s110
      %s125 = sphi 0, %s111
      %s129 = sphi 0, %s129
      %s131 = sphi 0, %s129
      %s132 = sphi 0, %s131
      %s146 = sphi 0, %s132
      %s150 = sphi 0, %s150
      %s152 = sphi 0, %s150
      %s153 = sphi 0, %s152
      %s167 = sphi 0, %s153
      %s171 = sphi 0, %s171
      %s173 = sphi 0, %s171
      %s174 = sphi 0, %s173
      %s188 = sphi 0, %s174
      %s192 = sphi 0, %s192
      %s194 = sphi 0, %s192
      %s195 = sphi 0, %s194
      %s209 = sphi 0, %s195
      %s213 = sphi 0, %s213
      %s215 = sphi 0, %s213
      %s216 = sphi 0, %s215
      %s230 = sphi 0, %s216
      %s234 = sphi 0, %s234
      %s236 = sphi 0, %s234
      %s237 = sphi 0, %s236
      %s251 = sphi 0, %s237
      %s255 = sphi 0, %s255
      %s257 = sphi 0, %s255
      %s258 = sphi 0, %s257
      %s272 = sphi 0, %s258
      %s278 = sphi 0, %s280
      %s281 = sphi 0, %s278
      %s282 = sphi 0, %s281
      %s298 = sphi 0, %s282
      %s302 = sphi 0, %s302
      %s304 = sphi 0, %s302
      %s305 = sphi 0, %s304
      %s319 = sphi 0, %s305
      %s323 = sphi 0, %s323
      %s325 = sphi 0, %s323
      %s326 = sphi 0, %s325
      %s340 = sphi 0, %s326
    $region4: #{tpu_custom_call.1} parent=1 // loop_header_branch
      %35 = sbr.rel (%p33) target = $region8
    $region5: #{tpu_custom_call.1} parent=1 // loop_body
      %s37 = ssub.s32 %s32, 1
      %s38 = ssub.s32 %s32, 2
      %s39 = sadd.s32 %s32, 1
      %s40 = ssub.s32 %s32, %s39
      %p41 = scmp.eq.s32.totalorder %s40, 0
      %s43 = sadd.s32 %s42, 1
      %s44 = scalar_select %p41, %s42, %s43
      %p47 = pneg %p41
      %p48 = scmp.eq.s32.totalorder %s32, 3
      %p49 = por %p47, %p48
      %p50 = scmp.ne.s32.totalorder %s42, %s45
      %p51 = scmp.eq.s32.totalorder %s32, 0
      %p52 = por %p50, %p51
      %p53 = scmp.ne.s32.totalorder %s42, %s45
      %p54 = scmp.eq.s32.totalorder %s37, 3
      %p55 = por %p53, %p54
      %p56 = scmp.ne.s32.totalorder %s45, %s46
      %p57 = scmp.eq.s32.totalorder %s37, 0
      %p58 = por %p56, %p57
      %p59 = scmp.ne.s32.totalorder %s45, %s46
      %p60 = scmp.eq.s32.totalorder %s38, 3
      %p61 = por %p59, %p60
      %p63 = scmp.ne.s32.totalorder %s46, %s62
      %p64 = scmp.eq.s32.totalorder %s38, 0
      %p65 = por %p63, %p64
      %s67 = sadd.s32 %s66, 1
      %p70 = scmp.eq.s32.totalorder %s32, 3
      %p71 = scmp.ne.s32.totalorder %s66, %s68
      %p72 = scmp.eq.s32.totalorder %s32, 0
      %p73 = por %p71, %p72
      %p74 = scmp.ne.s32.totalorder %s66, %s68
      %p75 = scmp.eq.s32.totalorder %s37, 3
      %p76 = por %p74, %p75
      %p77 = scmp.ne.s32.totalorder %s68, %s69
      %p78 = scmp.eq.s32.totalorder %s37, 0
      %p79 = por %p77, %p78
      %p80 = scmp.ne.s32.totalorder %s68, %s69
      %p81 = scmp.eq.s32.totalorder %s38, 3
      %p82 = por %p80, %p81
      %p84 = scmp.ne.s32.totalorder %s69, %s83
      %p85 = scmp.eq.s32.totalorder %s38, 0
      %p86 = por %p84, %p85
      %s88 = sadd.s32 %s87, 1
      %p91 = scmp.eq.s32.totalorder %s32, 3
      %p92 = scmp.ne.s32.totalorder %s87, %s89
      %p93 = scmp.eq.s32.totalorder %s32, 0
      %p94 = por %p92, %p93
      %p95 = scmp.ne.s32.totalorder %s87, %s89
      %p96 = scmp.eq.s32.totalorder %s37, 3
      %p97 = por %p95, %p96
      %p98 = scmp.ne.s32.totalorder %s89, %s90
      %p99 = scmp.eq.s32.totalorder %s37, 0
      %p100 = por %p98, %p99
      %p101 = scmp.ne.s32.totalorder %s89, %s90
      %p102 = scmp.eq.s32.totalorder %s38, 3
      %p103 = por %p101, %p102
      %p105 = scmp.ne.s32.totalorder %s90, %s104
      %p106 = scmp.eq.s32.totalorder %s38, 0
      %p107 = por %p105, %p106
      %s109 = sadd.s32 %s108, 1
      %p112 = scmp.eq.s32.totalorder %s32, 3
      %p113 = scmp.ne.s32.totalorder %s108, %s110
      %p114 = scmp.eq.s32.totalorder %s32, 0
      %p115 = por %p113, %p114
      %p116 = scmp.ne.s32.totalorder %s108, %s110
      %p117 = scmp.eq.s32.totalorder %s37, 3
      %p118 = por %p116, %p117
      %p119 = scmp.ne.s32.totalorder %s110, %s111
      %p120 = scmp.eq.s32.totalorder %s37, 0
      %p121 = por %p119, %p120
      %p122 = scmp.ne.s32.totalorder %s110, %s111
      %p123 = scmp.eq.s32.totalorder %s38, 3
      %p124 = por %p122, %p123
      %p126 = scmp.ne.s32.totalorder %s111, %s125
      %p127 = scmp.eq.s32.totalorder %s38, 0
      %p128 = por %p126, %p127
      %s130 = sadd.s32 %s129, 1
      %p133 = scmp.eq.s32.totalorder %s32, 3
      %p134 = scmp.ne.s32.totalorder %s129, %s131
      %p135 = scmp.eq.s32.totalorder %s32, 0
      %p136 = por %p134, %p135
      %p137 = scmp.ne.s32.totalorder %s129, %s131
      %p138 = scmp.eq.s32.totalorder %s37, 3
      %p139 = por %p137, %p138
      %p140 = scmp.ne.s32.totalorder %s131, %s132
      %p141 = scmp.eq.s32.totalorder %s37, 0
      %p142 = por %p140, %p141
      %p143 = scmp.ne.s32.totalorder %s131, %s132
      %p144 = scmp.eq.s32.totalorder %s38, 3
      %p145 = por %p143, %p144
      %p147 = scmp.ne.s32.totalorder %s132, %s146
      %p148 = scmp.eq.s32.totalorder %s38, 0
      %p149 = por %p147, %p148
      %s151 = sadd.s32 %s150, 1
      %p154 = scmp.eq.s32.totalorder %s32, 3
      %p155 = scmp.ne.s32.totalorder %s150, %s152
      %p156 = scmp.eq.s32.totalorder %s32, 0
      %p157 = por %p155, %p156
      %p158 = scmp.ne.s32.totalorder %s150, %s152
      %p159 = scmp.eq.s32.totalorder %s37, 3
      %p160 = por %p158, %p159
      %p161 = scmp.ne.s32.totalorder %s152, %s153
      %p162 = scmp.eq.s32.totalorder %s37, 0
      %p163 = por %p161, %p162
      %p164 = scmp.ne.s32.totalorder %s152, %s153
      %p165 = scmp.eq.s32.totalorder %s38, 3
      %p166 = por %p164, %p165
      %p168 = scmp.ne.s32.totalorder %s153, %s167
      %p169 = scmp.eq.s32.totalorder %s38, 0
      %p170 = por %p168, %p169
      %s172 = sadd.s32 %s171, 1
      %p175 = scmp.eq.s32.totalorder %s32, 3
      %p176 = scmp.ne.s32.totalorder %s171, %s173
      %p177 = scmp.eq.s32.totalorder %s32, 0
      %p178 = por %p176, %p177
      %p179 = scmp.ne.s32.totalorder %s171, %s173
      %p180 = scmp.eq.s32.totalorder %s37, 3
      %p181 = por %p179, %p180
      %p182 = scmp.ne.s32.totalorder %s173, %s174
      %p183 = scmp.eq.s32.totalorder %s37, 0
      %p184 = por %p182, %p183
      %p185 = scmp.ne.s32.totalorder %s173, %s174
      %p186 = scmp.eq.s32.totalorder %s38, 3
      %p187 = por %p185, %p186
      %p189 = scmp.ne.s32.totalorder %s174, %s188
      %p190 = scmp.eq.s32.totalorder %s38, 0
      %p191 = por %p189, %p190
      %s193 = sadd.s32 %s192, 1
      %p196 = scmp.eq.s32.totalorder %s32, 3
      %p197 = scmp.ne.s32.totalorder %s192, %s194
      %p198 = scmp.eq.s32.totalorder %s32, 0
      %p199 = por %p197, %p198
      %p200 = scmp.ne.s32.totalorder %s192, %s194
      %p201 = scmp.eq.s32.totalorder %s37, 3
      %p202 = por %p200, %p201
      %p203 = scmp.ne.s32.totalorder %s194, %s195
      %p204 = scmp.eq.s32.totalorder %s37, 0
      %p205 = por %p203, %p204
      %p206 = scmp.ne.s32.totalorder %s194, %s195
      %p207 = scmp.eq.s32.totalorder %s38, 3
      %p208 = por %p206, %p207
      %p210 = scmp.ne.s32.totalorder %s195, %s209
      %p211 = scmp.eq.s32.totalorder %s38, 0
      %p212 = por %p210, %p211
      %s214 = sadd.s32 %s213, 1
      %p217 = scmp.eq.s32.totalorder %s32, 3
      %p218 = scmp.ne.s32.totalorder %s213, %s215
      %p219 = scmp.eq.s32.totalorder %s32, 0
      %p220 = por %p218, %p219
      %p221 = scmp.ne.s32.totalorder %s213, %s215
      %p222 = scmp.eq.s32.totalorder %s37, 3
      %p223 = por %p221, %p222
      %p224 = scmp.ne.s32.totalorder %s215, %s216
      %p225 = scmp.eq.s32.totalorder %s37, 0
      %p226 = por %p224, %p225
      %p227 = scmp.ne.s32.totalorder %s215, %s216
      %p228 = scmp.eq.s32.totalorder %s38, 3
      %p229 = por %p227, %p228
      %p231 = scmp.ne.s32.totalorder %s216, %s230
      %p232 = scmp.eq.s32.totalorder %s38, 0
      %p233 = por %p231, %p232
      %s235 = sadd.s32 %s234, 1
      %p238 = scmp.eq.s32.totalorder %s32, 3
      %p239 = scmp.ne.s32.totalorder %s234, %s236
      %p240 = scmp.eq.s32.totalorder %s32, 0
      %p241 = por %p239, %p240
      %p242 = scmp.ne.s32.totalorder %s234, %s236
      %p243 = scmp.eq.s32.totalorder %s37, 3
      %p244 = por %p242, %p243
      %p245 = scmp.ne.s32.totalorder %s236, %s237
      %p246 = scmp.eq.s32.totalorder %s37, 0
      %p247 = por %p245, %p246
      %p248 = scmp.ne.s32.totalorder %s236, %s237
      %p249 = scmp.eq.s32.totalorder %s38, 3
      %p250 = por %p248, %p249
      %p252 = scmp.ne.s32.totalorder %s237, %s251
      %p253 = scmp.eq.s32.totalorder %s38, 0
      %p254 = por %p252, %p253
      %s256 = sadd.s32 %s255, 1
      %p259 = scmp.eq.s32.totalorder %s32, 3
      %p260 = scmp.ne.s32.totalorder %s255, %s257
      %p261 = scmp.eq.s32.totalorder %s32, 0
      %p262 = por %p260, %p261
      %p263 = scmp.ne.s32.totalorder %s255, %s257
      %p264 = scmp.eq.s32.totalorder %s37, 3
      %p265 = por %p263, %p264
      %p266 = scmp.ne.s32.totalorder %s257, %s258
      %p267 = scmp.eq.s32.totalorder %s37, 0
      %p268 = por %p266, %p267
      %p269 = scmp.ne.s32.totalorder %s257, %s258
      %p270 = scmp.eq.s32.totalorder %s38, 3
      %p271 = por %p269, %p270
      %p273 = scmp.ne.s32.totalorder %s258, %s272
      %p274 = scmp.eq.s32.totalorder %s38, 0
      %p275 = por %p273, %p274
      %s276 = ssub.s32 %s32, %s39
      %p277 = scmp.eq.s32.totalorder %s276, 0
      %s279 = sadd.s32 %s278, 1
      %s280 = scalar_select %p277, %s278, %s279
      %p283 = pneg %p277
      %p284 = scmp.eq.s32.totalorder %s32, 3
      %p285 = por %p283, %p284
      %p286 = scmp.ne.s32.totalorder %s278, %s281
      %p287 = scmp.eq.s32.totalorder %s32, 0
      %p288 = por %p286, %p287
      %p289 = scmp.ne.s32.totalorder %s278, %s281
      %p290 = scmp.eq.s32.totalorder %s37, 3
      %p291 = por %p289, %p290
      %p292 = scmp.ne.s32.totalorder %s281, %s282
      %p293 = scmp.eq.s32.totalorder %s37, 0
      %p294 = por %p292, %p293
      %p295 = scmp.ne.s32.totalorder %s281, %s282
      %p296 = scmp.eq.s32.totalorder %s38, 3
      %p297 = por %p295, %p296
      %p299 = scmp.ne.s32.totalorder %s282, %s298
      %p300 = scmp.eq.s32.totalorder %s38, 0
      %p301 = por %p299, %p300
      %s303 = sadd.s32 %s302, 1
      %p306 = scmp.eq.s32.totalorder %s32, 3
      %p307 = scmp.ne.s32.totalorder %s302, %s304
      %p308 = scmp.eq.s32.totalorder %s32, 0
      %p309 = por %p307, %p308
      %p310 = scmp.ne.s32.totalorder %s302, %s304
      %p311 = scmp.eq.s32.totalorder %s37, 3
      %p312 = por %p310, %p311
      %p313 = scmp.ne.s32.totalorder %s304, %s305
      %p314 = scmp.eq.s32.totalorder %s37, 0
      %p315 = por %p313, %p314
      %p316 = scmp.ne.s32.totalorder %s304, %s305
      %p317 = scmp.eq.s32.totalorder %s38, 3
      %p318 = por %p316, %p317
      %p320 = scmp.ne.s32.totalorder %s305, %s319
      %p321 = scmp.eq.s32.totalorder %s38, 0
      %p322 = por %p320, %p321
      %s324 = sadd.s32 %s323, 1
      %p327 = scmp.eq.s32.totalorder %s32, 3
      %p328 = scmp.ne.s32.totalorder %s323, %s325
      %p329 = scmp.eq.s32.totalorder %s32, 0
      %p330 = por %p328, %p329
      %p331 = scmp.ne.s32.totalorder %s323, %s325
      %p332 = scmp.eq.s32.totalorder %s37, 3
      %p333 = por %p331, %p332
      %p334 = scmp.ne.s32.totalorder %s325, %s326
      %p335 = scmp.eq.s32.totalorder %s37, 0
      %p336 = por %p334, %p335
      %p337 = scmp.ne.s32.totalorder %s325, %s326
      %p338 = scmp.eq.s32.totalorder %s38, 3
      %p339 = por %p337, %p338
      %p341 = scmp.ne.s32.totalorder %s326, %s340
      %p342 = scmp.eq.s32.totalorder %s38, 0
      %p343 = por %p341, %p342
      %p344 = scmp.le.s32.totalorder 1, %s32
      %p345 = scmp.lt.s32.totalorder %s32, 5
      %p346 = pnand %p344, %p345
      %p347 = pneg %p346
      // Predicated region
      $region9: #{tpu_custom_call.1} parent=5 // pred_check
        _
      $region10: #{tpu_custom_call.1} parent=5 // pred_check_branch
        %349 = sbr.rel (%p346) target = $region12
      $region11: #{tpu_custom_call.1} parent=5 // pred_region
        %s350 = ssub.s32 %s32, 1
        // Predicated region
        $region13: #{tpu_custom_call.1} parent=11 // pred_check
          %p351 = pneg %p79
        $region14: #{tpu_custom_call.1} parent=11 // pred_check_branch
          %353 = sbr.rel (%p351) target = $region16
        $region15: #{tpu_custom_call.1} parent=11 // pred_region
          %s355 = ssub.s32 2048, 2048
          %356 = vsyncadd [#allocation11], %s355
          %s357 = sshll.u32 [#allocation10], 4
          %s358 = int_to_ptr.vmem [resolvable:$true] %s357
          %363 = dma.hbm_to_vmem [thread:$0]  %s2, 2048, %s358, [#allocation11], 64, 64, 4
        $region16: #{tpu_custom_call.1} parent=11 // pred_fallthru
          _
        // Predicated region
        $region17: #{tpu_custom_call.1} parent=11 // pred_check
          %p364 = pneg %p100
        $region18: #{tpu_custom_call.1} parent=11 // pred_check_branch
          %366 = sbr.rel (%p364) target = $region20
        $region19: #{tpu_custom_call.1} parent=11 // pred_region
          %s368 = ssub.s32 16, 16
          %369 = vsyncadd [#allocation11], %s368
          %s371 = sshll.u32 [#allocation12], 4
          %s372 = int_to_ptr.vmem [resolvable:$true] %s371
          %374 = dma.hbm_to_vmem [thread:$0]  %s3, 16, %s372, [#allocation11]
        $region20: #{tpu_custom_call.1} parent=11 // pred_fallthru
          _
        // Predicated region
        $region21: #{tpu_custom_call.1} parent=11 // pred_check
          %p375 = pneg %p121
        $region22: #{tpu_custom_call.1} parent=11 // pred_check_branch
          %377 = sbr.rel (%p375) target = $region24
        $region23: #{tpu_custom_call.1} parent=11 // pred_region
          %s379 = ssub.s32 8192, 8192
          %380 = vsyncadd [#allocation14], %s379
          %s381 = sshll.u32 [#allocation13], 4
          %s382 = int_to_ptr.vmem [resolvable:$true] %s381
          %387 = dma.hbm_to_vmem [thread:$0]  %s4, 8192, %s382, [#allocation14], 512, 512, 32
        $region24: #{tpu_custom_call.1} parent=11 // pred_fallthru
          _
        // Predicated region
        $region25: #{tpu_custom_call.1} parent=11 // pred_check
          %p388 = pneg %p142
        $region26: #{tpu_custom_call.1} parent=11 // pred_check_branch
          %390 = sbr.rel (%p388) target = $region28
        $region27: #{tpu_custom_call.1} parent=11 // pred_region
          _
        $region28: #{tpu_custom_call.1} parent=11 // pred_fallthru
          _
        // Predicated region
        $region29: #{tpu_custom_call.1} parent=11 // pred_check
          %p391 = pneg %p163
        $region30: #{tpu_custom_call.1} parent=11 // pred_check_branch
          %393 = sbr.rel (%p391) target = $region32
        $region31: #{tpu_custom_call.1} parent=11 // pred_region
          %s395 = ssub.s32 4096, 4096
          %396 = vsyncadd [#allocation14], %s395
          %s397 = sshll.u32 [#allocation15], 4
          %s398 = int_to_ptr.vmem [resolvable:$true] %s397
          %403 = dma.hbm_to_vmem [thread:$0]  %s6, 4096, %s398, [#allocation14], 64, 64, 4
        $region32: #{tpu_custom_call.1} parent=11 // pred_fallthru
          _
        // Predicated region
        $region33: #{tpu_custom_call.1} parent=11 // pred_check
          %p404 = pneg %p184
        $region34: #{tpu_custom_call.1} parent=11 // pred_check_branch
          %406 = sbr.rel (%p404) target = $region36
        $region35: #{tpu_custom_call.1} parent=11 // pred_region
          %s408 = ssub.s32 64, 64
          %409 = vsyncadd [#allocation17], %s408
          %s410 = sshll.u32 [#allocation16], 4
          %s411 = int_to_ptr.vmem [resolvable:$true] %s410
          %416 = dma.hbm_to_vmem [thread:$0]  %s7, 64, %s411, [#allocation17], 16, 16, 1
        $region36: #{tpu_custom_call.1} parent=11 // pred_fallthru
          _
        // Predicated region
        $region37: #{tpu_custom_call.1} parent=11 // pred_check
          %p417 = pneg %p205
        $region38: #{tpu_custom_call.1} parent=11 // pred_check_branch
          %419 = sbr.rel (%p417) target = $region40
        $region39: #{tpu_custom_call.1} parent=11 // pred_region
          _
        $region40: #{tpu_custom_call.1} parent=11 // pred_fallthru
          _
        // Predicated region
        $region41: #{tpu_custom_call.1} parent=11 // pred_check
          %p420 = pneg %p226
        $region42: #{tpu_custom_call.1} parent=11 // pred_check_branch
          %422 = sbr.rel (%p420) target = $region44
        $region43: #{tpu_custom_call.1} parent=11 // pred_region
          _
        $region44: #{tpu_custom_call.1} parent=11 // pred_fallthru
          _
        // Predicated region
        $region45: #{tpu_custom_call.1} parent=11 // pred_check
          %p423 = pneg %p247
        $region46: #{tpu_custom_call.1} parent=11 // pred_check_branch
          %425 = sbr.rel (%p423) target = $region48
        $region47: #{tpu_custom_call.1} parent=11 // pred_region
          _
        $region48: #{tpu_custom_call.1} parent=11 // pred_fallthru
          _
        // Predicated region
        $region49: #{tpu_custom_call.1} parent=11 // pred_check
          %p426 = pneg %p268
        $region50: #{tpu_custom_call.1} parent=11 // pred_check_branch
          %428 = sbr.rel (%p426) target = $region52
        $region51: #{tpu_custom_call.1} parent=11 // pred_region
          _
        $region52: #{tpu_custom_call.1} parent=11 // pred_fallthru
          _
      $region12: #{tpu_custom_call.1} parent=5 // pred_fallthru
        _
      %p429 = scmp.lt.s32.totalorder %s32, 4
      // Predicated region
      $region53: #{tpu_custom_call.1} parent=5 // pred_check
        %p430 = pneg %p429
      $region54: #{tpu_custom_call.1} parent=5 // pred_check_branch
        %432 = sbr.rel (%p430) target = $region56
      $region55: #{tpu_custom_call.1} parent=5 // pred_region
        // Predicated region
        $region57: #{tpu_custom_call.1} parent=55 // pred_check
          %p433 = pneg %p52
        $region58: #{tpu_custom_call.1} parent=55 // pred_check_branch
          %435 = sbr.rel (%p433) target = $region60
        $region59: #{tpu_custom_call.1} parent=55 // pred_region
          %s436 = sand.u32 %s42, 1
          %s437 = scalar_lea.sflag [#allocation8], %s436
          %s438 = sand.u32 %s42, 1
          %s439 = smul.addr %s438, 256
          %s440 = scalar_lea.vmem [#allocation7], %s439
          %s441 = smul.u32 16, %s32
          %s442 = ssub.s32 50, %s441
          %p443 = scmp.lt.s32.totalorder %s442, 16
          %s444 = scalar_select %p443, %s442, 16
          %s445 = smul.u32 128, %s444
          %s446 = smul.u32 %s445, 2
          %s448 = ssub.s32 4096, %s446
          %449 = vsyncadd %s437, %s448
          %p450 = scmp.ne.s32.totalorder 0, %s446
          %s451 = smul.addr %s441, 2
          %s452 = smul.addr %s451, 128
          %s453 = scalar_lea.hbm %s1, %s452
          %s454 = smul.u32 16, %s444
          %s455 = sshll.u32 %s440, 4
          %s456 = int_to_ptr.vmem [resolvable:$true] %s455
          %s457 = sshll.u32 %s454, 4
          %461 = dma.hbm_to_vmem [thread:$0]  (%p450), %s453, %s457, %s456, %s437, 256, 256, 16
        $region60: #{tpu_custom_call.1} parent=55 // pred_fallthru
          _
      $region56: #{tpu_custom_call.1} parent=5 // pred_fallthru
        _
      %p462 = scmp.le.s32.totalorder 1, %s32
      %p463 = scmp.lt.s32.totalorder %s32, 5
      %p464 = pnand %p462, %p463
      %p465 = pneg %p464
      // Predicated region
      $region61: #{tpu_custom_call.1} parent=5 // pred_check
        _
      $region62: #{tpu_custom_call.1} parent=5 // pred_check_branch
        %467 = sbr.rel (%p464) target = $region64
      $region63: #{tpu_custom_call.1} parent=5 // pred_region
        %s468 = ssub.s32 %s32, 1
        %s469 = sand.u32 %s45, 1
        %s470 = scalar_lea.sflag [#allocation8], %s469
        %s471 = sand.u32 %s45, 1
        %s472 = smul.addr %s471, 256
        %s473 = scalar_lea.vmem [#allocation7], %s472
        // Predicated region
        $region65: #{tpu_custom_call.1} parent=63 // pred_check
          %p474 = pneg %p58
        $region66: #{tpu_custom_call.1} parent=63 // pred_check_branch
          %476 = sbr.rel (%p474) target = $region68
        $region67: #{tpu_custom_call.1} parent=63 // pred_region
          %477 = dma.done %s470, 4096
        $region68: #{tpu_custom_call.1} parent=63 // pred_fallthru
          _
        // Predicated region
        $region69: #{tpu_custom_call.1} parent=63 // pred_check
          %p478 = pneg %p79
        $region70: #{tpu_custom_call.1} parent=63 // pred_check_branch
          %480 = sbr.rel (%p478) target = $region72
        $region71: #{tpu_custom_call.1} parent=63 // pred_region
          %481 = dma.done [#allocation11], 2048
        $region72: #{tpu_custom_call.1} parent=63 // pred_fallthru
          _
        // Predicated region
        $region73: #{tpu_custom_call.1} parent=63 // pred_check
          %p482 = pneg %p100
        $region74: #{tpu_custom_call.1} parent=63 // pred_check_branch
          %484 = sbr.rel (%p482) target = $region76
        $region75: #{tpu_custom_call.1} parent=63 // pred_region
          %485 = dma.done [#allocation11], 16
        $region76: #{tpu_custom_call.1} parent=63 // pred_fallthru
          _
        // Predicated region
        $region77: #{tpu_custom_call.1} parent=63 // pred_check
          %p486 = pneg %p121
        $region78: #{tpu_custom_call.1} parent=63 // pred_check_branch
          %488 = sbr.rel (%p486) target = $region80
        $region79: #{tpu_custom_call.1} parent=63 // pred_region
          %489 = dma.done [#allocation14], 8192
        $region80: #{tpu_custom_call.1} parent=63 // pred_fallthru
          _
        // Predicated region
        $region81: #{tpu_custom_call.1} parent=63 // pred_check
          %p490 = pneg %p163
        $region82: #{tpu_custom_call.1} parent=63 // pred_check_branch
          %492 = sbr.rel (%p490) target = $region84
        $region83: #{tpu_custom_call.1} parent=63 // pred_region
          %493 = dma.done [#allocation14], 4096
        $region84: #{tpu_custom_call.1} parent=63 // pred_fallthru
          _
        // Predicated region
        $region85: #{tpu_custom_call.1} parent=63 // pred_check
          %p494 = pneg %p184
        $region86: #{tpu_custom_call.1} parent=63 // pred_check_branch
          %496 = sbr.rel (%p494) target = $region88
        $region87: #{tpu_custom_call.1} parent=63 // pred_region
          %497 = dma.done [#allocation17], 64
        $region88: #{tpu_custom_call.1} parent=63 // pred_fallthru
          _
        %s498 = sand.u32 %s45, 1
        %s499 = scalar_lea.sflag [#allocation8], %s498
        %s500 = sand.u32 %s45, 1
        %s501 = smul.addr %s500, 256
        %s502 = scalar_lea.vmem [#allocation7], %s501
        %p503 = pneg %p58
        %p504 = pneg %p55
        %p505 = pneg %p79
        %p506 = pneg %p76
        %p507 = pneg %p100
        %p508 = pneg %p97
        %p509 = pneg %p121
        %p510 = pneg %p118
        %p511 = pneg %p142
        %p512 = pneg %p139
        %p513 = pneg %p163
        %p514 = pneg %p160
        %p515 = pneg %p184
        %p516 = pneg %p181
        %p517 = pneg %p205
        %p518 = pneg %p202
        %p519 = pneg %p226
        %p520 = pneg %p223
        %p521 = pneg %p247
        %p522 = pneg %p244
        %p523 = pneg %p268
        %p524 = pneg %p265
        %p525 = pneg %p294
        %p526 = pneg %p291
        %s527 = sand.u32 %s281, 1
        %s528 = scalar_lea.sflag [#allocation9], %s527
        %s529 = sand.u32 %s281, 1
        %s530 = smul.addr %s529, 8
        %s531 = scalar_lea.vmem [#allocation18], %s530
        %p532 = pneg %p315
        %p533 = pneg %p312
        %p534 = pneg %p336
        %p535 = pneg %p333
        %s536 = smul.u32 16, %s37
        %s537 = ssub.s32 50, %s536
        %p538 = scmp.lt.s32.totalorder %s537, 16
        %s539 = scalar_select %p538, %s537, 16
        %s540 = smul.u32 128, %s539
        %s541 = smul.u32 %s540, 2
        %p543 = scmp.eq.s32.totalorder %s37, 0
        // Predicated region
        $region89: #{tpu_custom_call.1} parent=63 // pred_check
          %p544 = pneg %p543
        $region90: #{tpu_custom_call.1} parent=63 // pred_check_branch
          %546 = sbr.rel (%p544) target = $region92
        $region91: #{tpu_custom_call.1} parent=63 // pred_region
          %vm547 = vcmask 7168
          %548 = vst.msk [vmem:[#allocation2] sm:$0xff] %vm547, -inf
          %549 = vst.msk [vmem:[#allocation3] sm:$0xff] %vm547, 0.0
          %550 = vst [vmem:[#allocation4] sm:$0xff] 0.0
        $region92: #{tpu_custom_call.1} parent=63 // pred_fallthru
          _
        %s551 = sld [smem:[#allocation6]]
        %s552 = smul.u32 %s37, 128
        %s553 = ssub.s32 %s551, %s552
        %v554 = vld [vmem:[%s473] sm:$0xff]
        %v555 = vld [vmem:[%s473 + $0x8] sm:$0xff]
        %v556 = vld [vmem:[%s473 + $0x10] sm:$0xff]
        %v557 = vld [vmem:[%s473 + $0x18] sm:$0xff]
        %v558 = vld [vmem:[%s473 + $0x20] sm:$0xff]
        %v559 = vld [vmem:[%s473 + $0x28] sm:$0xff]
        %v560 = vld [vmem:[%s473 + $0x30] sm:$0xff]
        %v561 = vld [vmem:[%s473 + $0x38] sm:$0xff]
        %v562 = vld [vmem:[%s473 + $0x40] sm:$0xff]
        %v563 = vld [vmem:[%s473 + $0x48] sm:$0xff]
        %v564 = vld [vmem:[%s473 + $0x50] sm:$0xff]
        %v565 = vld [vmem:[%s473 + $0x58] sm:$0xff]
        %v566 = vld [vmem:[%s473 + $0x60] sm:$0xff]
        %v567 = vld [vmem:[%s473 + $0x68] sm:$0xff]
        %v568 = vld [vmem:[%s473 + $0x70] sm:$0xff]
        %v569 = vld [vmem:[%s473 + $0x78] sm:$0xff]
        %v570 = vld [vmem:[%s473 + $0x80] sm:$0xff]
        %v571 = vld [vmem:[%s473 + $0x88] sm:$0xff]
        %v572 = vld [vmem:[%s473 + $0x90] sm:$0xff]
        %v573 = vld [vmem:[%s473 + $0x98] sm:$0xff]
        %v574 = vld [vmem:[%s473 + $0xa0] sm:$0xff]
        %v575 = vld [vmem:[%s473 + $0xa8] sm:$0xff]
        %v576 = vld [vmem:[%s473 + $0xb0] sm:$0xff]
        %v577 = vld [vmem:[%s473 + $0xb8] sm:$0xff]
        %v578 = vld [vmem:[%s473 + $0xc0] sm:$0xff]
        %v579 = vld [vmem:[%s473 + $0xc8] sm:$0xff]
        %v580 = vld [vmem:[%s473 + $0xd0] sm:$0xff]
        %v581 = vld [vmem:[%s473 + $0xd8] sm:$0xff]
        %v582 = vld [vmem:[%s473 + $0xe0] sm:$0xff]
        %v583 = vld [vmem:[%s473 + $0xe8] sm:$0xff]
        %v584 = vld [vmem:[%s473 + $0xf0] sm:$0xff]
        %v585 = vld [vmem:[%s473 + $0xf8] sm:$0xff]
        %v586 = vpack.c.bf16 %v556, %v554
        %v587 = vpack.c.bf16 %v557, %v555
        %v588 = vpack.c.bf16 %v560, %v558
        %v589 = vpack.c.bf16 %v561, %v559
        %v590 = vpack.c.bf16 %v564, %v562
        %v591 = vpack.c.bf16 %v565, %v563
        %v592 = vpack.c.bf16 %v568, %v566
        %v593 = vpack.c.bf16 %v569, %v567
        %v594 = vpack.c.bf16 %v572, %v570
        %v595 = vpack.c.bf16 %v573, %v571
        %v596 = vpack.c.bf16 %v576, %v574
        %v597 = vpack.c.bf16 %v577, %v575
        %v598 = vpack.c.bf16 %v580, %v578
        %v599 = vpack.c.bf16 %v581, %v579
        %v600 = vpack.c.bf16 %v584, %v582
        %v601 = vpack.c.bf16 %v585, %v583
        %v602 = vld [vmem:[#allocation10] sm:$0xf]
        %v603 = vld [vmem:[#allocation10 + $0x4] sm:$0xf]
        %v604 = vld [vmem:[#allocation10 + $0x8] sm:$0xf]
        %v605 = vld [vmem:[#allocation10 + $0xc] sm:$0xf]
        %v606 = vld [vmem:[#allocation10 + $0x10] sm:$0xf]
        %v607 = vld [vmem:[#allocation10 + $0x14] sm:$0xf]
        %v608 = vld [vmem:[#allocation10 + $0x18] sm:$0xf]
        %v609 = vld [vmem:[#allocation10 + $0x1c] sm:$0xf]
        %v610 = vld [vmem:[#allocation10 + $0x20] sm:$0xf]
        %v611 = vld [vmem:[#allocation10 + $0x24] sm:$0xf]
        %v612 = vld [vmem:[#allocation10 + $0x28] sm:$0xf]
        %v613 = vld [vmem:[#allocation10 + $0x2c] sm:$0xf]
        %v614 = vld [vmem:[#allocation10 + $0x30] sm:$0xf]
        %v615 = vld [vmem:[#allocation10 + $0x34] sm:$0xf]
        %v616 = vld [vmem:[#allocation10 + $0x38] sm:$0xf]
        %v617 = vld [vmem:[#allocation10 + $0x3c] sm:$0xf]
        %v618 = vld [vmem:[#allocation10 + $0x40] sm:$0xf]
        %v619 = vld [vmem:[#allocation10 + $0x44] sm:$0xf]
        %v620 = vld [vmem:[#allocation10 + $0x48] sm:$0xf]
        %v621 = vld [vmem:[#allocation10 + $0x4c] sm:$0xf]
        %v622 = vld [vmem:[#allocation10 + $0x50] sm:$0xf]
        %v623 = vld [vmem:[#allocation10 + $0x54] sm:$0xf]
        %v624 = vld [vmem:[#allocation10 + $0x58] sm:$0xf]
        %v625 = vld [vmem:[#allocation10 + $0x5c] sm:$0xf]
        %v626 = vld [vmem:[#allocation10 + $0x60] sm:$0xf]
        %v627 = vld [vmem:[#allocation10 + $0x64] sm:$0xf]
        %v628 = vld [vmem:[#allocation10 + $0x68] sm:$0xf]
        %v629 = vld [vmem:[#allocation10 + $0x6c] sm:$0xf]
        %v630 = vld [vmem:[#allocation10 + $0x70] sm:$0xf]
        %v631 = vld [vmem:[#allocation10 + $0x74] sm:$0xf]
        %v632 = vld [vmem:[#allocation10 + $0x78] sm:$0xf]
        %v633 = vld [vmem:[#allocation10 + $0x7c] sm:$0xf]
        %v634 = vld [vmem:[#allocation12] sm:$0x1]
        %v636 = vlaneseq
        %v637 = vshrl.u32 %v636, 7
        %v638 = vsub.s32 0, %v637
        %v639 = vrot.slane %v634, %v638
        %v673 = vunpack.c.l.b16 %v602
        %v674 = vunpack.c.l.b16 %v603
        %v675 = vunpack.c.l.b16 %v604
        %v676 = vunpack.c.l.b16 %v605
        %v677 = vunpack.c.l.b16 %v606
        %v678 = vunpack.c.l.b16 %v607
        %v679 = vunpack.c.l.b16 %v608
        %v680 = vunpack.c.l.b16 %v609
        %v681 = vunpack.c.l.b16 %v610
        %v682 = vunpack.c.l.b16 %v611
        %v683 = vunpack.c.l.b16 %v612
        %v684 = vunpack.c.l.b16 %v613
        %v685 = vunpack.c.l.b16 %v614
        %v686 = vunpack.c.l.b16 %v615
        %v687 = vunpack.c.l.b16 %v616
        %v688 = vunpack.c.l.b16 %v617
        %v689 = vunpack.c.l.b16 %v618
        %v690 = vunpack.c.l.b16 %v619
        %v691 = vunpack.c.l.b16 %v620
        %v692 = vunpack.c.l.b16 %v621
        %v693 = vunpack.c.l.b16 %v622
        %v694 = vunpack.c.l.b16 %v623
        %v695 = vunpack.c.l.b16 %v624
        %v696 = vunpack.c.l.b16 %v625
        %v697 = vunpack.c.l.b16 %v626
        %v698 = vunpack.c.l.b16 %v627
        %v699 = vunpack.c.l.b16 %v628
        %v700 = vunpack.c.l.b16 %v629
        %v701 = vunpack.c.l.b16 %v630
        %v702 = vunpack.c.l.b16 %v631
        %v703 = vunpack.c.l.b16 %v632
        %v704 = vunpack.c.l.b16 %v633
        %v705 = vpack.c.b16 %v674, %v673
        %v706 = vpack.c.b16 %v676, %v675
        %v707 = vpack.c.b16 %v678, %v677
        %v708 = vpack.c.b16 %v680, %v679
        %v709 = vpack.c.b16 %v682, %v681
        %v710 = vpack.c.b16 %v684, %v683
        %v711 = vpack.c.b16 %v686, %v685
        %v712 = vpack.c.b16 %v688, %v687
        %v713 = vpack.c.b16 %v690, %v689
        %v714 = vpack.c.b16 %v692, %v691
        %v715 = vpack.c.b16 %v694, %v693
        %v716 = vpack.c.b16 %v696, %v695
        %v717 = vpack.c.b16 %v698, %v697
        %v718 = vpack.c.b16 %v700, %v699
        %v719 = vpack.c.b16 %v702, %v701
        %v720 = vpack.c.b16 %v704, %v703
        %737 = vmatprep.subr.bf16.mxu0 0
        %738 = vmatpush1.bf16.msra.mxu0 %v712
        %739 = vmatprep.subr.bf16.mxu0 0
        %740 = vmatpush1.bf16.msra.mxu0 %v711
        %741 = vmatprep.subr.bf16.mxu0 0
        %742 = vmatpush1.bf16.msra.mxu0 %v710
        %743 = vmatprep.subr.bf16.mxu0 0
        %744 = vmatpush1.bf16.msra.mxu0 %v709
        %745 = vmatprep.subr.bf16.mxu0 0
        %746 = vmatpush1.bf16.msra.mxu0 %v708
        %747 = vmatprep.subr.bf16.mxu0 0
        %748 = vmatpush1.bf16.msra.mxu0 %v707
        %749 = vmatprep.subr.bf16.mxu0 0
        %750 = vmatpush1.bf16.msra.mxu0 %v706
        %751 = vmatprep.subr.bf16.mxu0 0
        %752 = vmatpush1.bf16.msra.mxu0 %v705
        %753 = vmatprep.subr.bf16.mxu0 0
        %754 = vmatpush2.bf16.msra.mxu0 %v720
        %755 = vmatprep.subr.bf16.mxu0 0
        %756 = vmatpush2.bf16.msra.mxu0 %v719
        %757 = vmatprep.subr.bf16.mxu0 0
        %758 = vmatpush2.bf16.msra.mxu0 %v718
        %759 = vmatprep.subr.bf16.mxu0 0
        %760 = vmatpush2.bf16.msra.mxu0 %v717
        %761 = vmatprep.subr.bf16.mxu0 0
        %762 = vmatpush2.bf16.msra.mxu0 %v716
        %763 = vmatprep.subr.bf16.mxu0 0
        %764 = vmatpush2.bf16.msra.mxu0 %v715
        %765 = vmatprep.subr.bf16.mxu0 0
        %766 = vmatpush2.bf16.msra.mxu0 %v714
        %767 = vmatprep.subr.bf16.mxu0 0
        %768 = vmatpush2.bf16.msra.mxu0 %v713
        %769 = vmatprep.mubr.bf16.mxu0 %v587
        %770 = vmatmul.mubr.bf16.gmra.mxu0 %v586
        %v771 = vpop.f32.mrf.mxu0
        %v772 = vadd.f32 %v639, %v771
        %v773 = vpop.f32.mrf.mxu0
        %v774 = vpop.f32.mrf.mxu0
        %v775 = vadd.f32 %v639, %v774
        %v776 = vpop.f32.mrf.mxu0
        %777 = vmatprep.mubr.bf16.mxu0 %v589
        %778 = vmatmul.mubr.bf16.gmra.mxu0 %v588
        %v779 = vpop.f32.mrf.mxu0
        %v780 = vadd.f32 %v639, %v779
        %v781 = vpop.f32.mrf.mxu0
        %v782 = vpop.f32.mrf.mxu0
        %v783 = vadd.f32 %v639, %v782
        %v784 = vpop.f32.mrf.mxu0
        %785 = vmatprep.mubr.bf16.mxu0 %v591
        %786 = vmatmul.mubr.bf16.gmra.mxu0 %v590
        %v787 = vpop.f32.mrf.mxu0
        %v788 = vadd.f32 %v639, %v787
        %v789 = vpop.f32.mrf.mxu0
        %v790 = vpop.f32.mrf.mxu0
        %v791 = vadd.f32 %v639, %v790
        %v792 = vpop.f32.mrf.mxu0
        %793 = vmatprep.mubr.bf16.mxu0 %v593
        %794 = vmatmul.mubr.bf16.gmra.mxu0 %v592
        %v795 = vpop.f32.mrf.mxu0
        %v796 = vadd.f32 %v639, %v795
        %v797 = vpop.f32.mrf.mxu0
        %v798 = vpop.f32.mrf.mxu0
        %v799 = vadd.f32 %v639, %v798
        %v800 = vpop.f32.mrf.mxu0
        %801 = vmatprep.mubr.bf16.mxu0 %v595
        %802 = vmatmul.mubr.bf16.gmra.mxu0 %v594
        %v803 = vpop.f32.mrf.mxu0
        %v804 = vadd.f32 %v639, %v803
        %v805 = vpop.f32.mrf.mxu0
        %v806 = vpop.f32.mrf.mxu0
        %v807 = vadd.f32 %v639, %v806
        %v808 = vpop.f32.mrf.mxu0
        %809 = vmatprep.mubr.bf16.mxu0 %v597
        %810 = vmatmul.mubr.bf16.gmra.mxu0 %v596
        %v811 = vpop.f32.mrf.mxu0
        %v812 = vadd.f32 %v639, %v811
        %v813 = vpop.f32.mrf.mxu0
        %v814 = vpop.f32.mrf.mxu0
        %v815 = vadd.f32 %v639, %v814
        %v816 = vpop.f32.mrf.mxu0
        %817 = vmatprep.mubr.bf16.mxu0 %v599
        %818 = vmatmul.mubr.bf16.gmra.mxu0 %v598
        %v819 = vpop.f32.mrf.mxu0
        %v820 = vadd.f32 %v639, %v819
        %v821 = vpop.f32.mrf.mxu0
        %v822 = vpop.f32.mrf.mxu0
        %v823 = vadd.f32 %v639, %v822
        %v824 = vpop.f32.mrf.mxu0
        %825 = vmatprep.mubr.bf16.mxu0 %v601
        %826 = vmatmul.mubr.bf16.gmra.mxu0 %v600
        %v827 = vpop.f32.mrf.mxu0
        %v828 = vadd.f32 %v639, %v827
        %v829 = vpop.f32.mrf.mxu0
        %v830 = vpop.f32.mrf.mxu0
        %v831 = vadd.f32 %v639, %v830
        %v832 = vpop.f32.mrf.mxu0
        %833 = vdwg.mxu0
        %v834 = vmax.f32 %v772, 0.0
        %v835 = vmax.f32 %v775, 0.0
        %v836 = vmax.f32 %v780, 0.0
        %v837 = vmax.f32 %v783, 0.0
        %v838 = vmax.f32 %v788, 0.0
        %v839 = vmax.f32 %v791, 0.0
        %v840 = vmax.f32 %v796, 0.0
        %v841 = vmax.f32 %v799, 0.0
        %v842 = vmax.f32 %v804, 0.0
        %v843 = vmax.f32 %v807, 0.0
        %v844 = vmax.f32 %v812, 0.0
        %v845 = vmax.f32 %v815, 0.0
        %v846 = vmax.f32 %v820, 0.0
        %v847 = vmax.f32 %v823, 0.0
        %v848 = vmax.f32 %v828, 0.0
        %v849 = vmax.f32 %v831, 0.0
        %v850 = vlaneseq
        %v851 = vshrl.u32 %v850, 7
        %v852 = vadd.s32 %v851, 8
        %v853 = vadd.s32 %v851, 16
        %v854 = vadd.s32 %v851, 24
        %v855 = vadd.s32 %v851, 32
        %v856 = vadd.s32 %v851, 40
        %v857 = vadd.s32 %v851, 48
        %v858 = vadd.s32 %v851, 56
        %v859 = vadd.s32 %v851, 64
        %v860 = vadd.s32 %v851, 72
        %v861 = vadd.s32 %v851, 80
        %v862 = vadd.s32 %v851, 88
        %v863 = vadd.s32 %v851, 96
        %v864 = vadd.s32 %v851, 104
        %v865 = vadd.s32 %v851, 112
        %v866 = vadd.s32 %v851, 120
        %v867 = vstv %s553
        %vm868 = vcmp.lt.s32.totalorder %v851, %v867
        %vm869 = vcmp.lt.s32.totalorder %v852, %v867
        %vm870 = vcmp.lt.s32.totalorder %v853, %v867
        %vm871 = vcmp.lt.s32.totalorder %v854, %v867
        %vm872 = vcmp.lt.s32.totalorder %v855, %v867
        %vm873 = vcmp.lt.s32.totalorder %v856, %v867
        %vm874 = vcmp.lt.s32.totalorder %v857, %v867
        %vm875 = vcmp.lt.s32.totalorder %v858, %v867
        %vm876 = vcmp.lt.s32.totalorder %v859, %v867
        %vm877 = vcmp.lt.s32.totalorder %v860, %v867
        %vm878 = vcmp.lt.s32.totalorder %v861, %v867
        %vm879 = vcmp.lt.s32.totalorder %v862, %v867
        %vm880 = vcmp.lt.s32.totalorder %v863, %v867
        %vm881 = vcmp.lt.s32.totalorder %v864, %v867
        %vm882 = vcmp.lt.s32.totalorder %v865, %v867
        %vm883 = vcmp.lt.s32.totalorder %v866, %v867
        %v884 = vsel %vm868, 1, 0
        %v885 = vsel %vm869, 1, 0
        %v886 = vsel %vm870, 1, 0
        %v887 = vsel %vm871, 1, 0
        %v888 = vsel %vm872, 1, 0
        %v889 = vsel %vm873, 1, 0
        %v890 = vsel %vm874, 1, 0
        %v891 = vsel %vm875, 1, 0
        %v892 = vsel %vm876, 1, 0
        %v893 = vsel %vm877, 1, 0
        %v894 = vsel %vm878, 1, 0
        %v895 = vsel %vm879, 1, 0
        %v896 = vsel %vm880, 1, 0
        %v897 = vsel %vm881, 1, 0
        %v898 = vsel %vm882, 1, 0
        %v899 = vsel %vm883, 1, 0
        %vm900 = vcmp.eq.s32.totalorder %v884, 1
        %vm901 = vcmp.eq.s32.totalorder %v885, 1
        %vm902 = vcmp.eq.s32.totalorder %v886, 1
        %vm903 = vcmp.eq.s32.totalorder %v887, 1
        %vm904 = vcmp.eq.s32.totalorder %v888, 1
        %vm905 = vcmp.eq.s32.totalorder %v889, 1
        %vm906 = vcmp.eq.s32.totalorder %v890, 1
        %vm907 = vcmp.eq.s32.totalorder %v891, 1
        %vm908 = vcmp.eq.s32.totalorder %v892, 1
        %vm909 = vcmp.eq.s32.totalorder %v893, 1
        %vm910 = vcmp.eq.s32.totalorder %v894, 1
        %vm911 = vcmp.eq.s32.totalorder %v895, 1
        %vm912 = vcmp.eq.s32.totalorder %v896, 1
        %vm913 = vcmp.eq.s32.totalorder %v897, 1
        %vm914 = vcmp.eq.s32.totalorder %v898, 1
        %vm915 = vcmp.eq.s32.totalorder %v899, 1
        %v916 = vsel %vm900, %v834, 0.0
        %v917 = vsel %vm901, %v835, 0.0
        %v918 = vsel %vm902, %v836, 0.0
        %v919 = vsel %vm903, %v837, 0.0
        %v920 = vsel %vm904, %v838, 0.0
        %v921 = vsel %vm905, %v839, 0.0
        %v922 = vsel %vm906, %v840, 0.0
        %v923 = vsel %vm907, %v841, 0.0
        %v924 = vsel %vm908, %v842, 0.0
        %v925 = vsel %vm909, %v843, 0.0
        %v926 = vsel %vm910, %v844, 0.0
        %v927 = vsel %vm911, %v845, 0.0
        %v928 = vsel %vm912, %v846, 0.0
        %v929 = vsel %vm913, %v847, 0.0
        %v930 = vsel %vm914, %v848, 0.0
        %v931 = vsel %vm915, %v849, 0.0
        %v932 = vpack.c.bf16 %v917, %v916
        %v933 = vpack.c.bf16 %v919, %v918
        %v934 = vpack.c.bf16 %v921, %v920
        %v935 = vpack.c.bf16 %v923, %v922
        %v936 = vpack.c.bf16 %v925, %v924
        %v937 = vpack.c.bf16 %v927, %v926
        %v938 = vpack.c.bf16 %v929, %v928
        %v939 = vpack.c.bf16 %v931, %v930
        %v940 = vld [vmem:[#allocation13] sm:$0xff]
        %v941 = vld [vmem:[#allocation13 + $0x8] sm:$0xff]
        %v942 = vld [vmem:[#allocation13 + $0x10] sm:$0xff]
        %v943 = vld [vmem:[#allocation13 + $0x18] sm:$0xff]
        %v944 = vld [vmem:[#allocation13 + $0x20] sm:$0xff]
        %v945 = vld [vmem:[#allocation13 + $0x28] sm:$0xff]
        %v946 = vld [vmem:[#allocation13 + $0x30] sm:$0xff]
        %v947 = vld [vmem:[#allocation13 + $0x38] sm:$0xff]
        %v948 = vld [vmem:[#allocation13 + $0x40] sm:$0xff]
        %v949 = vld [vmem:[#allocation13 + $0x48] sm:$0xff]
        %v950 = vld [vmem:[#allocation13 + $0x50] sm:$0xff]
        %v951 = vld [vmem:[#allocation13 + $0x58] sm:$0xff]
        %v952 = vld [vmem:[#allocation13 + $0x60] sm:$0xff]
        %v953 = vld [vmem:[#allocation13 + $0x68] sm:$0xff]
        %v954 = vld [vmem:[#allocation13 + $0x70] sm:$0xff]
        %v955 = vld [vmem:[#allocation13 + $0x78] sm:$0xff]
        %v956 = vld [vmem:[#allocation13 + $0x80] sm:$0xff]
        %v957 = vld [vmem:[#allocation13 + $0x88] sm:$0xff]
        %v958 = vld [vmem:[#allocation13 + $0x90] sm:$0xff]
        %v959 = vld [vmem:[#allocation13 + $0x98] sm:$0xff]
        %v960 = vld [vmem:[#allocation13 + $0xa0] sm:$0xff]
        %v961 = vld [vmem:[#allocation13 + $0xa8] sm:$0xff]
        %v962 = vld [vmem:[#allocation13 + $0xb0] sm:$0xff]
        %v963 = vld [vmem:[#allocation13 + $0xb8] sm:$0xff]
        %v964 = vld [vmem:[#allocation13 + $0xc0] sm:$0xff]
        %v965 = vld [vmem:[#allocation13 + $0xc8] sm:$0xff]
        %v966 = vld [vmem:[#allocation13 + $0xd0] sm:$0xff]
        %v967 = vld [vmem:[#allocation13 + $0xd8] sm:$0xff]
        %v968 = vld [vmem:[#allocation13 + $0xe0] sm:$0xff]
        %v969 = vld [vmem:[#allocation13 + $0xe8] sm:$0xff]
        %v970 = vld [vmem:[#allocation13 + $0xf0] sm:$0xff]
        %v971 = vld [vmem:[#allocation13 + $0xf8] sm:$0xff]
        %v972 = vld [vmem:[#allocation13 + $0x100] sm:$0xff]
        %v973 = vld [vmem:[#allocation13 + $0x108] sm:$0xff]
        %v974 = vld [vmem:[#allocation13 + $0x110] sm:$0xff]
        %v975 = vld [vmem:[#allocation13 + $0x118] sm:$0xff]
        %v976 = vld [vmem:[#allocation13 + $0x120] sm:$0xff]
        %v977 = vld [vmem:[#allocation13 + $0x128] sm:$0xff]
        %v978 = vld [vmem:[#allocation13 + $0x130] sm:$0xff]
        %v979 = vld [vmem:[#allocation13 + $0x138] sm:$0xff]
        %v980 = vld [vmem:[#allocation13 + $0x140] sm:$0xff]
        %v981 = vld [vmem:[#allocation13 + $0x148] sm:$0xff]
        %v982 = vld [vmem:[#allocation13 + $0x150] sm:$0xff]
        %v983 = vld [vmem:[#allocation13 + $0x158] sm:$0xff]
        %v984 = vld [vmem:[#allocation13 + $0x160] sm:$0xff]
        %v985 = vld [vmem:[#allocation13 + $0x168] sm:$0xff]
        %v986 = vld [vmem:[#allocation13 + $0x170] sm:$0xff]
        %v987 = vld [vmem:[#allocation13 + $0x178] sm:$0xff]
        %v988 = vld [vmem:[#allocation13 + $0x180] sm:$0xff]
        %v989 = vld [vmem:[#allocation13 + $0x188] sm:$0xff]
        %v990 = vld [vmem:[#allocation13 + $0x190] sm:$0xff]
        %v991 = vld [vmem:[#allocation13 + $0x198] sm:$0xff]
        %v992 = vld [vmem:[#allocation13 + $0x1a0] sm:$0xff]
        %v993 = vld [vmem:[#allocation13 + $0x1a8] sm:$0xff]
        %v994 = vld [vmem:[#allocation13 + $0x1b0] sm:$0xff]
        %v995 = vld [vmem:[#allocation13 + $0x1b8] sm:$0xff]
        %v996 = vld [vmem:[#allocation13 + $0x1c0] sm:$0xff]
        %v997 = vld [vmem:[#allocation13 + $0x1c8] sm:$0xff]
        %v998 = vld [vmem:[#allocation13 + $0x1d0] sm:$0xff]
        %v999 = vld [vmem:[#allocation13 + $0x1d8] sm:$0xff]
        %v1000 = vld [vmem:[#allocation13 + $0x1e0] sm:$0xff]
        %v1001 = vld [vmem:[#allocation13 + $0x1e8] sm:$0xff]
        %v1002 = vld [vmem:[#allocation13 + $0x1f0] sm:$0xff]
        %v1003 = vld [vmem:[#allocation13 + $0x1f8] sm:$0xff]
        %v1004 = vld [vmem:[%s5] sm:$0xff]
        %v1006 = vlaneseq
        %v1007 = vshrl.u32 %v1006, 7
        %v1008 = vsub.s32 0, %v1007
        %v1009 = vrot.slane %v1004, %v1008
        %v1010 = vlaneseq
        %v1011 = vshrl.u32 %v1010, 7
        %v1012 = vsub.s32 1, %v1011
        %v1013 = vrot.slane %v1004, %v1012
        %v1014 = vlaneseq
        %v1015 = vshrl.u32 %v1014, 7
        %v1016 = vsub.s32 2, %v1015
        %v1017 = vrot.slane %v1004, %v1016
        %v1018 = vlaneseq
        %v1019 = vshrl.u32 %v1018, 7
        %v1020 = vsub.s32 3, %v1019
        %v1021 = vrot.slane %v1004, %v1020
        %v1022 = vlaneseq
        %v1023 = vshrl.u32 %v1022, 7
        %v1024 = vsub.s32 4, %v1023
        %v1025 = vrot.slane %v1004, %v1024
        %v1026 = vlaneseq
        %v1027 = vshrl.u32 %v1026, 7
        %v1028 = vsub.s32 5, %v1027
        %v1029 = vrot.slane %v1004, %v1028
        %v1030 = vlaneseq
        %v1031 = vshrl.u32 %v1030, 7
        %v1032 = vsub.s32 6, %v1031
        %v1033 = vrot.slane %v1004, %v1032
        %v1034 = vlaneseq
        %v1035 = vshrl.u32 %v1034, 7
        %v1036 = vsub.s32 7, %v1035
        %v1037 = vrot.slane %v1004, %v1036
        %v1110 = vunpack.c.l.b16 %v940
        %v1111 = vunpack.c.h.b16 %v940
        %v1112 = vunpack.c.l.b16 %v941
        %v1113 = vunpack.c.h.b16 %v941
        %v1114 = vunpack.c.l.b16 %v942
        %v1115 = vunpack.c.h.b16 %v942
        %v1116 = vunpack.c.l.b16 %v943
        %v1117 = vunpack.c.h.b16 %v943
        %v1118 = vunpack.c.l.b16 %v944
        %v1119 = vunpack.c.h.b16 %v944
        %v1120 = vunpack.c.l.b16 %v945
        %v1121 = vunpack.c.h.b16 %v945
        %v1122 = vunpack.c.l.b16 %v946
        %v1123 = vunpack.c.h.b16 %v946
        %v1124 = vunpack.c.l.b16 %v947
        %v1125 = vunpack.c.h.b16 %v947
        %v1126 = vunpack.c.l.b16 %v948
        %v1127 = vunpack.c.h.b16 %v948
        %v1128 = vunpack.c.l.b16 %v949
        %v1129 = vunpack.c.h.b16 %v949
        %v1130 = vunpack.c.l.b16 %v950
        %v1131 = vunpack.c.h.b16 %v950
        %v1132 = vunpack.c.l.b16 %v951
        %v1133 = vunpack.c.h.b16 %v951
        %v1134 = vunpack.c.l.b16 %v952
        %v1135 = vunpack.c.h.b16 %v952
        %v1136 = vunpack.c.l.b16 %v953
        %v1137 = vunpack.c.h.b16 %v953
        %v1138 = vunpack.c.l.b16 %v954
        %v1139 = vunpack.c.h.b16 %v954
        %v1140 = vunpack.c.l.b16 %v955
        %v1141 = vunpack.c.h.b16 %v955
        %v1142 = vunpack.c.l.b16 %v956
        %v1143 = vunpack.c.h.b16 %v956
        %v1144 = vunpack.c.l.b16 %v957
        %v1145 = vunpack.c.h.b16 %v957
        %v1146 = vunpack.c.l.b16 %v958
        %v1147 = vunpack.c.h.b16 %v958
        %v1148 = vunpack.c.l.b16 %v959
        %v1149 = vunpack.c.h.b16 %v959
        %v1150 = vunpack.c.l.b16 %v960
        %v1151 = vunpack.c.h.b16 %v960
        %v1152 = vunpack.c.l.b16 %v961
        %v1153 = vunpack.c.h.b16 %v961
        %v1154 = vunpack.c.l.b16 %v962
        %v1155 = vunpack.c.h.b16 %v962
        %v1156 = vunpack.c.l.b16 %v963
        %v1157 = vunpack.c.h.b16 %v963
        %v1158 = vunpack.c.l.b16 %v964
        %v1159 = vunpack.c.h.b16 %v964
        %v1160 = vunpack.c.l.b16 %v965
        %v1161 = vunpack.c.h.b16 %v965
        %v1162 = vunpack.c.l.b16 %v966
        %v1163 = vunpack.c.h.b16 %v966
        %v1164 = vunpack.c.l.b16 %v967
        %v1165 = vunpack.c.h.b16 %v967
        %v1166 = vunpack.c.l.b16 %v968
        %v1167 = vunpack.c.h.b16 %v968
        %v1168 = vunpack.c.l.b16 %v969
        %v1169 = vunpack.c.h.b16 %v969
        %v1170 = vunpack.c.l.b16 %v970
        %v1171 = vunpack.c.h.b16 %v970
        %v1172 = vunpack.c.l.b16 %v971
        %v1173 = vunpack.c.h.b16 %v971
        %v1174 = vunpack.c.l.b16 %v972
        %v1175 = vunpack.c.h.b16 %v972
        %v1176 = vunpack.c.l.b16 %v973
        %v1177 = vunpack.c.h.b16 %v973
        %v1178 = vunpack.c.l.b16 %v974
        %v1179 = vunpack.c.h.b16 %v974
        %v1180 = vunpack.c.l.b16 %v975
        %v1181 = vunpack.c.h.b16 %v975
        %v1182 = vunpack.c.l.b16 %v976
        %v1183 = vunpack.c.h.b16 %v976
        %v1184 = vunpack.c.l.b16 %v977
        %v1185 = vunpack.c.h.b16 %v977
        %v1186 = vunpack.c.l.b16 %v978
        %v1187 = vunpack.c.h.b16 %v978
        %v1188 = vunpack.c.l.b16 %v979
        %v1189 = vunpack.c.h.b16 %v979
        %v1190 = vunpack.c.l.b16 %v980
        %v1191 = vunpack.c.h.b16 %v980
        %v1192 = vunpack.c.l.b16 %v981
        %v1193 = vunpack.c.h.b16 %v981
        %v1194 = vunpack.c.l.b16 %v982
        %v1195 = vunpack.c.h.b16 %v982
        %v1196 = vunpack.c.l.b16 %v983
        %v1197 = vunpack.c.h.b16 %v983
        %v1198 = vunpack.c.l.b16 %v984
        %v1199 = vunpack.c.h.b16 %v984
        %v1200 = vunpack.c.l.b16 %v985
        %v1201 = vunpack.c.h.b16 %v985
        %v1202 = vunpack.c.l.b16 %v986
        %v1203 = vunpack.c.h.b16 %v986
        %v1204 = vunpack.c.l.b16 %v987
        %v1205 = vunpack.c.h.b16 %v987
        %v1206 = vunpack.c.l.b16 %v988
        %v1207 = vunpack.c.h.b16 %v988
        %v1208 = vunpack.c.l.b16 %v989
        %v1209 = vunpack.c.h.b16 %v989
        %v1210 = vunpack.c.l.b16 %v990
        %v1211 = vunpack.c.h.b16 %v990
        %v1212 = vunpack.c.l.b16 %v991
        %v1213 = vunpack.c.h.b16 %v991
        %v1214 = vunpack.c.l.b16 %v992
        %v1215 = vunpack.c.h.b16 %v992
        %v1216 = vunpack.c.l.b16 %v993
        %v1217 = vunpack.c.h.b16 %v993
        %v1218 = vunpack.c.l.b16 %v994
        %v1219 = vunpack.c.h.b16 %v994
        %v1220 = vunpack.c.l.b16 %v995
        %v1221 = vunpack.c.h.b16 %v995
        %v1222 = vunpack.c.l.b16 %v996
        %v1223 = vunpack.c.h.b16 %v996
        %v1224 = vunpack.c.l.b16 %v997
        %v1225 = vunpack.c.h.b16 %v997
        %v1226 = vunpack.c.l.b16 %v998
        %v1227 = vunpack.c.h.b16 %v998
        %v1228 = vunpack.c.l.b16 %v999
        %v1229 = vunpack.c.h.b16 %v999
        %v1230 = vunpack.c.l.b16 %v1000
        %v1231 = vunpack.c.h.b16 %v1000
        %v1232 = vunpack.c.l.b16 %v1001
        %v1233 = vunpack.c.h.b16 %v1001
        %v1234 = vunpack.c.l.b16 %v1002
        %v1235 = vunpack.c.h.b16 %v1002
        %v1236 = vunpack.c.l.b16 %v1003
        %v1237 = vunpack.c.h.b16 %v1003
        %v1238 = vpack.c.b16 %v1118, %v1110
        %v1239 = vpack.c.b16 %v1119, %v1111
        %v1240 = vpack.c.b16 %v1120, %v1112
        %v1241 = vpack.c.b16 %v1121, %v1113
        %v1242 = vpack.c.b16 %v1122, %v1114
        %v1243 = vpack.c.b16 %v1123, %v1115
        %v1244 = vpack.c.b16 %v1124, %v1116
        %v1245 = vpack.c.b16 %v1125, %v1117
        %v1246 = vpack.c.b16 %v1134, %v1126
        %v1247 = vpack.c.b16 %v1135, %v1127
        %v1248 = vpack.c.b16 %v1136, %v1128
        %v1249 = vpack.c.b16 %v1137, %v1129
        %v1250 = vpack.c.b16 %v1138, %v1130
        %v1251 = vpack.c.b16 %v1139, %v1131
        %v1252 = vpack.c.b16 %v1140, %v1132
        %v1253 = vpack.c.b16 %v1141, %v1133
        %v1254 = vpack.c.b16 %v1150, %v1142
        %v1255 = vpack.c.b16 %v1151, %v1143
        %v1256 = vpack.c.b16 %v1152, %v1144
        %v1257 = vpack.c.b16 %v1153, %v1145
        %v1258 = vpack.c.b16 %v1154, %v1146
        %v1259 = vpack.c.b16 %v1155, %v1147
        %v1260 = vpack.c.b16 %v1156, %v1148
        %v1261 = vpack.c.b16 %v1157, %v1149
        %v1262 = vpack.c.b16 %v1166, %v1158
        %v1263 = vpack.c.b16 %v1167, %v1159
        %v1264 = vpack.c.b16 %v1168, %v1160
        %v1265 = vpack.c.b16 %v1169, %v1161
        %v1266 = vpack.c.b16 %v1170, %v1162
        %v1267 = vpack.c.b16 %v1171, %v1163
        %v1268 = vpack.c.b16 %v1172, %v1164
        %v1269 = vpack.c.b16 %v1173, %v1165
        %v1270 = vpack.c.b16 %v1182, %v1174
        %v1271 = vpack.c.b16 %v1183, %v1175
        %v1272 = vpack.c.b16 %v1184, %v1176
        %v1273 = vpack.c.b16 %v1185, %v1177
        %v1274 = vpack.c.b16 %v1186, %v1178
        %v1275 = vpack.c.b16 %v1187, %v1179
        %v1276 = vpack.c.b16 %v1188, %v1180
        %v1277 = vpack.c.b16 %v1189, %v1181
        %v1278 = vpack.c.b16 %v1198, %v1190
        %v1279 = vpack.c.b16 %v1199, %v1191
        %v1280 = vpack.c.b16 %v1200, %v1192
        %v1281 = vpack.c.b16 %v1201, %v1193
        %v1282 = vpack.c.b16 %v1202, %v1194
        %v1283 = vpack.c.b16 %v1203, %v1195
        %v1284 = vpack.c.b16 %v1204, %v1196
        %v1285 = vpack.c.b16 %v1205, %v1197
        %v1286 = vpack.c.b16 %v1214, %v1206
        %v1287 = vpack.c.b16 %v1215, %v1207
        %v1288 = vpack.c.b16 %v1216, %v1208
        %v1289 = vpack.c.b16 %v1217, %v1209
        %v1290 = vpack.c.b16 %v1218, %v1210
        %v1291 = vpack.c.b16 %v1219, %v1211
        %v1292 = vpack.c.b16 %v1220, %v1212
        %v1293 = vpack.c.b16 %v1221, %v1213
        %v1294 = vpack.c.b16 %v1230, %v1222
        %v1295 = vpack.c.b16 %v1231, %v1223
        %v1296 = vpack.c.b16 %v1232, %v1224
        %v1297 = vpack.c.b16 %v1233, %v1225
        %v1298 = vpack.c.b16 %v1234, %v1226
        %v1299 = vpack.c.b16 %v1235, %v1227
        %v1300 = vpack.c.b16 %v1236, %v1228
        %v1301 = vpack.c.b16 %v1237, %v1229
        %1366 = vmatprep.subr.bf16.mxu0 %v1295
        %1367 = vmatpush1.bf16.msra.mxu0 %v1294
        %1368 = vmatprep.subr.bf16.mxu0 %v1287
        %1369 = vmatpush1.bf16.msra.mxu0 %v1286
        %1370 = vmatprep.subr.bf16.mxu0 %v1279
        %1371 = vmatpush1.bf16.msra.mxu0 %v1278
        %1372 = vmatprep.subr.bf16.mxu0 %v1271
        %1373 = vmatpush1.bf16.msra.mxu0 %v1270
        %1374 = vmatprep.subr.bf16.mxu0 %v1263
        %1375 = vmatpush1.bf16.msra.mxu0 %v1262
        %1376 = vmatprep.subr.bf16.mxu0 %v1255
        %1377 = vmatpush1.bf16.msra.mxu0 %v1254
        %1378 = vmatprep.subr.bf16.mxu0 %v1247
        %1379 = vmatpush1.bf16.msra.mxu0 %v1246
        %1380 = vmatprep.subr.bf16.mxu0 %v1239
        %1381 = vmatpush1.bf16.msra.mxu0 %v1238
        %1382 = vmatprep.subr.bf16.mxu0 0
        %1383 = vmatpush2.bf16.msra.mxu0 0
        %1384 = vmatprep.subr.bf16.mxu0 0
        %1385 = vmatpush2.bf16.msra.mxu0 0
        %1386 = vmatprep.subr.bf16.mxu0 0
        %1387 = vmatpush2.bf16.msra.mxu0 0
        %1388 = vmatprep.subr.bf16.mxu0 0
        %1389 = vmatpush2.bf16.msra.mxu0 0
        %1390 = vmatprep.subr.bf16.mxu0 0
        %1391 = vmatpush2.bf16.msra.mxu0 0
        %1392 = vmatprep.subr.bf16.mxu0 0
        %1393 = vmatpush2.bf16.msra.mxu0 0
        %1394 = vmatprep.subr.bf16.mxu0 0
        %1395 = vmatpush2.bf16.msra.mxu0 0
        %1396 = vmatprep.subr.bf16.mxu0 0
        %1397 = vmatpush2.bf16.msra.mxu0 0
        %1398 = vmatprep.mubr.bf16.mxu0 0
        %1399 = vmatmul.mubr.bf16.gmra.mxu0 %v932
        %v1400 = vpop.f32.mrf.mxu0
        %v1401 = vadd.f32 %v1009, %v1400
        %v1402 = vpop.f32.mrf.mxu0
        %v1403 = vadd.f32 %v1013, %v1402
        %v1404 = vpop.f32.mrf.mxu0
        %v1405 = vadd.f32 %v1009, %v1404
        %v1406 = vpop.f32.mrf.mxu0
        %v1407 = vadd.f32 %v1013, %v1406
        %1408 = vmatprep.mubr.bf16.mxu0 0
        %1409 = vmatmul.mubr.bf16.gmra.mxu0 %v933
        %v1410 = vpop.f32.mrf.mxu0
        %v1411 = vadd.f32 %v1009, %v1410
        %v1412 = vpop.f32.mrf.mxu0
        %v1413 = vadd.f32 %v1013, %v1412
        %v1414 = vpop.f32.mrf.mxu0
        %v1415 = vadd.f32 %v1009, %v1414
        %v1416 = vpop.f32.mrf.mxu0
        %v1417 = vadd.f32 %v1013, %v1416
        %1418 = vmatprep.mubr.bf16.mxu0 0
        %1419 = vmatmul.mubr.bf16.gmra.mxu0 %v934
        %v1420 = vpop.f32.mrf.mxu0
        %v1421 = vadd.f32 %v1009, %v1420
        %v1422 = vpop.f32.mrf.mxu0
        %v1423 = vadd.f32 %v1013, %v1422
        %v1424 = vpop.f32.mrf.mxu0
        %v1425 = vadd.f32 %v1009, %v1424
        %v1426 = vpop.f32.mrf.mxu0
        %v1427 = vadd.f32 %v1013, %v1426
        %1428 = vmatprep.mubr.bf16.mxu0 0
        %1429 = vmatmul.mubr.bf16.gmra.mxu0 %v935
        %v1430 = vpop.f32.mrf.mxu0
        %v1431 = vadd.f32 %v1009, %v1430
        %v1432 = vpop.f32.mrf.mxu0
        %v1433 = vadd.f32 %v1013, %v1432
        %v1434 = vpop.f32.mrf.mxu0
        %v1435 = vadd.f32 %v1009, %v1434
        %v1436 = vpop.f32.mrf.mxu0
        %v1437 = vadd.f32 %v1013, %v1436
        %1438 = vmatprep.mubr.bf16.mxu0 0
        %1439 = vmatmul.mubr.bf16.gmra.mxu0 %v936
        %v1440 = vpop.f32.mrf.mxu0
        %v1441 = vadd.f32 %v1009, %v1440
        %v1442 = vpop.f32.mrf.mxu0
        %v1443 = vadd.f32 %v1013, %v1442
        %v1444 = vpop.f32.mrf.mxu0
        %v1445 = vadd.f32 %v1009, %v1444
        %v1446 = vpop.f32.mrf.mxu0
        %v1447 = vadd.f32 %v1013, %v1446
        %1448 = vmatprep.mubr.bf16.mxu0 0
        %1449 = vmatmul.mubr.bf16.gmra.mxu0 %v937
        %v1450 = vpop.f32.mrf.mxu0
        %v1451 = vadd.f32 %v1009, %v1450
        %v1452 = vpop.f32.mrf.mxu0
        %v1453 = vadd.f32 %v1013, %v1452
        %v1454 = vpop.f32.mrf.mxu0
        %v1455 = vadd.f32 %v1009, %v1454
        %v1456 = vpop.f32.mrf.mxu0
        %v1457 = vadd.f32 %v1013, %v1456
        %1458 = vmatprep.mubr.bf16.mxu0 0
        %1459 = vmatmul.mubr.bf16.gmra.mxu0 %v938
        %v1460 = vpop.f32.mrf.mxu0
        %v1461 = vadd.f32 %v1009, %v1460
        %v1462 = vpop.f32.mrf.mxu0
        %v1463 = vadd.f32 %v1013, %v1462
        %v1464 = vpop.f32.mrf.mxu0
        %v1465 = vadd.f32 %v1009, %v1464
        %v1466 = vpop.f32.mrf.mxu0
        %v1467 = vadd.f32 %v1013, %v1466
        %1468 = vmatprep.mubr.bf16.mxu0 0
        %1469 = vmatmul.mubr.bf16.gmra.mxu0 %v939
        %v1470 = vpop.f32.mrf.mxu0
        %v1471 = vadd.f32 %v1009, %v1470
        %v1472 = vpop.f32.mrf.mxu0
        %v1473 = vadd.f32 %v1013, %v1472
        %v1474 = vpop.f32.mrf.mxu0
        %v1475 = vadd.f32 %v1009, %v1474
        %v1476 = vpop.f32.mrf.mxu0
        %v1477 = vadd.f32 %v1013, %v1476
        %1478 = vdwg.mxu0
        %1479 = vmatprep.subr.bf16.mxu0 %v1297
        %1480 = vmatpush1.bf16.msra.mxu0 %v1296
        %1481 = vmatprep.subr.bf16.mxu0 %v1289
        %1482 = vmatpush1.bf16.msra.mxu0 %v1288
        %1483 = vmatprep.subr.bf16.mxu0 %v1281
        %1484 = vmatpush1.bf16.msra.mxu0 %v1280
        %1485 = vmatprep.subr.bf16.mxu0 %v1273
        %1486 = vmatpush1.bf16.msra.mxu0 %v1272
        %1487 = vmatprep.subr.bf16.mxu0 %v1265
        %1488 = vmatpush1.bf16.msra.mxu0 %v1264
        %1489 = vmatprep.subr.bf16.mxu0 %v1257
        %1490 = vmatpush1.bf16.msra.mxu0 %v1256
        %1491 = vmatprep.subr.bf16.mxu0 %v1249
        %1492 = vmatpush1.bf16.msra.mxu0 %v1248
        %1493 = vmatprep.subr.bf16.mxu0 %v1241
        %1494 = vmatpush1.bf16.msra.mxu0 %v1240
        %1495 = vmatprep.subr.bf16.mxu0 0
        %1496 = vmatpush2.bf16.msra.mxu0 0
        %1497 = vmatprep.subr.bf16.mxu0 0
        %1498 = vmatpush2.bf16.msra.mxu0 0
        %1499 = vmatprep.subr.bf16.mxu0 0
        %1500 = vmatpush2.bf16.msra.mxu0 0
        %1501 = vmatprep.subr.bf16.mxu0 0
        %1502 = vmatpush2.bf16.msra.mxu0 0
        %1503 = vmatprep.subr.bf16.mxu0 0
        %1504 = vmatpush2.bf16.msra.mxu0 0
        %1505 = vmatprep.subr.bf16.mxu0 0
        %1506 = vmatpush2.bf16.msra.mxu0 0
        %1507 = vmatprep.subr.bf16.mxu0 0
        %1508 = vmatpush2.bf16.msra.mxu0 0
        %1509 = vmatprep.subr.bf16.mxu0 0
        %1510 = vmatpush2.bf16.msra.mxu0 0
        %1511 = vmatprep.mubr.bf16.mxu0 0
        %1512 = vmatmul.mubr.bf16.gmra.mxu0 %v932
        %v1513 = vpop.f32.mrf.mxu0
        %v1514 = vadd.f32 %v1017, %v1513
        %v1515 = vpop.f32.mrf.mxu0
        %v1516 = vadd.f32 %v1021, %v1515
        %v1517 = vpop.f32.mrf.mxu0
        %v1518 = vadd.f32 %v1017, %v1517
        %v1519 = vpop.f32.mrf.mxu0
        %v1520 = vadd.f32 %v1021, %v1519
        %1521 = vmatprep.mubr.bf16.mxu0 0
        %1522 = vmatmul.mubr.bf16.gmra.mxu0 %v933
        %v1523 = vpop.f32.mrf.mxu0
        %v1524 = vadd.f32 %v1017, %v1523
        %v1525 = vpop.f32.mrf.mxu0
        %v1526 = vadd.f32 %v1021, %v1525
        %v1527 = vpop.f32.mrf.mxu0
        %v1528 = vadd.f32 %v1017, %v1527
        %v1529 = vpop.f32.mrf.mxu0
        %v1530 = vadd.f32 %v1021, %v1529
        %1531 = vmatprep.mubr.bf16.mxu0 0
        %1532 = vmatmul.mubr.bf16.gmra.mxu0 %v934
        %v1533 = vpop.f32.mrf.mxu0
        %v1534 = vadd.f32 %v1017, %v1533
        %v1535 = vpop.f32.mrf.mxu0
        %v1536 = vadd.f32 %v1021, %v1535
        %v1537 = vpop.f32.mrf.mxu0
        %v1538 = vadd.f32 %v1017, %v1537
        %v1539 = vpop.f32.mrf.mxu0
        %v1540 = vadd.f32 %v1021, %v1539
        %1541 = vmatprep.mubr.bf16.mxu0 0
        %1542 = vmatmul.mubr.bf16.gmra.mxu0 %v935
        %v1543 = vpop.f32.mrf.mxu0
        %v1544 = vadd.f32 %v1017, %v1543
        %v1545 = vpop.f32.mrf.mxu0
        %v1546 = vadd.f32 %v1021, %v1545
        %v1547 = vpop.f32.mrf.mxu0
        %v1548 = vadd.f32 %v1017, %v1547
        %v1549 = vpop.f32.mrf.mxu0
        %v1550 = vadd.f32 %v1021, %v1549
        %1551 = vmatprep.mubr.bf16.mxu0 0
        %1552 = vmatmul.mubr.bf16.gmra.mxu0 %v936
        %v1553 = vpop.f32.mrf.mxu0
        %v1554 = vadd.f32 %v1017, %v1553
        %v1555 = vpop.f32.mrf.mxu0
        %v1556 = vadd.f32 %v1021, %v1555
        %v1557 = vpop.f32.mrf.mxu0
        %v1558 = vadd.f32 %v1017, %v1557
        %v1559 = vpop.f32.mrf.mxu0
        %v1560 = vadd.f32 %v1021, %v1559
        %1561 = vmatprep.mubr.bf16.mxu0 0
        %1562 = vmatmul.mubr.bf16.gmra.mxu0 %v937
        %v1563 = vpop.f32.mrf.mxu0
        %v1564 = vadd.f32 %v1017, %v1563
        %v1565 = vpop.f32.mrf.mxu0
        %v1566 = vadd.f32 %v1021, %v1565
        %v1567 = vpop.f32.mrf.mxu0
        %v1568 = vadd.f32 %v1017, %v1567
        %v1569 = vpop.f32.mrf.mxu0
        %v1570 = vadd.f32 %v1021, %v1569
        %1571 = vmatprep.mubr.bf16.mxu0 0
        %1572 = vmatmul.mubr.bf16.gmra.mxu0 %v938
        %v1573 = vpop.f32.mrf.mxu0
        %v1574 = vadd.f32 %v1017, %v1573
        %v1575 = vpop.f32.mrf.mxu0
        %v1576 = vadd.f32 %v1021, %v1575
        %v1577 = vpop.f32.mrf.mxu0
        %v1578 = vadd.f32 %v1017, %v1577
        %v1579 = vpop.f32.mrf.mxu0
        %v1580 = vadd.f32 %v1021, %v1579
        %1581 = vmatprep.mubr.bf16.mxu0 0
        %1582 = vmatmul.mubr.bf16.gmra.mxu0 %v939
        %v1583 = vpop.f32.mrf.mxu0
        %v1584 = vadd.f32 %v1017, %v1583
        %v1585 = vpop.f32.mrf.mxu0
        %v1586 = vadd.f32 %v1021, %v1585
        %v1587 = vpop.f32.mrf.mxu0
        %v1588 = vadd.f32 %v1017, %v1587
        %v1589 = vpop.f32.mrf.mxu0
        %v1590 = vadd.f32 %v1021, %v1589
        %1591 = vdwg.mxu0
        %1592 = vmatprep.subr.bf16.mxu0 %v1299
        %1593 = vmatpush1.bf16.msra.mxu0 %v1298
        %1594 = vmatprep.subr.bf16.mxu0 %v1291
        %1595 = vmatpush1.bf16.msra.mxu0 %v1290
        %1596 = vmatprep.subr.bf16.mxu0 %v1283
        %1597 = vmatpush1.bf16.msra.mxu0 %v1282
        %1598 = vmatprep.subr.bf16.mxu0 %v1275
        %1599 = vmatpush1.bf16.msra.mxu0 %v1274
        %1600 = vmatprep.subr.bf16.mxu0 %v1267
        %1601 = vmatpush1.bf16.msra.mxu0 %v1266
        %1602 = vmatprep.subr.bf16.mxu0 %v1259
        %1603 = vmatpush1.bf16.msra.mxu0 %v1258
        %1604 = vmatprep.subr.bf16.mxu0 %v1251
        %1605 = vmatpush1.bf16.msra.mxu0 %v1250
        %1606 = vmatprep.subr.bf16.mxu0 %v1243
        %1607 = vmatpush1.bf16.msra.mxu0 %v1242
        %1608 = vmatprep.subr.bf16.mxu0 0
        %1609 = vmatpush2.bf16.msra.mxu0 0
        %1610 = vmatprep.subr.bf16.mxu0 0
        %1611 = vmatpush2.bf16.msra.mxu0 0
        %1612 = vmatprep.subr.bf16.mxu0 0
        %1613 = vmatpush2.bf16.msra.mxu0 0
        %1614 = vmatprep.subr.bf16.mxu0 0
        %1615 = vmatpush2.bf16.msra.mxu0 0
        %1616 = vmatprep.subr.bf16.mxu0 0
        %1617 = vmatpush2.bf16.msra.mxu0 0
        %1618 = vmatprep.subr.bf16.mxu0 0
        %1619 = vmatpush2.bf16.msra.mxu0 0
        %1620 = vmatprep.subr.bf16.mxu0 0
        %1621 = vmatpush2.bf16.msra.mxu0 0
        %1622 = vmatprep.subr.bf16.mxu0 0
        %1623 = vmatpush2.bf16.msra.mxu0 0
        %1624 = vmatprep.mubr.bf16.mxu0 0
        %1625 = vmatmul.mubr.bf16.gmra.mxu0 %v932
        %v1626 = vpop.f32.mrf.mxu0
        %v1627 = vadd.f32 %v1025, %v1626
        %v1628 = vpop.f32.mrf.mxu0
        %v1629 = vadd.f32 %v1029, %v1628
        %v1630 = vpop.f32.mrf.mxu0
        %v1631 = vadd.f32 %v1025, %v1630
        %v1632 = vpop.f32.mrf.mxu0
        %v1633 = vadd.f32 %v1029, %v1632
        %1634 = vmatprep.mubr.bf16.mxu0 0
        %1635 = vmatmul.mubr.bf16.gmra.mxu0 %v933
        %v1636 = vpop.f32.mrf.mxu0
        %v1637 = vadd.f32 %v1025, %v1636
        %v1638 = vpop.f32.mrf.mxu0
        %v1639 = vadd.f32 %v1029, %v1638
        %v1640 = vpop.f32.mrf.mxu0
        %v1641 = vadd.f32 %v1025, %v1640
        %v1642 = vpop.f32.mrf.mxu0
        %v1643 = vadd.f32 %v1029, %v1642
        %1644 = vmatprep.mubr.bf16.mxu0 0
        %1645 = vmatmul.mubr.bf16.gmra.mxu0 %v934
        %v1646 = vpop.f32.mrf.mxu0
        %v1647 = vadd.f32 %v1025, %v1646
        %v1648 = vpop.f32.mrf.mxu0
        %v1649 = vadd.f32 %v1029, %v1648
        %v1650 = vpop.f32.mrf.mxu0
        %v1651 = vadd.f32 %v1025, %v1650
        %v1652 = vpop.f32.mrf.mxu0
        %v1653 = vadd.f32 %v1029, %v1652
        %1654 = vmatprep.mubr.bf16.mxu0 0
        %1655 = vmatmul.mubr.bf16.gmra.mxu0 %v935
        %v1656 = vpop.f32.mrf.mxu0
        %v1657 = vadd.f32 %v1025, %v1656
        %v1658 = vpop.f32.mrf.mxu0
        %v1659 = vadd.f32 %v1029, %v1658
        %v1660 = vpop.f32.mrf.mxu0
        %v1661 = vadd.f32 %v1025, %v1660
        %v1662 = vpop.f32.mrf.mxu0
        %v1663 = vadd.f32 %v1029, %v1662
        %1664 = vmatprep.mubr.bf16.mxu0 0
        %1665 = vmatmul.mubr.bf16.gmra.mxu0 %v936
        %v1666 = vpop.f32.mrf.mxu0
        %v1667 = vadd.f32 %v1025, %v1666
        %v1668 = vpop.f32.mrf.mxu0
        %v1669 = vadd.f32 %v1029, %v1668
        %v1670 = vpop.f32.mrf.mxu0
        %v1671 = vadd.f32 %v1025, %v1670
        %v1672 = vpop.f32.mrf.mxu0
        %v1673 = vadd.f32 %v1029, %v1672
        %1674 = vmatprep.mubr.bf16.mxu0 0
        %1675 = vmatmul.mubr.bf16.gmra.mxu0 %v937
        %v1676 = vpop.f32.mrf.mxu0
        %v1677 = vadd.f32 %v1025, %v1676
        %v1678 = vpop.f32.mrf.mxu0
        %v1679 = vadd.f32 %v1029, %v1678
        %v1680 = vpop.f32.mrf.mxu0
        %v1681 = vadd.f32 %v1025, %v1680
        %v1682 = vpop.f32.mrf.mxu0
        %v1683 = vadd.f32 %v1029, %v1682
        %1684 = vmatprep.mubr.bf16.mxu0 0
        %1685 = vmatmul.mubr.bf16.gmra.mxu0 %v938
        %v1686 = vpop.f32.mrf.mxu0
        %v1687 = vadd.f32 %v1025, %v1686
        %v1688 = vpop.f32.mrf.mxu0
        %v1689 = vadd.f32 %v1029, %v1688
        %v1690 = vpop.f32.mrf.mxu0
        %v1691 = vadd.f32 %v1025, %v1690
        %v1692 = vpop.f32.mrf.mxu0
        %v1693 = vadd.f32 %v1029, %v1692
        %1694 = vmatprep.mubr.bf16.mxu0 0
        %1695 = vmatmul.mubr.bf16.gmra.mxu0 %v939
        %v1696 = vpop.f32.mrf.mxu0
        %v1697 = vadd.f32 %v1025, %v1696
        %v1698 = vpop.f32.mrf.mxu0
        %v1699 = vadd.f32 %v1029, %v1698
        %v1700 = vpop.f32.mrf.mxu0
        %v1701 = vadd.f32 %v1025, %v1700
        %v1702 = vpop.f32.mrf.mxu0
        %v1703 = vadd.f32 %v1029, %v1702
        %1704 = vdwg.mxu0
        %1705 = vmatprep.subr.bf16.mxu0 %v1301
        %1706 = vmatpush1.bf16.msra.mxu0 %v1300
        %1707 = vmatprep.subr.bf16.mxu0 %v1293
        %1708 = vmatpush1.bf16.msra.mxu0 %v1292
        %1709 = vmatprep.subr.bf16.mxu0 %v1285
        %1710 = vmatpush1.bf16.msra.mxu0 %v1284
        %1711 = vmatprep.subr.bf16.mxu0 %v1277
        %1712 = vmatpush1.bf16.msra.mxu0 %v1276
        %1713 = vmatprep.subr.bf16.mxu0 %v1269
        %1714 = vmatpush1.bf16.msra.mxu0 %v1268
        %1715 = vmatprep.subr.bf16.mxu0 %v1261
        %1716 = vmatpush1.bf16.msra.mxu0 %v1260
        %1717 = vmatprep.subr.bf16.mxu0 %v1253
        %1718 = vmatpush1.bf16.msra.mxu0 %v1252
        %1719 = vmatprep.subr.bf16.mxu0 %v1245
        %1720 = vmatpush1.bf16.msra.mxu0 %v1244
        %1721 = vmatprep.subr.bf16.mxu0 0
        %1722 = vmatpush2.bf16.msra.mxu0 0
        %1723 = vmatprep.subr.bf16.mxu0 0
        %1724 = vmatpush2.bf16.msra.mxu0 0
        %1725 = vmatprep.subr.bf16.mxu0 0
        %1726 = vmatpush2.bf16.msra.mxu0 0
        %1727 = vmatprep.subr.bf16.mxu0 0
        %1728 = vmatpush2.bf16.msra.mxu0 0
        %1729 = vmatprep.subr.bf16.mxu0 0
        %1730 = vmatpush2.bf16.msra.mxu0 0
        %1731 = vmatprep.subr.bf16.mxu0 0
        %1732 = vmatpush2.bf16.msra.mxu0 0
        %1733 = vmatprep.subr.bf16.mxu0 0
        %1734 = vmatpush2.bf16.msra.mxu0 0
        %1735 = vmatprep.subr.bf16.mxu0 0
        %1736 = vmatpush2.bf16.msra.mxu0 0
        %1737 = vmatprep.mubr.bf16.mxu0 0
        %1738 = vmatmul.mubr.bf16.gmra.mxu0 %v932
        %v1739 = vpop.f32.mrf.mxu0
        %v1740 = vadd.f32 %v1033, %v1739
        %v1741 = vpop.f32.mrf.mxu0
        %v1742 = vadd.f32 %v1037, %v1741
        %v1743 = vpop.f32.mrf.mxu0
        %v1744 = vadd.f32 %v1033, %v1743
        %v1745 = vpop.f32.mrf.mxu0
        %v1746 = vadd.f32 %v1037, %v1745
        %1747 = vmatprep.mubr.bf16.mxu0 0
        %1748 = vmatmul.mubr.bf16.gmra.mxu0 %v933
        %v1749 = vpop.f32.mrf.mxu0
        %v1750 = vadd.f32 %v1033, %v1749
        %v1751 = vpop.f32.mrf.mxu0
        %v1752 = vadd.f32 %v1037, %v1751
        %v1753 = vpop.f32.mrf.mxu0
        %v1754 = vadd.f32 %v1033, %v1753
        %v1755 = vpop.f32.mrf.mxu0
        %v1756 = vadd.f32 %v1037, %v1755
        %1757 = vmatprep.mubr.bf16.mxu0 0
        %1758 = vmatmul.mubr.bf16.gmra.mxu0 %v934
        %v1759 = vpop.f32.mrf.mxu0
        %v1760 = vadd.f32 %v1033, %v1759
        %v1761 = vpop.f32.mrf.mxu0
        %v1762 = vadd.f32 %v1037, %v1761
        %v1763 = vpop.f32.mrf.mxu0
        %v1764 = vadd.f32 %v1033, %v1763
        %v1765 = vpop.f32.mrf.mxu0
        %v1766 = vadd.f32 %v1037, %v1765
        %1767 = vmatprep.mubr.bf16.mxu0 0
        %1768 = vmatmul.mubr.bf16.gmra.mxu0 %v935
        %v1769 = vpop.f32.mrf.mxu0
        %v1770 = vadd.f32 %v1033, %v1769
        %v1771 = vpop.f32.mrf.mxu0
        %v1772 = vadd.f32 %v1037, %v1771
        %v1773 = vpop.f32.mrf.mxu0
        %v1774 = vadd.f32 %v1033, %v1773
        %v1775 = vpop.f32.mrf.mxu0
        %v1776 = vadd.f32 %v1037, %v1775
        %1777 = vmatprep.mubr.bf16.mxu0 0
        %1778 = vmatmul.mubr.bf16.gmra.mxu0 %v936
        %v1779 = vpop.f32.mrf.mxu0
        %v1780 = vadd.f32 %v1033, %v1779
        %v1781 = vpop.f32.mrf.mxu0
        %v1782 = vadd.f32 %v1037, %v1781
        %v1783 = vpop.f32.mrf.mxu0
        %v1784 = vadd.f32 %v1033, %v1783
        %v1785 = vpop.f32.mrf.mxu0
        %v1786 = vadd.f32 %v1037, %v1785
        %1787 = vmatprep.mubr.bf16.mxu0 0
        %1788 = vmatmul.mubr.bf16.gmra.mxu0 %v937
        %v1789 = vpop.f32.mrf.mxu0
        %v1790 = vadd.f32 %v1033, %v1789
        %v1791 = vpop.f32.mrf.mxu0
        %v1792 = vadd.f32 %v1037, %v1791
        %v1793 = vpop.f32.mrf.mxu0
        %v1794 = vadd.f32 %v1033, %v1793
        %v1795 = vpop.f32.mrf.mxu0
        %v1796 = vadd.f32 %v1037, %v1795
        %1797 = vmatprep.mubr.bf16.mxu0 0
        %1798 = vmatmul.mubr.bf16.gmra.mxu0 %v938
        %v1799 = vpop.f32.mrf.mxu0
        %v1800 = vadd.f32 %v1033, %v1799
        %v1801 = vpop.f32.mrf.mxu0
        %v1802 = vadd.f32 %v1037, %v1801
        %v1803 = vpop.f32.mrf.mxu0
        %v1804 = vadd.f32 %v1033, %v1803
        %v1805 = vpop.f32.mrf.mxu0
        %v1806 = vadd.f32 %v1037, %v1805
        %1807 = vmatprep.mubr.bf16.mxu0 0
        %1808 = vmatmul.mubr.bf16.gmra.mxu0 %v939
        %v1809 = vpop.f32.mrf.mxu0
        %v1810 = vadd.f32 %v1033, %v1809
        %v1811 = vpop.f32.mrf.mxu0
        %v1812 = vadd.f32 %v1037, %v1811
        %v1813 = vpop.f32.mrf.mxu0
        %v1814 = vadd.f32 %v1033, %v1813
        %v1815 = vpop.f32.mrf.mxu0
        %v1816 = vadd.f32 %v1037, %v1815
        %1817 = vdwg.mxu0
        %v1818 = vtanh.pop %v1401
        %v1819 = vtanh.pop %v1403
        %v1820 = vtanh.pop %v1514
        %v1821 = vtanh.pop %v1516
        %v1822 = vtanh.pop %v1405
        %v1823 = vtanh.pop %v1407
        %v1824 = vtanh.pop %v1518
        %v1825 = vtanh.pop %v1520
        %v1826 = vtanh.pop %v1411
        %v1827 = vtanh.pop %v1413
        %v1828 = vtanh.pop %v1524
        %v1829 = vtanh.pop %v1526
        %v1830 = vtanh.pop %v1415
        %v1831 = vtanh.pop %v1417
        %v1832 = vtanh.pop %v1528
        %v1833 = vtanh.pop %v1530
        %v1834 = vtanh.pop %v1421
        %v1835 = vtanh.pop %v1423
        %v1836 = vtanh.pop %v1534
        %v1837 = vtanh.pop %v1536
        %v1838 = vtanh.pop %v1425
        %v1839 = vtanh.pop %v1427
        %v1840 = vtanh.pop %v1538
        %v1841 = vtanh.pop %v1540
        %v1842 = vtanh.pop %v1431
        %v1843 = vtanh.pop %v1433
        %v1844 = vtanh.pop %v1544
        %v1845 = vtanh.pop %v1546
        %v1846 = vtanh.pop %v1435
        %v1847 = vtanh.pop %v1437
        %v1848 = vtanh.pop %v1548
        %v1849 = vtanh.pop %v1550
        %v1850 = vtanh.pop %v1441
        %v1851 = vtanh.pop %v1443
        %v1852 = vtanh.pop %v1554
        %v1853 = vtanh.pop %v1556
        %v1854 = vtanh.pop %v1445
        %v1855 = vtanh.pop %v1447
        %v1856 = vtanh.pop %v1558
        %v1857 = vtanh.pop %v1560
        %v1858 = vtanh.pop %v1451
        %v1859 = vtanh.pop %v1453
        %v1860 = vtanh.pop %v1564
        %v1861 = vtanh.pop %v1566
        %v1862 = vtanh.pop %v1455
        %v1863 = vtanh.pop %v1457
        %v1864 = vtanh.pop %v1568
        %v1865 = vtanh.pop %v1570
        %v1866 = vtanh.pop %v1461
        %v1867 = vtanh.pop %v1463
        %v1868 = vtanh.pop %v1574
        %v1869 = vtanh.pop %v1576
        %v1870 = vtanh.pop %v1465
        %v1871 = vtanh.pop %v1467
        %v1872 = vtanh.pop %v1578
        %v1873 = vtanh.pop %v1580
        %v1874 = vtanh.pop %v1471
        %v1875 = vtanh.pop %v1473
        %v1876 = vtanh.pop %v1584
        %v1877 = vtanh.pop %v1586
        %v1878 = vtanh.pop %v1475
        %v1879 = vtanh.pop %v1477
        %v1880 = vtanh.pop %v1588
        %v1881 = vtanh.pop %v1590
        %v1882 = vxor.u32 %v1627, 2147483648
        %v1883 = vxor.u32 %v1629, 2147483648
        %v1884 = vxor.u32 %v1740, 2147483648
        %v1885 = vxor.u32 %v1742, 2147483648
        %v1886 = vxor.u32 %v1631, 2147483648
        %v1887 = vxor.u32 %v1633, 2147483648
        %v1888 = vxor.u32 %v1744, 2147483648
        %v1889 = vxor.u32 %v1746, 2147483648
        %v1890 = vxor.u32 %v1637, 2147483648
        %v1891 = vxor.u32 %v1639, 2147483648
        %v1892 = vxor.u32 %v1750, 2147483648
        %v1893 = vxor.u32 %v1752, 2147483648
        %v1894 = vxor.u32 %v1641, 2147483648
        %v1895 = vxor.u32 %v1643, 2147483648
        %v1896 = vxor.u32 %v1754, 2147483648
        %v1897 = vxor.u32 %v1756, 2147483648
        %v1898 = vxor.u32 %v1647, 2147483648
        %v1899 = vxor.u32 %v1649, 2147483648
        %v1900 = vxor.u32 %v1760, 2147483648
        %v1901 = vxor.u32 %v1762, 2147483648
        %v1902 = vxor.u32 %v1651, 2147483648
        %v1903 = vxor.u32 %v1653, 2147483648
        %v1904 = vxor.u32 %v1764, 2147483648
        %v1905 = vxor.u32 %v1766, 2147483648
        %v1906 = vxor.u32 %v1657, 2147483648
        %v1907 = vxor.u32 %v1659, 2147483648
        %v1908 = vxor.u32 %v1770, 2147483648
        %v1909 = vxor.u32 %v1772, 2147483648
        %v1910 = vxor.u32 %v1661, 2147483648
        %v1911 = vxor.u32 %v1663, 2147483648
        %v1912 = vxor.u32 %v1774, 2147483648
        %v1913 = vxor.u32 %v1776, 2147483648
        %v1914 = vxor.u32 %v1667, 2147483648
        %v1915 = vxor.u32 %v1669, 2147483648
        %v1916 = vxor.u32 %v1780, 2147483648
        %v1917 = vxor.u32 %v1782, 2147483648
        %v1918 = vxor.u32 %v1671, 2147483648
        %v1919 = vxor.u32 %v1673, 2147483648
        %v1920 = vxor.u32 %v1784, 2147483648
        %v1921 = vxor.u32 %v1786, 2147483648
        %v1922 = vxor.u32 %v1677, 2147483648
        %v1923 = vxor.u32 %v1679, 2147483648
        %v1924 = vxor.u32 %v1790, 2147483648
        %v1925 = vxor.u32 %v1792, 2147483648
        %v1926 = vxor.u32 %v1681, 2147483648
        %v1927 = vxor.u32 %v1683, 2147483648
        %v1928 = vxor.u32 %v1794, 2147483648
        %v1929 = vxor.u32 %v1796, 2147483648
        %v1930 = vxor.u32 %v1687, 2147483648
        %v1931 = vxor.u32 %v1689, 2147483648
        %v1932 = vxor.u32 %v1800, 2147483648
        %v1933 = vxor.u32 %v1802, 2147483648
        %v1934 = vxor.u32 %v1691, 2147483648
        %v1935 = vxor.u32 %v1693, 2147483648
        %v1936 = vxor.u32 %v1804, 2147483648
        %v1937 = vxor.u32 %v1806, 2147483648
        %v1938 = vxor.u32 %v1697, 2147483648
        %v1939 = vxor.u32 %v1699, 2147483648
        %v1940 = vxor.u32 %v1810, 2147483648
        %v1941 = vxor.u32 %v1812, 2147483648
        %v1942 = vxor.u32 %v1701, 2147483648
        %v1943 = vxor.u32 %v1703, 2147483648
        %v1944 = vxor.u32 %v1814, 2147483648
        %v1945 = vxor.u32 %v1816, 2147483648
        %v1946 = vmul.f32 %v1882, 1.442695
        %v1947 = vpow.pop %v1946
        %v1948 = vmul.f32 %v1883, 1.442695
        %v1949 = vpow.pop %v1948
        %v1950 = vmul.f32 %v1884, 1.442695
        %v1951 = vpow.pop %v1950
        %v1952 = vmul.f32 %v1885, 1.442695
        %v1953 = vpow.pop %v1952
        %v1954 = vmul.f32 %v1886, 1.442695
        %v1955 = vpow.pop %v1954
        %v1956 = vmul.f32 %v1887, 1.442695
        %v1957 = vpow.pop %v1956
        %v1958 = vmul.f32 %v1888, 1.442695
        %v1959 = vpow.pop %v1958
        %v1960 = vmul.f32 %v1889, 1.442695
        %v1961 = vpow.pop %v1960
        %v1962 = vmul.f32 %v1890, 1.442695
        %v1963 = vpow.pop %v1962
        %v1964 = vmul.f32 %v1891, 1.442695
        %v1965 = vpow.pop %v1964
        %v1966 = vmul.f32 %v1892, 1.442695
        %v1967 = vpow.pop %v1966
        %v1968 = vmul.f32 %v1893, 1.442695
        %v1969 = vpow.pop %v1968
        %v1970 = vmul.f32 %v1894, 1.442695
        %v1971 = vpow.pop %v1970
        %v1972 = vmul.f32 %v1895, 1.442695
        %v1973 = vpow.pop %v1972
        %v1974 = vmul.f32 %v1896, 1.442695
        %v1975 = vpow.pop %v1974
        %v1976 = vmul.f32 %v1897, 1.442695
        %v1977 = vpow.pop %v1976
        %v1978 = vmul.f32 %v1898, 1.442695
        %v1979 = vpow.pop %v1978
        %v1980 = vmul.f32 %v1899, 1.442695
        %v1981 = vpow.pop %v1980
        %v1982 = vmul.f32 %v1900, 1.442695
        %v1983 = vpow.pop %v1982
        %v1984 = vmul.f32 %v1901, 1.442695
        %v1985 = vpow.pop %v1984
        %v1986 = vmul.f32 %v1902, 1.442695
        %v1987 = vpow.pop %v1986
        %v1988 = vmul.f32 %v1903, 1.442695
        %v1989 = vpow.pop %v1988
        %v1990 = vmul.f32 %v1904, 1.442695
        %v1991 = vpow.pop %v1990
        %v1992 = vmul.f32 %v1905, 1.442695
        %v1993 = vpow.pop %v1992
        %v1994 = vmul.f32 %v1906, 1.442695
        %v1995 = vpow.pop %v1994
        %v1996 = vmul.f32 %v1907, 1.442695
        %v1997 = vpow.pop %v1996
        %v1998 = vmul.f32 %v1908, 1.442695
        %v1999 = vpow.pop %v1998
        %v2000 = vmul.f32 %v1909, 1.442695
        %v2001 = vpow.pop %v2000
        %v2002 = vmul.f32 %v1910, 1.442695
        %v2003 = vpow.pop %v2002
        %v2004 = vmul.f32 %v1911, 1.442695
        %v2005 = vpow.pop %v2004
        %v2006 = vmul.f32 %v1912, 1.442695
        %v2007 = vpow.pop %v2006
        %v2008 = vmul.f32 %v1913, 1.442695
        %v2009 = vpow.pop %v2008
        %v2010 = vmul.f32 %v1914, 1.442695
        %v2011 = vpow.pop %v2010
        %v2012 = vmul.f32 %v1915, 1.442695
        %v2013 = vpow.pop %v2012
        %v2014 = vmul.f32 %v1916, 1.442695
        %v2015 = vpow.pop %v2014
        %v2016 = vmul.f32 %v1917, 1.442695
        %v2017 = vpow.pop %v2016
        %v2018 = vmul.f32 %v1918, 1.442695
        %v2019 = vpow.pop %v2018
        %v2020 = vmul.f32 %v1919, 1.442695
        %v2021 = vpow.pop %v2020
        %v2022 = vmul.f32 %v1920, 1.442695
        %v2023 = vpow.pop %v2022
        %v2024 = vmul.f32 %v1921, 1.442695
        %v2025 = vpow.pop %v2024
        %v2026 = vmul.f32 %v1922, 1.442695
        %v2027 = vpow.pop %v2026
        %v2028 = vmul.f32 %v1923, 1.442695
        %v2029 = vpow.pop %v2028
        %v2030 = vmul.f32 %v1924, 1.442695
        %v2031 = vpow.pop %v2030
        %v2032 = vmul.f32 %v1925, 1.442695
        %v2033 = vpow.pop %v2032
        %v2034 = vmul.f32 %v1926, 1.442695
        %v2035 = vpow.pop %v2034
        %v2036 = vmul.f32 %v1927, 1.442695
        %v2037 = vpow.pop %v2036
        %v2038 = vmul.f32 %v1928, 1.442695
        %v2039 = vpow.pop %v2038
        %v2040 = vmul.f32 %v1929, 1.442695
        %v2041 = vpow.pop %v2040
        %v2042 = vmul.f32 %v1930, 1.442695
        %v2043 = vpow.pop %v2042
        %v2044 = vmul.f32 %v1931, 1.442695
        %v2045 = vpow.pop %v2044
        %v2046 = vmul.f32 %v1932, 1.442695
        %v2047 = vpow.pop %v2046
        %v2048 = vmul.f32 %v1933, 1.442695
        %v2049 = vpow.pop %v2048
        %v2050 = vmul.f32 %v1934, 1.442695
        %v2051 = vpow.pop %v2050
        %v2052 = vmul.f32 %v1935, 1.442695
        %v2053 = vpow.pop %v2052
        %v2054 = vmul.f32 %v1936, 1.442695
        %v2055 = vpow.pop %v2054
        %v2056 = vmul.f32 %v1937, 1.442695
        %v2057 = vpow.pop %v2056
        %v2058 = vmul.f32 %v1938, 1.442695
        %v2059 = vpow.pop %v2058
        %v2060 = vmul.f32 %v1939, 1.442695
        %v2061 = vpow.pop %v2060
        %v2062 = vmul.f32 %v1940, 1.442695
        %v2063 = vpow.pop %v2062
        %v2064 = vmul.f32 %v1941, 1.442695
        %v2065 = vpow.pop %v2064
        %v2066 = vmul.f32 %v1942, 1.442695
        %v2067 = vpow.pop %v2066
        %v2068 = vmul.f32 %v1943, 1.442695
        %v2069 = vpow.pop %v2068
        %v2070 = vmul.f32 %v1944, 1.442695
        %v2071 = vpow.pop %v2070
        %v2072 = vmul.f32 %v1945, 1.442695
        %v2073 = vpow.pop %v2072
        %v2074 = vadd.f32 %v1947, 1.0
        %v2075 = vadd.f32 %v1949, 1.0
        %v2076 = vadd.f32 %v1951, 1.0
        %v2077 = vadd.f32 %v1953, 1.0
        %v2078 = vadd.f32 %v1955, 1.0
        %v2079 = vadd.f32 %v1957, 1.0
        %v2080 = vadd.f32 %v1959, 1.0
        %v2081 = vadd.f32 %v1961, 1.0
        %v2082 = vadd.f32 %v1963, 1.0
        %v2083 = vadd.f32 %v1965, 1.0
        %v2084 = vadd.f32 %v1967, 1.0
        %v2085 = vadd.f32 %v1969, 1.0
        %v2086 = vadd.f32 %v1971, 1.0
        %v2087 = vadd.f32 %v1973, 1.0
        %v2088 = vadd.f32 %v1975, 1.0
        %v2089 = vadd.f32 %v1977, 1.0
        %v2090 = vadd.f32 %v1979, 1.0
        %v2091 = vadd.f32 %v1981, 1.0
        %v2092 = vadd.f32 %v1983, 1.0
        %v2093 = vadd.f32 %v1985, 1.0
        %v2094 = vadd.f32 %v1987, 1.0
        %v2095 = vadd.f32 %v1989, 1.0
        %v2096 = vadd.f32 %v1991, 1.0
        %v2097 = vadd.f32 %v1993, 1.0
        %v2098 = vadd.f32 %v1995, 1.0
        %v2099 = vadd.f32 %v1997, 1.0
        %v2100 = vadd.f32 %v1999, 1.0
        %v2101 = vadd.f32 %v2001, 1.0
        %v2102 = vadd.f32 %v2003, 1.0
        %v2103 = vadd.f32 %v2005, 1.0
        %v2104 = vadd.f32 %v2007, 1.0
        %v2105 = vadd.f32 %v2009, 1.0
        %v2106 = vadd.f32 %v2011, 1.0
        %v2107 = vadd.f32 %v2013, 1.0
        %v2108 = vadd.f32 %v2015, 1.0
        %v2109 = vadd.f32 %v2017, 1.0
        %v2110 = vadd.f32 %v2019, 1.0
        %v2111 = vadd.f32 %v2021, 1.0
        %v2112 = vadd.f32 %v2023, 1.0
        %v2113 = vadd.f32 %v2025, 1.0
        %v2114 = vadd.f32 %v2027, 1.0
        %v2115 = vadd.f32 %v2029, 1.0
        %v2116 = vadd.f32 %v2031, 1.0
        %v2117 = vadd.f32 %v2033, 1.0
        %v2118 = vadd.f32 %v2035, 1.0
        %v2119 = vadd.f32 %v2037, 1.0
        %v2120 = vadd.f32 %v2039, 1.0
        %v2121 = vadd.f32 %v2041, 1.0
        %v2122 = vadd.f32 %v2043, 1.0
        %v2123 = vadd.f32 %v2045, 1.0
        %v2124 = vadd.f32 %v2047, 1.0
        %v2125 = vadd.f32 %v2049, 1.0
        %v2126 = vadd.f32 %v2051, 1.0
        %v2127 = vadd.f32 %v2053, 1.0
        %v2128 = vadd.f32 %v2055, 1.0
        %v2129 = vadd.f32 %v2057, 1.0
        %v2130 = vadd.f32 %v2059, 1.0
        %v2131 = vadd.f32 %v2061, 1.0
        %v2132 = vadd.f32 %v2063, 1.0
        %v2133 = vadd.f32 %v2065, 1.0
        %v2134 = vadd.f32 %v2067, 1.0
        %v2135 = vadd.f32 %v2069, 1.0
        %v2136 = vadd.f32 %v2071, 1.0
        %v2137 = vadd.f32 %v2073, 1.0
        %v2138 = vrcp.pop %v2074
        %v2139 = vmul.f32 1.0, %v2138
        %v2140 = vrcp.pop %v2075
        %v2141 = vmul.f32 1.0, %v2140
        %v2142 = vrcp.pop %v2076
        %v2143 = vmul.f32 1.0, %v2142
        %v2144 = vrcp.pop %v2077
        %v2145 = vmul.f32 1.0, %v2144
        %v2146 = vrcp.pop %v2078
        %v2147 = vmul.f32 1.0, %v2146
        %v2148 = vrcp.pop %v2079
        %v2149 = vmul.f32 1.0, %v2148
        %v2150 = vrcp.pop %v2080
        %v2151 = vmul.f32 1.0, %v2150
        %v2152 = vrcp.pop %v2081
        %v2153 = vmul.f32 1.0, %v2152
        %v2154 = vrcp.pop %v2082
        %v2155 = vmul.f32 1.0, %v2154
        %v2156 = vrcp.pop %v2083
        %v2157 = vmul.f32 1.0, %v2156
        %v2158 = vrcp.pop %v2084
        %v2159 = vmul.f32 1.0, %v2158
        %v2160 = vrcp.pop %v2085
        %v2161 = vmul.f32 1.0, %v2160
        %v2162 = vrcp.pop %v2086
        %v2163 = vmul.f32 1.0, %v2162
        %v2164 = vrcp.pop %v2087
        %v2165 = vmul.f32 1.0, %v2164
        %v2166 = vrcp.pop %v2088
        %v2167 = vmul.f32 1.0, %v2166
        %v2168 = vrcp.pop %v2089
        %v2169 = vmul.f32 1.0, %v2168
        %v2170 = vrcp.pop %v2090
        %v2171 = vmul.f32 1.0, %v2170
        %v2172 = vrcp.pop %v2091
        %v2173 = vmul.f32 1.0, %v2172
        %v2174 = vrcp.pop %v2092
        %v2175 = vmul.f32 1.0, %v2174
        %v2176 = vrcp.pop %v2093
        %v2177 = vmul.f32 1.0, %v2176
        %v2178 = vrcp.pop %v2094
        %v2179 = vmul.f32 1.0, %v2178
        %v2180 = vrcp.pop %v2095
        %v2181 = vmul.f32 1.0, %v2180
        %v2182 = vrcp.pop %v2096
        %v2183 = vmul.f32 1.0, %v2182
        %v2184 = vrcp.pop %v2097
        %v2185 = vmul.f32 1.0, %v2184
        %v2186 = vrcp.pop %v2098
        %v2187 = vmul.f32 1.0, %v2186
        %v2188 = vrcp.pop %v2099
        %v2189 = vmul.f32 1.0, %v2188
        %v2190 = vrcp.pop %v2100
        %v2191 = vmul.f32 1.0, %v2190
        %v2192 = vrcp.pop %v2101
        %v2193 = vmul.f32 1.0, %v2192
        %v2194 = vrcp.pop %v2102
        %v2195 = vmul.f32 1.0, %v2194
        %v2196 = vrcp.pop %v2103
        %v2197 = vmul.f32 1.0, %v2196
        %v2198 = vrcp.pop %v2104
        %v2199 = vmul.f32 1.0, %v2198
        %v2200 = vrcp.pop %v2105
        %v2201 = vmul.f32 1.0, %v2200
        %v2202 = vrcp.pop %v2106
        %v2203 = vmul.f32 1.0, %v2202
        %v2204 = vrcp.pop %v2107
        %v2205 = vmul.f32 1.0, %v2204
        %v2206 = vrcp.pop %v2108
        %v2207 = vmul.f32 1.0, %v2206
        %v2208 = vrcp.pop %v2109
        %v2209 = vmul.f32 1.0, %v2208
        %v2210 = vrcp.pop %v2110
        %v2211 = vmul.f32 1.0, %v2210
        %v2212 = vrcp.pop %v2111
        %v2213 = vmul.f32 1.0, %v2212
        %v2214 = vrcp.pop %v2112
        %v2215 = vmul.f32 1.0, %v2214
        %v2216 = vrcp.pop %v2113
        %v2217 = vmul.f32 1.0, %v2216
        %v2218 = vrcp.pop %v2114
        %v2219 = vmul.f32 1.0, %v2218
        %v2220 = vrcp.pop %v2115
        %v2221 = vmul.f32 1.0, %v2220
        %v2222 = vrcp.pop %v2116
        %v2223 = vmul.f32 1.0, %v2222
        %v2224 = vrcp.pop %v2117
        %v2225 = vmul.f32 1.0, %v2224
        %v2226 = vrcp.pop %v2118
        %v2227 = vmul.f32 1.0, %v2226
        %v2228 = vrcp.pop %v2119
        %v2229 = vmul.f32 1.0, %v2228
        %v2230 = vrcp.pop %v2120
        %v2231 = vmul.f32 1.0, %v2230
        %v2232 = vrcp.pop %v2121
        %v2233 = vmul.f32 1.0, %v2232
        %v2234 = vrcp.pop %v2122
        %v2235 = vmul.f32 1.0, %v2234
        %v2236 = vrcp.pop %v2123
        %v2237 = vmul.f32 1.0, %v2236
        %v2238 = vrcp.pop %v2124
        %v2239 = vmul.f32 1.0, %v2238
        %v2240 = vrcp.pop %v2125
        %v2241 = vmul.f32 1.0, %v2240
        %v2242 = vrcp.pop %v2126
        %v2243 = vmul.f32 1.0, %v2242
        %v2244 = vrcp.pop %v2127
        %v2245 = vmul.f32 1.0, %v2244
        %v2246 = vrcp.pop %v2128
        %v2247 = vmul.f32 1.0, %v2246
        %v2248 = vrcp.pop %v2129
        %v2249 = vmul.f32 1.0, %v2248
        %v2250 = vrcp.pop %v2130
        %v2251 = vmul.f32 1.0, %v2250
        %v2252 = vrcp.pop %v2131
        %v2253 = vmul.f32 1.0, %v2252
        %v2254 = vrcp.pop %v2132
        %v2255 = vmul.f32 1.0, %v2254
        %v2256 = vrcp.pop %v2133
        %v2257 = vmul.f32 1.0, %v2256
        %v2258 = vrcp.pop %v2134
        %v2259 = vmul.f32 1.0, %v2258
        %v2260 = vrcp.pop %v2135
        %v2261 = vmul.f32 1.0, %v2260
        %v2262 = vrcp.pop %v2136
        %v2263 = vmul.f32 1.0, %v2262
        %v2264 = vrcp.pop %v2137
        %v2265 = vmul.f32 1.0, %v2264
        %v2266 = vmul.f32 %v1818, %v2139
        %v2267 = vmul.f32 %v1819, %v2141
        %v2268 = vmul.f32 %v1820, %v2143
        %v2269 = vmul.f32 %v1821, %v2145
        %v2270 = vmul.f32 %v1822, %v2147
        %v2271 = vmul.f32 %v1823, %v2149
        %v2272 = vmul.f32 %v1824, %v2151
        %v2273 = vmul.f32 %v1825, %v2153
        %v2274 = vmul.f32 %v1826, %v2155
        %v2275 = vmul.f32 %v1827, %v2157
        %v2276 = vmul.f32 %v1828, %v2159
        %v2277 = vmul.f32 %v1829, %v2161
        %v2278 = vmul.f32 %v1830, %v2163
        %v2279 = vmul.f32 %v1831, %v2165
        %v2280 = vmul.f32 %v1832, %v2167
        %v2281 = vmul.f32 %v1833, %v2169
        %v2282 = vmul.f32 %v1834, %v2171
        %v2283 = vmul.f32 %v1835, %v2173
        %v2284 = vmul.f32 %v1836, %v2175
        %v2285 = vmul.f32 %v1837, %v2177
        %v2286 = vmul.f32 %v1838, %v2179
        %v2287 = vmul.f32 %v1839, %v2181
        %v2288 = vmul.f32 %v1840, %v2183
        %v2289 = vmul.f32 %v1841, %v2185
        %v2290 = vmul.f32 %v1842, %v2187
        %v2291 = vmul.f32 %v1843, %v2189
        %v2292 = vmul.f32 %v1844, %v2191
        %v2293 = vmul.f32 %v1845, %v2193
        %v2294 = vmul.f32 %v1846, %v2195
        %v2295 = vmul.f32 %v1847, %v2197
        %v2296 = vmul.f32 %v1848, %v2199
        %v2297 = vmul.f32 %v1849, %v2201
        %v2298 = vmul.f32 %v1850, %v2203
        %v2299 = vmul.f32 %v1851, %v2205
        %v2300 = vmul.f32 %v1852, %v2207
        %v2301 = vmul.f32 %v1853, %v2209
        %v2302 = vmul.f32 %v1854, %v2211
        %v2303 = vmul.f32 %v1855, %v2213
        %v2304 = vmul.f32 %v1856, %v2215
        %v2305 = vmul.f32 %v1857, %v2217
        %v2306 = vmul.f32 %v1858, %v2219
        %v2307 = vmul.f32 %v1859, %v2221
        %v2308 = vmul.f32 %v1860, %v2223
        %v2309 = vmul.f32 %v1861, %v2225
        %v2310 = vmul.f32 %v1862, %v2227
        %v2311 = vmul.f32 %v1863, %v2229
        %v2312 = vmul.f32 %v1864, %v2231
        %v2313 = vmul.f32 %v1865, %v2233
        %v2314 = vmul.f32 %v1866, %v2235
        %v2315 = vmul.f32 %v1867, %v2237
        %v2316 = vmul.f32 %v1868, %v2239
        %v2317 = vmul.f32 %v1869, %v2241
        %v2318 = vmul.f32 %v1870, %v2243
        %v2319 = vmul.f32 %v1871, %v2245
        %v2320 = vmul.f32 %v1872, %v2247
        %v2321 = vmul.f32 %v1873, %v2249
        %v2322 = vmul.f32 %v1874, %v2251
        %v2323 = vmul.f32 %v1875, %v2253
        %v2324 = vmul.f32 %v1876, %v2255
        %v2325 = vmul.f32 %v1877, %v2257
        %v2326 = vmul.f32 %v1878, %v2259
        %v2327 = vmul.f32 %v1879, %v2261
        %v2328 = vmul.f32 %v1880, %v2263
        %v2329 = vmul.f32 %v1881, %v2265
        %v2330 = vpack.c.bf16 %v2270, %v2266
        %v2331 = vpack.c.bf16 %v2271, %v2267
        %v2332 = vpack.c.bf16 %v2272, %v2268
        %v2333 = vpack.c.bf16 %v2273, %v2269
        %v2334 = vpack.c.bf16 %v2278, %v2274
        %v2335 = vpack.c.bf16 %v2279, %v2275
        %v2336 = vpack.c.bf16 %v2280, %v2276
        %v2337 = vpack.c.bf16 %v2281, %v2277
        %v2338 = vpack.c.bf16 %v2286, %v2282
        %v2339 = vpack.c.bf16 %v2287, %v2283
        %v2340 = vpack.c.bf16 %v2288, %v2284
        %v2341 = vpack.c.bf16 %v2289, %v2285
        %v2342 = vpack.c.bf16 %v2294, %v2290
        %v2343 = vpack.c.bf16 %v2295, %v2291
        %v2344 = vpack.c.bf16 %v2296, %v2292
        %v2345 = vpack.c.bf16 %v2297, %v2293
        %v2346 = vpack.c.bf16 %v2302, %v2298
        %v2347 = vpack.c.bf16 %v2303, %v2299
        %v2348 = vpack.c.bf16 %v2304, %v2300
        %v2349 = vpack.c.bf16 %v2305, %v2301
        %v2350 = vpack.c.bf16 %v2310, %v2306
        %v2351 = vpack.c.bf16 %v2311, %v2307
        %v2352 = vpack.c.bf16 %v2312, %v2308
        %v2353 = vpack.c.bf16 %v2313, %v2309
        %v2354 = vpack.c.bf16 %v2318, %v2314
        %v2355 = vpack.c.bf16 %v2319, %v2315
        %v2356 = vpack.c.bf16 %v2320, %v2316
        %v2357 = vpack.c.bf16 %v2321, %v2317
        %v2358 = vpack.c.bf16 %v2326, %v2322
        %v2359 = vpack.c.bf16 %v2327, %v2323
        %v2360 = vpack.c.bf16 %v2328, %v2324
        %v2361 = vpack.c.bf16 %v2329, %v2325
        %v2362 = vld [vmem:[#allocation15] sm:$0xf]
        %v2363 = vld [vmem:[#allocation15 + $0x4] sm:$0xf]
        %v2364 = vld [vmem:[#allocation15 + $0x8] sm:$0xf]
        %v2365 = vld [vmem:[#allocation15 + $0xc] sm:$0xf]
        %v2366 = vld [vmem:[#allocation15 + $0x10] sm:$0xf]
        %v2367 = vld [vmem:[#allocation15 + $0x14] sm:$0xf]
        %v2368 = vld [vmem:[#allocation15 + $0x18] sm:$0xf]
        %v2369 = vld [vmem:[#allocation15 + $0x1c] sm:$0xf]
        %v2370 = vld [vmem:[#allocation15 + $0x20] sm:$0xf]
        %v2371 = vld [vmem:[#allocation15 + $0x24] sm:$0xf]
        %v2372 = vld [vmem:[#allocation15 + $0x28] sm:$0xf]
        %v2373 = vld [vmem:[#allocation15 + $0x2c] sm:$0xf]
        %v2374 = vld [vmem:[#allocation15 + $0x30] sm:$0xf]
        %v2375 = vld [vmem:[#allocation15 + $0x34] sm:$0xf]
        %v2376 = vld [vmem:[#allocation15 + $0x38] sm:$0xf]
        %v2377 = vld [vmem:[#allocation15 + $0x3c] sm:$0xf]
        %v2378 = vld [vmem:[#allocation16] sm:$0x1]
        %v2380 = vlaneseq
        %v2381 = vshrl.u32 %v2380, 7
        %v2382 = vsub.s32 0, %v2381
        %v2383 = vrot.slane %v2378, %v2382
        %v2401 = vunpack.c.l.b16 %v2362
        %v2402 = vunpack.c.l.b16 %v2363
        %v2403 = vunpack.c.l.b16 %v2364
        %v2404 = vunpack.c.l.b16 %v2365
        %v2405 = vunpack.c.l.b16 %v2366
        %v2406 = vunpack.c.l.b16 %v2367
        %v2407 = vunpack.c.l.b16 %v2368
        %v2408 = vunpack.c.l.b16 %v2369
        %v2409 = vunpack.c.l.b16 %v2370
        %v2410 = vunpack.c.l.b16 %v2371
        %v2411 = vunpack.c.l.b16 %v2372
        %v2412 = vunpack.c.l.b16 %v2373
        %v2413 = vunpack.c.l.b16 %v2374
        %v2414 = vunpack.c.l.b16 %v2375
        %v2415 = vunpack.c.l.b16 %v2376
        %v2416 = vunpack.c.l.b16 %v2377
        %v2417 = vpack.c.b16 %v2402, %v2401
        %v2418 = vpack.c.b16 %v2404, %v2403
        %v2419 = vpack.c.b16 %v2406, %v2405
        %v2420 = vpack.c.b16 %v2408, %v2407
        %v2421 = vpack.c.b16 %v2410, %v2409
        %v2422 = vpack.c.b16 %v2412, %v2411
        %v2423 = vpack.c.b16 %v2414, %v2413
        %v2424 = vpack.c.b16 %v2416, %v2415
        %2433 = vmatprep.subr.bf16.mxu0 0
        %2434 = vmatpush1.bf16.msra.mxu0 %v2424
        %2435 = vmatprep.subr.bf16.mxu0 0
        %2436 = vmatpush1.bf16.msra.mxu0 %v2423
        %2437 = vmatprep.subr.bf16.mxu0 0
        %2438 = vmatpush1.bf16.msra.mxu0 %v2422
        %2439 = vmatprep.subr.bf16.mxu0 0
        %2440 = vmatpush1.bf16.msra.mxu0 %v2421
        %2441 = vmatprep.subr.bf16.mxu0 0
        %2442 = vmatpush1.bf16.msra.mxu0 %v2420
        %2443 = vmatprep.subr.bf16.mxu0 0
        %2444 = vmatpush1.bf16.msra.mxu0 %v2419
        %2445 = vmatprep.subr.bf16.mxu0 0
        %2446 = vmatpush1.bf16.msra.mxu0 %v2418
        %2447 = vmatprep.subr.bf16.mxu0 0
        %2448 = vmatpush1.bf16.msra.mxu0 %v2417
        %2449 = vmatprep.subr.bf16.mxu0 0
        %2450 = vmatpush2.bf16.msra.mxu0 0
        %2451 = vmatprep.subr.bf16.mxu0 0
        %2452 = vmatpush2.bf16.msra.mxu0 0
        %2453 = vmatprep.subr.bf16.mxu0 0
        %2454 = vmatpush2.bf16.msra.mxu0 0
        %2455 = vmatprep.subr.bf16.mxu0 0
        %2456 = vmatpush2.bf16.msra.mxu0 0
        %2457 = vmatprep.subr.bf16.mxu0 0
        %2458 = vmatpush2.bf16.msra.mxu0 0
        %2459 = vmatprep.subr.bf16.mxu0 0
        %2460 = vmatpush2.bf16.msra.mxu0 0
        %2461 = vmatprep.subr.bf16.mxu0 0
        %2462 = vmatpush2.bf16.msra.mxu0 0
        %2463 = vmatprep.subr.bf16.mxu0 0
        %2464 = vmatpush2.bf16.msra.mxu0 0
        %2465 = vmatprep.mubr.bf16.mxu0 0
        %2466 = vmatmul.mubr.bf16.gmra.mxu0 %v2330
        %v2467 = vpop.f32.mrf.mxu0
        %v2468 = vadd.f32 %v2383, %v2467
        %v2469 = vpop.f32.mrf.mxu0
        %v2470 = vpop.f32.mrf.mxu0
        %v2471 = vadd.f32 %v2383, %v2470
        %v2472 = vpop.f32.mrf.mxu0
        %2473 = vmatprep.mubr.bf16.mxu0 0
        %2474 = vmatmul.mubr.bf16.gmra.mxu0 %v2334
        %v2475 = vpop.f32.mrf.mxu0
        %v2476 = vadd.f32 %v2383, %v2475
        %v2477 = vpop.f32.mrf.mxu0
        %v2478 = vpop.f32.mrf.mxu0
        %v2479 = vadd.f32 %v2383, %v2478
        %v2480 = vpop.f32.mrf.mxu0
        %2481 = vmatprep.mubr.bf16.mxu0 0
        %2482 = vmatmul.mubr.bf16.gmra.mxu0 %v2338
        %v2483 = vpop.f32.mrf.mxu0
        %v2484 = vadd.f32 %v2383, %v2483
        %v2485 = vpop.f32.mrf.mxu0
        %v2486 = vpop.f32.mrf.mxu0
        %v2487 = vadd.f32 %v2383, %v2486
        %v2488 = vpop.f32.mrf.mxu0
        %2489 = vmatprep.mubr.bf16.mxu0 0
        %2490 = vmatmul.mubr.bf16.gmra.mxu0 %v2342
        %v2491 = vpop.f32.mrf.mxu0
        %v2492 = vadd.f32 %v2383, %v2491
        %v2493 = vpop.f32.mrf.mxu0
        %v2494 = vpop.f32.mrf.mxu0
        %v2495 = vadd.f32 %v2383, %v2494
        %v2496 = vpop.f32.mrf.mxu0
        %2497 = vmatprep.mubr.bf16.mxu0 0
        %2498 = vmatmul.mubr.bf16.gmra.mxu0 %v2346
        %v2499 = vpop.f32.mrf.mxu0
        %v2500 = vadd.f32 %v2383, %v2499
        %v2501 = vpop.f32.mrf.mxu0
        %v2502 = vpop.f32.mrf.mxu0
        %v2503 = vadd.f32 %v2383, %v2502
        %v2504 = vpop.f32.mrf.mxu0
        %2505 = vmatprep.mubr.bf16.mxu0 0
        %2506 = vmatmul.mubr.bf16.gmra.mxu0 %v2350
        %v2507 = vpop.f32.mrf.mxu0
        %v2508 = vadd.f32 %v2383, %v2507
        %v2509 = vpop.f32.mrf.mxu0
        %v2510 = vpop.f32.mrf.mxu0
        %v2511 = vadd.f32 %v2383, %v2510
        %v2512 = vpop.f32.mrf.mxu0
        %2513 = vmatprep.mubr.bf16.mxu0 0
        %2514 = vmatmul.mubr.bf16.gmra.mxu0 %v2354
        %v2515 = vpop.f32.mrf.mxu0
        %v2516 = vadd.f32 %v2383, %v2515
        %v2517 = vpop.f32.mrf.mxu0
        %v2518 = vpop.f32.mrf.mxu0
        %v2519 = vadd.f32 %v2383, %v2518
        %v2520 = vpop.f32.mrf.mxu0
        %2521 = vmatprep.mubr.bf16.mxu0 0
        %2522 = vmatmul.mubr.bf16.gmra.mxu0 %v2358
        %v2523 = vpop.f32.mrf.mxu0
        %v2524 = vadd.f32 %v2383, %v2523
        %v2525 = vpop.f32.mrf.mxu0
        %v2526 = vpop.f32.mrf.mxu0
        %v2527 = vadd.f32 %v2383, %v2526
        %v2528 = vpop.f32.mrf.mxu0
        %2529 = vdwg.mxu0
        %v2530 = vtanh.pop %v2468
        %v2531 = vtanh.pop %v2471
        %v2532 = vtanh.pop %v2476
        %v2533 = vtanh.pop %v2479
        %v2534 = vtanh.pop %v2484
        %v2535 = vtanh.pop %v2487
        %v2536 = vtanh.pop %v2492
        %v2537 = vtanh.pop %v2495
        %v2538 = vtanh.pop %v2500
        %v2539 = vtanh.pop %v2503
        %v2540 = vtanh.pop %v2508
        %v2541 = vtanh.pop %v2511
        %v2542 = vtanh.pop %v2516
        %v2543 = vtanh.pop %v2519
        %v2544 = vtanh.pop %v2524
        %v2545 = vtanh.pop %v2527
        %v2546 = vxor.u32 %v2468, 2147483648
        %v2547 = vxor.u32 %v2471, 2147483648
        %v2548 = vxor.u32 %v2476, 2147483648
        %v2549 = vxor.u32 %v2479, 2147483648
        %v2550 = vxor.u32 %v2484, 2147483648
        %v2551 = vxor.u32 %v2487, 2147483648
        %v2552 = vxor.u32 %v2492, 2147483648
        %v2553 = vxor.u32 %v2495, 2147483648
        %v2554 = vxor.u32 %v2500, 2147483648
        %v2555 = vxor.u32 %v2503, 2147483648
        %v2556 = vxor.u32 %v2508, 2147483648
        %v2557 = vxor.u32 %v2511, 2147483648
        %v2558 = vxor.u32 %v2516, 2147483648
        %v2559 = vxor.u32 %v2519, 2147483648
        %v2560 = vxor.u32 %v2524, 2147483648
        %v2561 = vxor.u32 %v2527, 2147483648
        %v2562 = vmul.f32 %v2546, 1.442695
        %v2563 = vpow.pop %v2562
        %v2564 = vmul.f32 %v2547, 1.442695
        %v2565 = vpow.pop %v2564
        %v2566 = vmul.f32 %v2548, 1.442695
        %v2567 = vpow.pop %v2566
        %v2568 = vmul.f32 %v2549, 1.442695
        %v2569 = vpow.pop %v2568
        %v2570 = vmul.f32 %v2550, 1.442695
        %v2571 = vpow.pop %v2570
        %v2572 = vmul.f32 %v2551, 1.442695
        %v2573 = vpow.pop %v2572
        %v2574 = vmul.f32 %v2552, 1.442695
        %v2575 = vpow.pop %v2574
        %v2576 = vmul.f32 %v2553, 1.442695
        %v2577 = vpow.pop %v2576
        %v2578 = vmul.f32 %v2554, 1.442695
        %v2579 = vpow.pop %v2578
        %v2580 = vmul.f32 %v2555, 1.442695
        %v2581 = vpow.pop %v2580
        %v2582 = vmul.f32 %v2556, 1.442695
        %v2583 = vpow.pop %v2582
        %v2584 = vmul.f32 %v2557, 1.442695
        %v2585 = vpow.pop %v2584
        %v2586 = vmul.f32 %v2558, 1.442695
        %v2587 = vpow.pop %v2586
        %v2588 = vmul.f32 %v2559, 1.442695
        %v2589 = vpow.pop %v2588
        %v2590 = vmul.f32 %v2560, 1.442695
        %v2591 = vpow.pop %v2590
        %v2592 = vmul.f32 %v2561, 1.442695
        %v2593 = vpow.pop %v2592
        %v2594 = vadd.f32 %v2563, 1.0
        %v2595 = vadd.f32 %v2565, 1.0
        %v2596 = vadd.f32 %v2567, 1.0
        %v2597 = vadd.f32 %v2569, 1.0
        %v2598 = vadd.f32 %v2571, 1.0
        %v2599 = vadd.f32 %v2573, 1.0
        %v2600 = vadd.f32 %v2575, 1.0
        %v2601 = vadd.f32 %v2577, 1.0
        %v2602 = vadd.f32 %v2579, 1.0
        %v2603 = vadd.f32 %v2581, 1.0
        %v2604 = vadd.f32 %v2583, 1.0
        %v2605 = vadd.f32 %v2585, 1.0
        %v2606 = vadd.f32 %v2587, 1.0
        %v2607 = vadd.f32 %v2589, 1.0
        %v2608 = vadd.f32 %v2591, 1.0
        %v2609 = vadd.f32 %v2593, 1.0
        %v2610 = vrcp.pop %v2594
        %v2611 = vmul.f32 1.0, %v2610
        %v2612 = vrcp.pop %v2595
        %v2613 = vmul.f32 1.0, %v2612
        %v2614 = vrcp.pop %v2596
        %v2615 = vmul.f32 1.0, %v2614
        %v2616 = vrcp.pop %v2597
        %v2617 = vmul.f32 1.0, %v2616
        %v2618 = vrcp.pop %v2598
        %v2619 = vmul.f32 1.0, %v2618
        %v2620 = vrcp.pop %v2599
        %v2621 = vmul.f32 1.0, %v2620
        %v2622 = vrcp.pop %v2600
        %v2623 = vmul.f32 1.0, %v2622
        %v2624 = vrcp.pop %v2601
        %v2625 = vmul.f32 1.0, %v2624
        %v2626 = vrcp.pop %v2602
        %v2627 = vmul.f32 1.0, %v2626
        %v2628 = vrcp.pop %v2603
        %v2629 = vmul.f32 1.0, %v2628
        %v2630 = vrcp.pop %v2604
        %v2631 = vmul.f32 1.0, %v2630
        %v2632 = vrcp.pop %v2605
        %v2633 = vmul.f32 1.0, %v2632
        %v2634 = vrcp.pop %v2606
        %v2635 = vmul.f32 1.0, %v2634
        %v2636 = vrcp.pop %v2607
        %v2637 = vmul.f32 1.0, %v2636
        %v2638 = vrcp.pop %v2608
        %v2639 = vmul.f32 1.0, %v2638
        %v2640 = vrcp.pop %v2609
        %v2641 = vmul.f32 1.0, %v2640
        %2658 = vrot.lane.b32.xlu0 %v2611, 64
        %v2659 = vpop.permute.xlu0 %2658
        %2660 = vrot.lane.b32.xlu0 %v2613, 64
        %v2661 = vpop.permute.xlu0 %2660
        %2662 = vrot.lane.b32.xlu0 %v2615, 64
        %v2663 = vpop.permute.xlu0 %2662
        %2664 = vrot.lane.b32.xlu0 %v2617, 64
        %v2665 = vpop.permute.xlu0 %2664
        %2666 = vrot.lane.b32.xlu0 %v2619, 64
        %v2667 = vpop.permute.xlu0 %2666
        %2668 = vrot.lane.b32.xlu0 %v2621, 64
        %v2669 = vpop.permute.xlu0 %2668
        %2670 = vrot.lane.b32.xlu0 %v2623, 64
        %v2671 = vpop.permute.xlu0 %2670
        %2672 = vrot.lane.b32.xlu0 %v2625, 64
        %v2673 = vpop.permute.xlu0 %2672
        %2674 = vrot.lane.b32.xlu0 %v2627, 64
        %v2675 = vpop.permute.xlu0 %2674
        %2676 = vrot.lane.b32.xlu0 %v2629, 64
        %v2677 = vpop.permute.xlu0 %2676
        %2678 = vrot.lane.b32.xlu0 %v2631, 64
        %v2679 = vpop.permute.xlu0 %2678
        %2680 = vrot.lane.b32.xlu0 %v2633, 64
        %v2681 = vpop.permute.xlu0 %2680
        %2682 = vrot.lane.b32.xlu0 %v2635, 64
        %v2683 = vpop.permute.xlu0 %2682
        %2684 = vrot.lane.b32.xlu0 %v2637, 64
        %v2685 = vpop.permute.xlu0 %2684
        %2686 = vrot.lane.b32.xlu0 %v2639, 64
        %v2687 = vpop.permute.xlu0 %2686
        %2688 = vrot.lane.b32.xlu0 %v2641, 64
        %v2689 = vpop.permute.xlu0 %2688
        %v2706 = vmul.f32 %v2530, %v2659
        %v2707 = vmul.f32 %v2531, %v2661
        %v2708 = vmul.f32 %v2532, %v2663
        %v2709 = vmul.f32 %v2533, %v2665
        %v2710 = vmul.f32 %v2534, %v2667
        %v2711 = vmul.f32 %v2535, %v2669
        %v2712 = vmul.f32 %v2536, %v2671
        %v2713 = vmul.f32 %v2537, %v2673
        %v2714 = vmul.f32 %v2538, %v2675
        %v2715 = vmul.f32 %v2539, %v2677
        %v2716 = vmul.f32 %v2540, %v2679
        %v2717 = vmul.f32 %v2541, %v2681
        %v2718 = vmul.f32 %v2542, %v2683
        %v2719 = vmul.f32 %v2543, %v2685
        %v2720 = vmul.f32 %v2544, %v2687
        %v2721 = vmul.f32 %v2545, %v2689
        %v2722 = vpack.c.bf16 %v2707, %v2706
        %v2723 = vpack.c.bf16 %v2709, %v2708
        %v2724 = vpack.c.bf16 %v2711, %v2710
        %v2725 = vpack.c.bf16 %v2713, %v2712
        %v2726 = vpack.c.bf16 %v2715, %v2714
        %v2727 = vpack.c.bf16 %v2717, %v2716
        %v2728 = vpack.c.bf16 %v2719, %v2718
        %v2729 = vpack.c.bf16 %v2721, %v2720
        %v2730 = vld [vmem:[%s8] sm:$0xf]
        %s2731 = scalar_lea.vmem [#allocation15], 64
        %v2732 = vld [vmem:[%s2731] sm:$0xf]
        %v2733 = vld [vmem:[%s2731 + $0x4] sm:$0xf]
        %v2734 = vld [vmem:[%s2731 + $0x8] sm:$0xf]
        %v2735 = vld [vmem:[%s2731 + $0xc] sm:$0xf]
        %v2736 = vld [vmem:[%s2731 + $0x10] sm:$0xf]
        %v2737 = vld [vmem:[%s2731 + $0x14] sm:$0xf]
        %v2738 = vld [vmem:[%s2731 + $0x18] sm:$0xf]
        %v2739 = vld [vmem:[%s2731 + $0x1c] sm:$0xf]
        %v2740 = vld [vmem:[%s2731 + $0x20] sm:$0xf]
        %v2741 = vld [vmem:[%s2731 + $0x24] sm:$0xf]
        %v2742 = vld [vmem:[%s2731 + $0x28] sm:$0xf]
        %v2743 = vld [vmem:[%s2731 + $0x2c] sm:$0xf]
        %v2744 = vld [vmem:[%s2731 + $0x30] sm:$0xf]
        %v2745 = vld [vmem:[%s2731 + $0x34] sm:$0xf]
        %v2746 = vld [vmem:[%s2731 + $0x38] sm:$0xf]
        %v2747 = vld [vmem:[%s2731 + $0x3c] sm:$0xf]
        %s2748 = scalar_lea.vmem [#allocation16], 1
        %v2749 = vld [vmem:[%s2748] sm:$0x1]
        %v2751 = vlaneseq
        %v2752 = vshrl.u32 %v2751, 7
        %v2753 = vsub.s32 0, %v2752
        %v2754 = vrot.slane %v2749, %v2753
        %v2772 = vunpack.c.l.b16 %v2732
        %v2773 = vunpack.c.l.b16 %v2733
        %v2774 = vunpack.c.l.b16 %v2734
        %v2775 = vunpack.c.l.b16 %v2735
        %v2776 = vunpack.c.l.b16 %v2736
        %v2777 = vunpack.c.l.b16 %v2737
        %v2778 = vunpack.c.l.b16 %v2738
        %v2779 = vunpack.c.l.b16 %v2739
        %v2780 = vunpack.c.l.b16 %v2740
        %v2781 = vunpack.c.l.b16 %v2741
        %v2782 = vunpack.c.l.b16 %v2742
        %v2783 = vunpack.c.l.b16 %v2743
        %v2784 = vunpack.c.l.b16 %v2744
        %v2785 = vunpack.c.l.b16 %v2745
        %v2786 = vunpack.c.l.b16 %v2746
        %v2787 = vunpack.c.l.b16 %v2747
        %v2788 = vpack.c.b16 %v2773, %v2772
        %v2789 = vpack.c.b16 %v2775, %v2774
        %v2790 = vpack.c.b16 %v2777, %v2776
        %v2791 = vpack.c.b16 %v2779, %v2778
        %v2792 = vpack.c.b16 %v2781, %v2780
        %v2793 = vpack.c.b16 %v2783, %v2782
        %v2794 = vpack.c.b16 %v2785, %v2784
        %v2795 = vpack.c.b16 %v2787, %v2786
        %2804 = vmatprep.subr.bf16.mxu0 0
        %2805 = vmatpush1.bf16.msra.mxu0 %v2795
        %2806 = vmatprep.subr.bf16.mxu0 0
        %2807 = vmatpush1.bf16.msra.mxu0 %v2794
        %2808 = vmatprep.subr.bf16.mxu0 0
        %2809 = vmatpush1.bf16.msra.mxu0 %v2793
        %2810 = vmatprep.subr.bf16.mxu0 0
        %2811 = vmatpush1.bf16.msra.mxu0 %v2792
        %2812 = vmatprep.subr.bf16.mxu0 0
        %2813 = vmatpush1.bf16.msra.mxu0 %v2791
        %2814 = vmatprep.subr.bf16.mxu0 0
        %2815 = vmatpush1.bf16.msra.mxu0 %v2790
        %2816 = vmatprep.subr.bf16.mxu0 0
        %2817 = vmatpush1.bf16.msra.mxu0 %v2789
        %2818 = vmatprep.subr.bf16.mxu0 0
        %2819 = vmatpush1.bf16.msra.mxu0 %v2788
        %2820 = vmatprep.subr.bf16.mxu0 0
        %2821 = vmatpush2.bf16.msra.mxu0 0
        %2822 = vmatprep.subr.bf16.mxu0 0
        %2823 = vmatpush2.bf16.msra.mxu0 0
        %2824 = vmatprep.subr.bf16.mxu0 0
        %2825 = vmatpush2.bf16.msra.mxu0 0
        %2826 = vmatprep.subr.bf16.mxu0 0
        %2827 = vmatpush2.bf16.msra.mxu0 0
        %2828 = vmatprep.subr.bf16.mxu0 0
        %2829 = vmatpush2.bf16.msra.mxu0 0
        %2830 = vmatprep.subr.bf16.mxu0 0
        %2831 = vmatpush2.bf16.msra.mxu0 0
        %2832 = vmatprep.subr.bf16.mxu0 0
        %2833 = vmatpush2.bf16.msra.mxu0 0
        %2834 = vmatprep.subr.bf16.mxu0 0
        %2835 = vmatpush2.bf16.msra.mxu0 0
        %2836 = vmatprep.mubr.bf16.mxu0 0
        %2837 = vmatmul.mubr.bf16.gmra.mxu0 %v2331
        %v2838 = vpop.f32.mrf.mxu0
        %v2839 = vadd.f32 %v2754, %v2838
        %v2840 = vpop.f32.mrf.mxu0
        %v2841 = vpop.f32.mrf.mxu0
        %v2842 = vadd.f32 %v2754, %v2841
        %v2843 = vpop.f32.mrf.mxu0
        %2844 = vmatprep.mubr.bf16.mxu0 0
        %2845 = vmatmul.mubr.bf16.gmra.mxu0 %v2335
        %v2846 = vpop.f32.mrf.mxu0
        %v2847 = vadd.f32 %v2754, %v2846
        %v2848 = vpop.f32.mrf.mxu0
        %v2849 = vpop.f32.mrf.mxu0
        %v2850 = vadd.f32 %v2754, %v2849
        %v2851 = vpop.f32.mrf.mxu0
        %2852 = vmatprep.mubr.bf16.mxu0 0
        %2853 = vmatmul.mubr.bf16.gmra.mxu0 %v2339
        %v2854 = vpop.f32.mrf.mxu0
        %v2855 = vadd.f32 %v2754, %v2854
        %v2856 = vpop.f32.mrf.mxu0
        %v2857 = vpop.f32.mrf.mxu0
        %v2858 = vadd.f32 %v2754, %v2857
        %v2859 = vpop.f32.mrf.mxu0
        %2860 = vmatprep.mubr.bf16.mxu0 0
        %2861 = vmatmul.mubr.bf16.gmra.mxu0 %v2343
        %v2862 = vpop.f32.mrf.mxu0
        %v2863 = vadd.f32 %v2754, %v2862
        %v2864 = vpop.f32.mrf.mxu0
        %v2865 = vpop.f32.mrf.mxu0
        %v2866 = vadd.f32 %v2754, %v2865
        %v2867 = vpop.f32.mrf.mxu0
        %2868 = vmatprep.mubr.bf16.mxu0 0
        %2869 = vmatmul.mubr.bf16.gmra.mxu0 %v2347
        %v2870 = vpop.f32.mrf.mxu0
        %v2871 = vadd.f32 %v2754, %v2870
        %v2872 = vpop.f32.mrf.mxu0
        %v2873 = vpop.f32.mrf.mxu0
        %v2874 = vadd.f32 %v2754, %v2873
        %v2875 = vpop.f32.mrf.mxu0
        %2876 = vmatprep.mubr.bf16.mxu0 0
        %2877 = vmatmul.mubr.bf16.gmra.mxu0 %v2351
        %v2878 = vpop.f32.mrf.mxu0
        %v2879 = vadd.f32 %v2754, %v2878
        %v2880 = vpop.f32.mrf.mxu0
        %v2881 = vpop.f32.mrf.mxu0
        %v2882 = vadd.f32 %v2754, %v2881
        %v2883 = vpop.f32.mrf.mxu0
        %2884 = vmatprep.mubr.bf16.mxu0 0
        %2885 = vmatmul.mubr.bf16.gmra.mxu0 %v2355
        %v2886 = vpop.f32.mrf.mxu0
        %v2887 = vadd.f32 %v2754, %v2886
        %v2888 = vpop.f32.mrf.mxu0
        %v2889 = vpop.f32.mrf.mxu0
        %v2890 = vadd.f32 %v2754, %v2889
        %v2891 = vpop.f32.mrf.mxu0
        %2892 = vmatprep.mubr.bf16.mxu0 0
        %2893 = vmatmul.mubr.bf16.gmra.mxu0 %v2359
        %v2894 = vpop.f32.mrf.mxu0
        %v2895 = vadd.f32 %v2754, %v2894
        %v2896 = vpop.f32.mrf.mxu0
        %v2897 = vpop.f32.mrf.mxu0
        %v2898 = vadd.f32 %v2754, %v2897
        %v2899 = vpop.f32.mrf.mxu0
        %2900 = vdwg.mxu0
        %v2901 = vtanh.pop %v2839
        %v2902 = vtanh.pop %v2842
        %v2903 = vtanh.pop %v2847
        %v2904 = vtanh.pop %v2850
        %v2905 = vtanh.pop %v2855
        %v2906 = vtanh.pop %v2858
        %v2907 = vtanh.pop %v2863
        %v2908 = vtanh.pop %v2866
        %v2909 = vtanh.pop %v2871
        %v2910 = vtanh.pop %v2874
        %v2911 = vtanh.pop %v2879
        %v2912 = vtanh.pop %v2882
        %v2913 = vtanh.pop %v2887
        %v2914 = vtanh.pop %v2890
        %v2915 = vtanh.pop %v2895
        %v2916 = vtanh.pop %v2898
        %v2917 = vxor.u32 %v2839, 2147483648
        %v2918 = vxor.u32 %v2842, 2147483648
        %v2919 = vxor.u32 %v2847, 2147483648
        %v2920 = vxor.u32 %v2850, 2147483648
        %v2921 = vxor.u32 %v2855, 2147483648
        %v2922 = vxor.u32 %v2858, 2147483648
        %v2923 = vxor.u32 %v2863, 2147483648
        %v2924 = vxor.u32 %v2866, 2147483648
        %v2925 = vxor.u32 %v2871, 2147483648
        %v2926 = vxor.u32 %v2874, 2147483648
        %v2927 = vxor.u32 %v2879, 2147483648
        %v2928 = vxor.u32 %v2882, 2147483648
        %v2929 = vxor.u32 %v2887, 2147483648
        %v2930 = vxor.u32 %v2890, 2147483648
        %v2931 = vxor.u32 %v2895, 2147483648
        %v2932 = vxor.u32 %v2898, 2147483648
        %v2933 = vmul.f32 %v2917, 1.442695
        %v2934 = vpow.pop %v2933
        %v2935 = vmul.f32 %v2918, 1.442695
        %v2936 = vpow.pop %v2935
        %v2937 = vmul.f32 %v2919, 1.442695
        %v2938 = vpow.pop %v2937
        %v2939 = vmul.f32 %v2920, 1.442695
        %v2940 = vpow.pop %v2939
        %v2941 = vmul.f32 %v2921, 1.442695
        %v2942 = vpow.pop %v2941
        %v2943 = vmul.f32 %v2922, 1.442695
        %v2944 = vpow.pop %v2943
        %v2945 = vmul.f32 %v2923, 1.442695
        %v2946 = vpow.pop %v2945
        %v2947 = vmul.f32 %v2924, 1.442695
        %v2948 = vpow.pop %v2947
        %v2949 = vmul.f32 %v2925, 1.442695
        %v2950 = vpow.pop %v2949
        %v2951 = vmul.f32 %v2926, 1.442695
        %v2952 = vpow.pop %v2951
        %v2953 = vmul.f32 %v2927, 1.442695
        %v2954 = vpow.pop %v2953
        %v2955 = vmul.f32 %v2928, 1.442695
        %v2956 = vpow.pop %v2955
        %v2957 = vmul.f32 %v2929, 1.442695
        %v2958 = vpow.pop %v2957
        %v2959 = vmul.f32 %v2930, 1.442695
        %v2960 = vpow.pop %v2959
        %v2961 = vmul.f32 %v2931, 1.442695
        %v2962 = vpow.pop %v2961
        %v2963 = vmul.f32 %v2932, 1.442695
        %v2964 = vpow.pop %v2963
        %v2965 = vadd.f32 %v2934, 1.0
        %v2966 = vadd.f32 %v2936, 1.0
        %v2967 = vadd.f32 %v2938, 1.0
        %v2968 = vadd.f32 %v2940, 1.0
        %v2969 = vadd.f32 %v2942, 1.0
        %v2970 = vadd.f32 %v2944, 1.0
        %v2971 = vadd.f32 %v2946, 1.0
        %v2972 = vadd.f32 %v2948, 1.0
        %v2973 = vadd.f32 %v2950, 1.0
        %v2974 = vadd.f32 %v2952, 1.0
        %v2975 = vadd.f32 %v2954, 1.0
        %v2976 = vadd.f32 %v2956, 1.0
        %v2977 = vadd.f32 %v2958, 1.0
        %v2978 = vadd.f32 %v2960, 1.0
        %v2979 = vadd.f32 %v2962, 1.0
        %v2980 = vadd.f32 %v2964, 1.0
        %v2981 = vrcp.pop %v2965
        %v2982 = vmul.f32 1.0, %v2981
        %v2983 = vrcp.pop %v2966
        %v2984 = vmul.f32 1.0, %v2983
        %v2985 = vrcp.pop %v2967
        %v2986 = vmul.f32 1.0, %v2985
        %v2987 = vrcp.pop %v2968
        %v2988 = vmul.f32 1.0, %v2987
        %v2989 = vrcp.pop %v2969
        %v2990 = vmul.f32 1.0, %v2989
        %v2991 = vrcp.pop %v2970
        %v2992 = vmul.f32 1.0, %v2991
        %v2993 = vrcp.pop %v2971
        %v2994 = vmul.f32 1.0, %v2993
        %v2995 = vrcp.pop %v2972
        %v2996 = vmul.f32 1.0, %v2995
        %v2997 = vrcp.pop %v2973
        %v2998 = vmul.f32 1.0, %v2997
        %v2999 = vrcp.pop %v2974
        %v3000 = vmul.f32 1.0, %v2999
        %v3001 = vrcp.pop %v2975
        %v3002 = vmul.f32 1.0, %v3001
        %v3003 = vrcp.pop %v2976
        %v3004 = vmul.f32 1.0, %v3003
        %v3005 = vrcp.pop %v2977
        %v3006 = vmul.f32 1.0, %v3005
        %v3007 = vrcp.pop %v2978
        %v3008 = vmul.f32 1.0, %v3007
        %v3009 = vrcp.pop %v2979
        %v3010 = vmul.f32 1.0, %v3009
        %v3011 = vrcp.pop %v2980
        %v3012 = vmul.f32 1.0, %v3011
        %3029 = vrot.lane.b32.xlu0 %v2982, 64
        %v3030 = vpop.permute.xlu0 %3029
        %3031 = vrot.lane.b32.xlu0 %v2984, 64
        %v3032 = vpop.permute.xlu0 %3031
        %3033 = vrot.lane.b32.xlu0 %v2986, 64
        %v3034 = vpop.permute.xlu0 %3033
        %3035 = vrot.lane.b32.xlu0 %v2988, 64
        %v3036 = vpop.permute.xlu0 %3035
        %3037 = vrot.lane.b32.xlu0 %v2990, 64
        %v3038 = vpop.permute.xlu0 %3037
        %3039 = vrot.lane.b32.xlu0 %v2992, 64
        %v3040 = vpop.permute.xlu0 %3039
        %3041 = vrot.lane.b32.xlu0 %v2994, 64
        %v3042 = vpop.permute.xlu0 %3041
        %3043 = vrot.lane.b32.xlu0 %v2996, 64
        %v3044 = vpop.permute.xlu0 %3043
        %3045 = vrot.lane.b32.xlu0 %v2998, 64
        %v3046 = vpop.permute.xlu0 %3045
        %3047 = vrot.lane.b32.xlu0 %v3000, 64
        %v3048 = vpop.permute.xlu0 %3047
        %3049 = vrot.lane.b32.xlu0 %v3002, 64
        %v3050 = vpop.permute.xlu0 %3049
        %3051 = vrot.lane.b32.xlu0 %v3004, 64
        %v3052 = vpop.permute.xlu0 %3051
        %3053 = vrot.lane.b32.xlu0 %v3006, 64
        %v3054 = vpop.permute.xlu0 %3053
        %3055 = vrot.lane.b32.xlu0 %v3008, 64
        %v3056 = vpop.permute.xlu0 %3055
        %3057 = vrot.lane.b32.xlu0 %v3010, 64
        %v3058 = vpop.permute.xlu0 %3057
        %3059 = vrot.lane.b32.xlu0 %v3012, 64
        %v3060 = vpop.permute.xlu0 %3059
        %v3077 = vmul.f32 %v2901, %v3030
        %v3078 = vmul.f32 %v2902, %v3032
        %v3079 = vmul.f32 %v2903, %v3034
        %v3080 = vmul.f32 %v2904, %v3036
        %v3081 = vmul.f32 %v2905, %v3038
        %v3082 = vmul.f32 %v2906, %v3040
        %v3083 = vmul.f32 %v2907, %v3042
        %v3084 = vmul.f32 %v2908, %v3044
        %v3085 = vmul.f32 %v2909, %v3046
        %v3086 = vmul.f32 %v2910, %v3048
        %v3087 = vmul.f32 %v2911, %v3050
        %v3088 = vmul.f32 %v2912, %v3052
        %v3089 = vmul.f32 %v2913, %v3054
        %v3090 = vmul.f32 %v2914, %v3056
        %v3091 = vmul.f32 %v2915, %v3058
        %v3092 = vmul.f32 %v2916, %v3060
        %v3093 = vpack.c.bf16 %v3078, %v3077
        %v3094 = vpack.c.bf16 %v3080, %v3079
        %v3095 = vpack.c.bf16 %v3082, %v3081
        %v3096 = vpack.c.bf16 %v3084, %v3083
        %v3097 = vpack.c.bf16 %v3086, %v3085
        %v3098 = vpack.c.bf16 %v3088, %v3087
        %v3099 = vpack.c.bf16 %v3090, %v3089
        %v3100 = vpack.c.bf16 %v3092, %v3091
        %s3101 = scalar_lea.vmem %s8, 4
        %v3102 = vld [vmem:[%s3101] sm:$0xf]
        %vm3103 = vcmask 523264
        %v3105 = vsel %vm3103, %v3102, 0
        %v3108 = vsel %vm3103, %v3093, 0
        %v3111 = vsel %vm3103, %v3094, 0
        %v3114 = vsel %vm3103, %v3095, 0
        %v3117 = vsel %vm3103, %v3096, 0
        %v3120 = vsel %vm3103, %v3097, 0
        %v3123 = vsel %vm3103, %v3098, 0
        %v3126 = vsel %vm3103, %v3099, 0
        %v3129 = vsel %vm3103, %v3100, 0
        %3131 = vmatprep.subr.bf16.mxu0 0
        %3132 = vmatpush1.bf16.xpose.msra.mxu0 %v3129
        %3133 = vmatprep.subr.bf16.mxu0 0
        %3134 = vmatpush1.bf16.xpose.msra.mxu0 %v3126
        %3135 = vmatprep.subr.bf16.mxu0 0
        %3136 = vmatpush1.bf16.xpose.msra.mxu0 %v3123
        %3137 = vmatprep.subr.bf16.mxu0 0
        %3138 = vmatpush1.bf16.xpose.msra.mxu0 %v3120
        %3139 = vmatprep.subr.bf16.mxu0 0
        %3140 = vmatpush1.bf16.xpose.msra.mxu0 %v3117
        %3141 = vmatprep.subr.bf16.mxu0 0
        %3142 = vmatpush1.bf16.xpose.msra.mxu0 %v3114
        %3143 = vmatprep.subr.bf16.mxu0 0
        %3144 = vmatpush1.bf16.xpose.msra.mxu0 %v3111
        %3145 = vmatprep.subr.bf16.mxu0 0
        %3146 = vmatpush1.bf16.xpose.msra.mxu0 %v3108
        %3147 = vmatprep.subr.bf16.mxu0 0
        %3148 = vmatpush2.bf16.xpose.msra.mxu0 0
        %3149 = vmatprep.subr.bf16.mxu0 0
        %3150 = vmatpush2.bf16.xpose.msra.mxu0 0
        %3151 = vmatprep.subr.bf16.mxu0 0
        %3152 = vmatpush2.bf16.xpose.msra.mxu0 0
        %3153 = vmatprep.subr.bf16.mxu0 0
        %3154 = vmatpush2.bf16.xpose.msra.mxu0 0
        %3155 = vmatprep.subr.bf16.mxu0 0
        %3156 = vmatpush2.bf16.xpose.msra.mxu0 0
        %3157 = vmatprep.subr.bf16.mxu0 0
        %3158 = vmatpush2.bf16.xpose.msra.mxu0 0
        %3159 = vmatprep.subr.bf16.mxu0 0
        %3160 = vmatpush2.bf16.xpose.msra.mxu0 0
        %3161 = vmatprep.subr.bf16.mxu0 0
        %3162 = vmatpush2.bf16.xpose.msra.mxu0 0
        %3163 = vmatprep.mubr.bf16.mxu0 0
        %3164 = vmatmul.mubr.bf16.gmra.mxu0 %v3105
        %v3165 = vpop.f32.mrf.mxu0
        %v3166 = vadd.f32 0.0, %v3165
        %v3167 = vpop.f32.mrf.mxu0
        %v3168 = vpop.f32.mrf.mxu0
        %v3169 = vpop.f32.mrf.mxu0
        %3170 = vdwg.mxu0
        %v3172 = vsel %vm3103, %v2730, 0
        %v3175 = vsel %vm3103, %v2722, 0
        %v3178 = vsel %vm3103, %v2723, 0
        %v3181 = vsel %vm3103, %v2724, 0
        %v3184 = vsel %vm3103, %v2725, 0
        %v3187 = vsel %vm3103, %v2726, 0
        %v3190 = vsel %vm3103, %v2727, 0
        %v3193 = vsel %vm3103, %v2728, 0
        %v3196 = vsel %vm3103, %v2729, 0
        %3198 = vmatprep.subr.bf16.mxu0 0
        %3199 = vmatpush1.bf16.xpose.msra.mxu0 %v3196
        %3200 = vmatprep.subr.bf16.mxu0 0
        %3201 = vmatpush1.bf16.xpose.msra.mxu0 %v3193
        %3202 = vmatprep.subr.bf16.mxu0 0
        %3203 = vmatpush1.bf16.xpose.msra.mxu0 %v3190
        %3204 = vmatprep.subr.bf16.mxu0 0
        %3205 = vmatpush1.bf16.xpose.msra.mxu0 %v3187
        %3206 = vmatprep.subr.bf16.mxu0 0
        %3207 = vmatpush1.bf16.xpose.msra.mxu0 %v3184
        %3208 = vmatprep.subr.bf16.mxu0 0
        %3209 = vmatpush1.bf16.xpose.msra.mxu0 %v3181
        %3210 = vmatprep.subr.bf16.mxu0 0
        %3211 = vmatpush1.bf16.xpose.msra.mxu0 %v3178
        %3212 = vmatprep.subr.bf16.mxu0 0
        %3213 = vmatpush1.bf16.xpose.msra.mxu0 %v3175
        %3214 = vmatprep.subr.bf16.mxu0 0
        %3215 = vmatpush2.bf16.xpose.msra.mxu0 0
        %3216 = vmatprep.subr.bf16.mxu0 0
        %3217 = vmatpush2.bf16.xpose.msra.mxu0 0
        %3218 = vmatprep.subr.bf16.mxu0 0
        %3219 = vmatpush2.bf16.xpose.msra.mxu0 0
        %3220 = vmatprep.subr.bf16.mxu0 0
        %3221 = vmatpush2.bf16.xpose.msra.mxu0 0
        %3222 = vmatprep.subr.bf16.mxu0 0
        %3223 = vmatpush2.bf16.xpose.msra.mxu0 0
        %3224 = vmatprep.subr.bf16.mxu0 0
        %3225 = vmatpush2.bf16.xpose.msra.mxu0 0
        %3226 = vmatprep.subr.bf16.mxu0 0
        %3227 = vmatpush2.bf16.xpose.msra.mxu0 0
        %3228 = vmatprep.subr.bf16.mxu0 0
        %3229 = vmatpush2.bf16.xpose.msra.mxu0 0
        %3230 = vmatprep.mubr.bf16.mxu0 0
        %3231 = vmatmul.mubr.bf16.gmra.mxu0 %v3172
        %v3232 = vpop.f32.mrf.mxu0
        %v3233 = vadd.f32 %v3166, %v3232
        %v3234 = vpop.f32.mrf.mxu0
        %v3235 = vpop.f32.mrf.mxu0
        %v3236 = vpop.f32.mrf.mxu0
        %3237 = vdwg.mxu0
        %s3238 = scalar_lea.vmem [#allocation15], 128
        %v3239 = vld [vmem:[%s3238] sm:$0xf]
        %v3240 = vld [vmem:[%s3238 + $0x4] sm:$0xf]
        %v3241 = vld [vmem:[%s3238 + $0x8] sm:$0xf]
        %v3242 = vld [vmem:[%s3238 + $0xc] sm:$0xf]
        %v3243 = vld [vmem:[%s3238 + $0x10] sm:$0xf]
        %v3244 = vld [vmem:[%s3238 + $0x14] sm:$0xf]
        %v3245 = vld [vmem:[%s3238 + $0x18] sm:$0xf]
        %v3246 = vld [vmem:[%s3238 + $0x1c] sm:$0xf]
        %v3247 = vld [vmem:[%s3238 + $0x20] sm:$0xf]
        %v3248 = vld [vmem:[%s3238 + $0x24] sm:$0xf]
        %v3249 = vld [vmem:[%s3238 + $0x28] sm:$0xf]
        %v3250 = vld [vmem:[%s3238 + $0x2c] sm:$0xf]
        %v3251 = vld [vmem:[%s3238 + $0x30] sm:$0xf]
        %v3252 = vld [vmem:[%s3238 + $0x34] sm:$0xf]
        %v3253 = vld [vmem:[%s3238 + $0x38] sm:$0xf]
        %v3254 = vld [vmem:[%s3238 + $0x3c] sm:$0xf]
        %s3255 = scalar_lea.vmem [#allocation16], 2
        %v3256 = vld [vmem:[%s3255] sm:$0x1]
        %v3258 = vlaneseq
        %v3259 = vshrl.u32 %v3258, 7
        %v3260 = vsub.s32 0, %v3259
        %v3261 = vrot.slane %v3256, %v3260
        %v3279 = vunpack.c.l.b16 %v3239
        %v3280 = vunpack.c.l.b16 %v3240
        %v3281 = vunpack.c.l.b16 %v3241
        %v3282 = vunpack.c.l.b16 %v3242
        %v3283 = vunpack.c.l.b16 %v3243
        %v3284 = vunpack.c.l.b16 %v3244
        %v3285 = vunpack.c.l.b16 %v3245
        %v3286 = vunpack.c.l.b16 %v3246
        %v3287 = vunpack.c.l.b16 %v3247
        %v3288 = vunpack.c.l.b16 %v3248
        %v3289 = vunpack.c.l.b16 %v3249
        %v3290 = vunpack.c.l.b16 %v3250
        %v3291 = vunpack.c.l.b16 %v3251
        %v3292 = vunpack.c.l.b16 %v3252
        %v3293 = vunpack.c.l.b16 %v3253
        %v3294 = vunpack.c.l.b16 %v3254
        %v3295 = vpack.c.b16 %v3280, %v3279
        %v3296 = vpack.c.b16 %v3282, %v3281
        %v3297 = vpack.c.b16 %v3284, %v3283
        %v3298 = vpack.c.b16 %v3286, %v3285
        %v3299 = vpack.c.b16 %v3288, %v3287
        %v3300 = vpack.c.b16 %v3290, %v3289
        %v3301 = vpack.c.b16 %v3292, %v3291
        %v3302 = vpack.c.b16 %v3294, %v3293
        %3311 = vmatprep.subr.bf16.mxu0 0
        %3312 = vmatpush1.bf16.msra.mxu0 %v3302
        %3313 = vmatprep.subr.bf16.mxu0 0
        %3314 = vmatpush1.bf16.msra.mxu0 %v3301
        %3315 = vmatprep.subr.bf16.mxu0 0
        %3316 = vmatpush1.bf16.msra.mxu0 %v3300
        %3317 = vmatprep.subr.bf16.mxu0 0
        %3318 = vmatpush1.bf16.msra.mxu0 %v3299
        %3319 = vmatprep.subr.bf16.mxu0 0
        %3320 = vmatpush1.bf16.msra.mxu0 %v3298
        %3321 = vmatprep.subr.bf16.mxu0 0
        %3322 = vmatpush1.bf16.msra.mxu0 %v3297
        %3323 = vmatprep.subr.bf16.mxu0 0
        %3324 = vmatpush1.bf16.msra.mxu0 %v3296
        %3325 = vmatprep.subr.bf16.mxu0 0
        %3326 = vmatpush1.bf16.msra.mxu0 %v3295
        %3327 = vmatprep.subr.bf16.mxu0 0
        %3328 = vmatpush2.bf16.msra.mxu0 0
        %3329 = vmatprep.subr.bf16.mxu0 0
        %3330 = vmatpush2.bf16.msra.mxu0 0
        %3331 = vmatprep.subr.bf16.mxu0 0
        %3332 = vmatpush2.bf16.msra.mxu0 0
        %3333 = vmatprep.subr.bf16.mxu0 0
        %3334 = vmatpush2.bf16.msra.mxu0 0
        %3335 = vmatprep.subr.bf16.mxu0 0
        %3336 = vmatpush2.bf16.msra.mxu0 0
        %3337 = vmatprep.subr.bf16.mxu0 0
        %3338 = vmatpush2.bf16.msra.mxu0 0
        %3339 = vmatprep.subr.bf16.mxu0 0
        %3340 = vmatpush2.bf16.msra.mxu0 0
        %3341 = vmatprep.subr.bf16.mxu0 0
        %3342 = vmatpush2.bf16.msra.mxu0 0
        %3343 = vmatprep.mubr.bf16.mxu0 0
        %3344 = vmatmul.mubr.bf16.gmra.mxu0 %v2332
        %v3345 = vpop.f32.mrf.mxu0
        %v3346 = vadd.f32 %v3261, %v3345
        %v3347 = vpop.f32.mrf.mxu0
        %v3348 = vpop.f32.mrf.mxu0
        %v3349 = vadd.f32 %v3261, %v3348
        %v3350 = vpop.f32.mrf.mxu0
        %3351 = vmatprep.mubr.bf16.mxu0 0
        %3352 = vmatmul.mubr.bf16.gmra.mxu0 %v2336
        %v3353 = vpop.f32.mrf.mxu0
        %v3354 = vadd.f32 %v3261, %v3353
        %v3355 = vpop.f32.mrf.mxu0
        %v3356 = vpop.f32.mrf.mxu0
        %v3357 = vadd.f32 %v3261, %v3356
        %v3358 = vpop.f32.mrf.mxu0
        %3359 = vmatprep.mubr.bf16.mxu0 0
        %3360 = vmatmul.mubr.bf16.gmra.mxu0 %v2340
        %v3361 = vpop.f32.mrf.mxu0
        %v3362 = vadd.f32 %v3261, %v3361
        %v3363 = vpop.f32.mrf.mxu0
        %v3364 = vpop.f32.mrf.mxu0
        %v3365 = vadd.f32 %v3261, %v3364
        %v3366 = vpop.f32.mrf.mxu0
        %3367 = vmatprep.mubr.bf16.mxu0 0
        %3368 = vmatmul.mubr.bf16.gmra.mxu0 %v2344
        %v3369 = vpop.f32.mrf.mxu0
        %v3370 = vadd.f32 %v3261, %v3369
        %v3371 = vpop.f32.mrf.mxu0
        %v3372 = vpop.f32.mrf.mxu0
        %v3373 = vadd.f32 %v3261, %v3372
        %v3374 = vpop.f32.mrf.mxu0
        %3375 = vmatprep.mubr.bf16.mxu0 0
        %3376 = vmatmul.mubr.bf16.gmra.mxu0 %v2348
        %v3377 = vpop.f32.mrf.mxu0
        %v3378 = vadd.f32 %v3261, %v3377
        %v3379 = vpop.f32.mrf.mxu0
        %v3380 = vpop.f32.mrf.mxu0
        %v3381 = vadd.f32 %v3261, %v3380
        %v3382 = vpop.f32.mrf.mxu0
        %3383 = vmatprep.mubr.bf16.mxu0 0
        %3384 = vmatmul.mubr.bf16.gmra.mxu0 %v2352
        %v3385 = vpop.f32.mrf.mxu0
        %v3386 = vadd.f32 %v3261, %v3385
        %v3387 = vpop.f32.mrf.mxu0
        %v3388 = vpop.f32.mrf.mxu0
        %v3389 = vadd.f32 %v3261, %v3388
        %v3390 = vpop.f32.mrf.mxu0
        %3391 = vmatprep.mubr.bf16.mxu0 0
        %3392 = vmatmul.mubr.bf16.gmra.mxu0 %v2356
        %v3393 = vpop.f32.mrf.mxu0
        %v3394 = vadd.f32 %v3261, %v3393
        %v3395 = vpop.f32.mrf.mxu0
        %v3396 = vpop.f32.mrf.mxu0
        %v3397 = vadd.f32 %v3261, %v3396
        %v3398 = vpop.f32.mrf.mxu0
        %3399 = vmatprep.mubr.bf16.mxu0 0
        %3400 = vmatmul.mubr.bf16.gmra.mxu0 %v2360
        %v3401 = vpop.f32.mrf.mxu0
        %v3402 = vadd.f32 %v3261, %v3401
        %v3403 = vpop.f32.mrf.mxu0
        %v3404 = vpop.f32.mrf.mxu0
        %v3405 = vadd.f32 %v3261, %v3404
        %v3406 = vpop.f32.mrf.mxu0
        %3407 = vdwg.mxu0
        %v3408 = vtanh.pop %v3346
        %v3409 = vtanh.pop %v3349
        %v3410 = vtanh.pop %v3354
        %v3411 = vtanh.pop %v3357
        %v3412 = vtanh.pop %v3362
        %v3413 = vtanh.pop %v3365
        %v3414 = vtanh.pop %v3370
        %v3415 = vtanh.pop %v3373
        %v3416 = vtanh.pop %v3378
        %v3417 = vtanh.pop %v3381
        %v3418 = vtanh.pop %v3386
        %v3419 = vtanh.pop %v3389
        %v3420 = vtanh.pop %v3394
        %v3421 = vtanh.pop %v3397
        %v3422 = vtanh.pop %v3402
        %v3423 = vtanh.pop %v3405
        %v3424 = vxor.u32 %v3346, 2147483648
        %v3425 = vxor.u32 %v3349, 2147483648
        %v3426 = vxor.u32 %v3354, 2147483648
        %v3427 = vxor.u32 %v3357, 2147483648
        %v3428 = vxor.u32 %v3362, 2147483648
        %v3429 = vxor.u32 %v3365, 2147483648
        %v3430 = vxor.u32 %v3370, 2147483648
        %v3431 = vxor.u32 %v3373, 2147483648
        %v3432 = vxor.u32 %v3378, 2147483648
        %v3433 = vxor.u32 %v3381, 2147483648
        %v3434 = vxor.u32 %v3386, 2147483648
        %v3435 = vxor.u32 %v3389, 2147483648
        %v3436 = vxor.u32 %v3394, 2147483648
        %v3437 = vxor.u32 %v3397, 2147483648
        %v3438 = vxor.u32 %v3402, 2147483648
        %v3439 = vxor.u32 %v3405, 2147483648
        %v3440 = vmul.f32 %v3424, 1.442695
        %v3441 = vpow.pop %v3440
        %v3442 = vmul.f32 %v3425, 1.442695
        %v3443 = vpow.pop %v3442
        %v3444 = vmul.f32 %v3426, 1.442695
        %v3445 = vpow.pop %v3444
        %v3446 = vmul.f32 %v3427, 1.442695
        %v3447 = vpow.pop %v3446
        %v3448 = vmul.f32 %v3428, 1.442695
        %v3449 = vpow.pop %v3448
        %v3450 = vmul.f32 %v3429, 1.442695
        %v3451 = vpow.pop %v3450
        %v3452 = vmul.f32 %v3430, 1.442695
        %v3453 = vpow.pop %v3452
        %v3454 = vmul.f32 %v3431, 1.442695
        %v3455 = vpow.pop %v3454
        %v3456 = vmul.f32 %v3432, 1.442695
        %v3457 = vpow.pop %v3456
        %v3458 = vmul.f32 %v3433, 1.442695
        %v3459 = vpow.pop %v3458
        %v3460 = vmul.f32 %v3434, 1.442695
        %v3461 = vpow.pop %v3460
        %v3462 = vmul.f32 %v3435, 1.442695
        %v3463 = vpow.pop %v3462
        %v3464 = vmul.f32 %v3436, 1.442695
        %v3465 = vpow.pop %v3464
        %v3466 = vmul.f32 %v3437, 1.442695
        %v3467 = vpow.pop %v3466
        %v3468 = vmul.f32 %v3438, 1.442695
        %v3469 = vpow.pop %v3468
        %v3470 = vmul.f32 %v3439, 1.442695
        %v3471 = vpow.pop %v3470
        %v3472 = vadd.f32 %v3441, 1.0
        %v3473 = vadd.f32 %v3443, 1.0
        %v3474 = vadd.f32 %v3445, 1.0
        %v3475 = vadd.f32 %v3447, 1.0
        %v3476 = vadd.f32 %v3449, 1.0
        %v3477 = vadd.f32 %v3451, 1.0
        %v3478 = vadd.f32 %v3453, 1.0
        %v3479 = vadd.f32 %v3455, 1.0
        %v3480 = vadd.f32 %v3457, 1.0
        %v3481 = vadd.f32 %v3459, 1.0
        %v3482 = vadd.f32 %v3461, 1.0
        %v3483 = vadd.f32 %v3463, 1.0
        %v3484 = vadd.f32 %v3465, 1.0
        %v3485 = vadd.f32 %v3467, 1.0
        %v3486 = vadd.f32 %v3469, 1.0
        %v3487 = vadd.f32 %v3471, 1.0
        %v3488 = vrcp.pop %v3472
        %v3489 = vmul.f32 1.0, %v3488
        %v3490 = vrcp.pop %v3473
        %v3491 = vmul.f32 1.0, %v3490
        %v3492 = vrcp.pop %v3474
        %v3493 = vmul.f32 1.0, %v3492
        %v3494 = vrcp.pop %v3475
        %v3495 = vmul.f32 1.0, %v3494
        %v3496 = vrcp.pop %v3476
        %v3497 = vmul.f32 1.0, %v3496
        %v3498 = vrcp.pop %v3477
        %v3499 = vmul.f32 1.0, %v3498
        %v3500 = vrcp.pop %v3478
        %v3501 = vmul.f32 1.0, %v3500
        %v3502 = vrcp.pop %v3479
        %v3503 = vmul.f32 1.0, %v3502
        %v3504 = vrcp.pop %v3480
        %v3505 = vmul.f32 1.0, %v3504
        %v3506 = vrcp.pop %v3481
        %v3507 = vmul.f32 1.0, %v3506
        %v3508 = vrcp.pop %v3482
        %v3509 = vmul.f32 1.0, %v3508
        %v3510 = vrcp.pop %v3483
        %v3511 = vmul.f32 1.0, %v3510
        %v3512 = vrcp.pop %v3484
        %v3513 = vmul.f32 1.0, %v3512
        %v3514 = vrcp.pop %v3485
        %v3515 = vmul.f32 1.0, %v3514
        %v3516 = vrcp.pop %v3486
        %v3517 = vmul.f32 1.0, %v3516
        %v3518 = vrcp.pop %v3487
        %v3519 = vmul.f32 1.0, %v3518
        %3536 = vrot.lane.b32.xlu0 %v3489, 64
        %v3537 = vpop.permute.xlu0 %3536
        %3538 = vrot.lane.b32.xlu0 %v3491, 64
        %v3539 = vpop.permute.xlu0 %3538
        %3540 = vrot.lane.b32.xlu0 %v3493, 64
        %v3541 = vpop.permute.xlu0 %3540
        %3542 = vrot.lane.b32.xlu0 %v3495, 64
        %v3543 = vpop.permute.xlu0 %3542
        %3544 = vrot.lane.b32.xlu0 %v3497, 64
        %v3545 = vpop.permute.xlu0 %3544
        %3546 = vrot.lane.b32.xlu0 %v3499, 64
        %v3547 = vpop.permute.xlu0 %3546
        %3548 = vrot.lane.b32.xlu0 %v3501, 64
        %v3549 = vpop.permute.xlu0 %3548
        %3550 = vrot.lane.b32.xlu0 %v3503, 64
        %v3551 = vpop.permute.xlu0 %3550
        %3552 = vrot.lane.b32.xlu0 %v3505, 64
        %v3553 = vpop.permute.xlu0 %3552
        %3554 = vrot.lane.b32.xlu0 %v3507, 64
        %v3555 = vpop.permute.xlu0 %3554
        %3556 = vrot.lane.b32.xlu0 %v3509, 64
        %v3557 = vpop.permute.xlu0 %3556
        %3558 = vrot.lane.b32.xlu0 %v3511, 64
        %v3559 = vpop.permute.xlu0 %3558
        %3560 = vrot.lane.b32.xlu0 %v3513, 64
        %v3561 = vpop.permute.xlu0 %3560
        %3562 = vrot.lane.b32.xlu0 %v3515, 64
        %v3563 = vpop.permute.xlu0 %3562
        %3564 = vrot.lane.b32.xlu0 %v3517, 64
        %v3565 = vpop.permute.xlu0 %3564
        %3566 = vrot.lane.b32.xlu0 %v3519, 64
        %v3567 = vpop.permute.xlu0 %3566
        %v3584 = vmul.f32 %v3408, %v3537
        %v3585 = vmul.f32 %v3409, %v3539
        %v3586 = vmul.f32 %v3410, %v3541
        %v3587 = vmul.f32 %v3411, %v3543
        %v3588 = vmul.f32 %v3412, %v3545
        %v3589 = vmul.f32 %v3413, %v3547
        %v3590 = vmul.f32 %v3414, %v3549
        %v3591 = vmul.f32 %v3415, %v3551
        %v3592 = vmul.f32 %v3416, %v3553
        %v3593 = vmul.f32 %v3417, %v3555
        %v3594 = vmul.f32 %v3418, %v3557
        %v3595 = vmul.f32 %v3419, %v3559
        %v3596 = vmul.f32 %v3420, %v3561
        %v3597 = vmul.f32 %v3421, %v3563
        %v3598 = vmul.f32 %v3422, %v3565
        %v3599 = vmul.f32 %v3423, %v3567
        %v3600 = vpack.c.bf16 %v3585, %v3584
        %v3601 = vpack.c.bf16 %v3587, %v3586
        %v3602 = vpack.c.bf16 %v3589, %v3588
        %v3603 = vpack.c.bf16 %v3591, %v3590
        %v3604 = vpack.c.bf16 %v3593, %v3592
        %v3605 = vpack.c.bf16 %v3595, %v3594
        %v3606 = vpack.c.bf16 %v3597, %v3596
        %v3607 = vpack.c.bf16 %v3599, %v3598
        %s3608 = scalar_lea.vmem %s8, 8
        %v3609 = vld [vmem:[%s3608] sm:$0xf]
        %v3611 = vsel %vm3103, %v3609, 0
        %v3614 = vsel %vm3103, %v3600, 0
        %v3617 = vsel %vm3103, %v3601, 0
        %v3620 = vsel %vm3103, %v3602, 0
        %v3623 = vsel %vm3103, %v3603, 0
        %v3626 = vsel %vm3103, %v3604, 0
        %v3629 = vsel %vm3103, %v3605, 0
        %v3632 = vsel %vm3103, %v3606, 0
        %v3635 = vsel %vm3103, %v3607, 0
        %3637 = vmatprep.subr.bf16.mxu0 0
        %3638 = vmatpush1.bf16.xpose.msra.mxu0 %v3635
        %3639 = vmatprep.subr.bf16.mxu0 0
        %3640 = vmatpush1.bf16.xpose.msra.mxu0 %v3632
        %3641 = vmatprep.subr.bf16.mxu0 0
        %3642 = vmatpush1.bf16.xpose.msra.mxu0 %v3629
        %3643 = vmatprep.subr.bf16.mxu0 0
        %3644 = vmatpush1.bf16.xpose.msra.mxu0 %v3626
        %3645 = vmatprep.subr.bf16.mxu0 0
        %3646 = vmatpush1.bf16.xpose.msra.mxu0 %v3623
        %3647 = vmatprep.subr.bf16.mxu0 0
        %3648 = vmatpush1.bf16.xpose.msra.mxu0 %v3620
        %3649 = vmatprep.subr.bf16.mxu0 0
        %3650 = vmatpush1.bf16.xpose.msra.mxu0 %v3617
        %3651 = vmatprep.subr.bf16.mxu0 0
        %3652 = vmatpush1.bf16.xpose.msra.mxu0 %v3614
        %3653 = vmatprep.subr.bf16.mxu0 0
        %3654 = vmatpush2.bf16.xpose.msra.mxu0 0
        %3655 = vmatprep.subr.bf16.mxu0 0
        %3656 = vmatpush2.bf16.xpose.msra.mxu0 0
        %3657 = vmatprep.subr.bf16.mxu0 0
        %3658 = vmatpush2.bf16.xpose.msra.mxu0 0
        %3659 = vmatprep.subr.bf16.mxu0 0
        %3660 = vmatpush2.bf16.xpose.msra.mxu0 0
        %3661 = vmatprep.subr.bf16.mxu0 0
        %3662 = vmatpush2.bf16.xpose.msra.mxu0 0
        %3663 = vmatprep.subr.bf16.mxu0 0
        %3664 = vmatpush2.bf16.xpose.msra.mxu0 0
        %3665 = vmatprep.subr.bf16.mxu0 0
        %3666 = vmatpush2.bf16.xpose.msra.mxu0 0
        %3667 = vmatprep.subr.bf16.mxu0 0
        %3668 = vmatpush2.bf16.xpose.msra.mxu0 0
        %3669 = vmatprep.mubr.bf16.mxu0 0
        %3670 = vmatmul.mubr.bf16.gmra.mxu0 %v3611
        %v3671 = vpop.f32.mrf.mxu0
        %v3672 = vadd.f32 0.0, %v3671
        %v3673 = vpop.f32.mrf.mxu0
        %v3674 = vpop.f32.mrf.mxu0
        %v3675 = vpop.f32.mrf.mxu0
        %3676 = vdwg.mxu0
        %v3677 = vadd.f32 %v3233, %v3672
        %s3678 = scalar_lea.vmem [#allocation15], 192
        %v3679 = vld [vmem:[%s3678] sm:$0xf]
        %v3680 = vld [vmem:[%s3678 + $0x4] sm:$0xf]
        %v3681 = vld [vmem:[%s3678 + $0x8] sm:$0xf]
        %v3682 = vld [vmem:[%s3678 + $0xc] sm:$0xf]
        %v3683 = vld [vmem:[%s3678 + $0x10] sm:$0xf]
        %v3684 = vld [vmem:[%s3678 + $0x14] sm:$0xf]
        %v3685 = vld [vmem:[%s3678 + $0x18] sm:$0xf]
        %v3686 = vld [vmem:[%s3678 + $0x1c] sm:$0xf]
        %v3687 = vld [vmem:[%s3678 + $0x20] sm:$0xf]
        %v3688 = vld [vmem:[%s3678 + $0x24] sm:$0xf]
        %v3689 = vld [vmem:[%s3678 + $0x28] sm:$0xf]
        %v3690 = vld [vmem:[%s3678 + $0x2c] sm:$0xf]
        %v3691 = vld [vmem:[%s3678 + $0x30] sm:$0xf]
        %v3692 = vld [vmem:[%s3678 + $0x34] sm:$0xf]
        %v3693 = vld [vmem:[%s3678 + $0x38] sm:$0xf]
        %v3694 = vld [vmem:[%s3678 + $0x3c] sm:$0xf]
        %s3695 = scalar_lea.vmem [#allocation16], 3
        %v3696 = vld [vmem:[%s3695] sm:$0x1]
        %v3698 = vlaneseq
        %v3699 = vshrl.u32 %v3698, 7
        %v3700 = vsub.s32 0, %v3699
        %v3701 = vrot.slane %v3696, %v3700
        %v3719 = vunpack.c.l.b16 %v3679
        %v3720 = vunpack.c.l.b16 %v3680
        %v3721 = vunpack.c.l.b16 %v3681
        %v3722 = vunpack.c.l.b16 %v3682
        %v3723 = vunpack.c.l.b16 %v3683
        %v3724 = vunpack.c.l.b16 %v3684
        %v3725 = vunpack.c.l.b16 %v3685
        %v3726 = vunpack.c.l.b16 %v3686
        %v3727 = vunpack.c.l.b16 %v3687
        %v3728 = vunpack.c.l.b16 %v3688
        %v3729 = vunpack.c.l.b16 %v3689
        %v3730 = vunpack.c.l.b16 %v3690
        %v3731 = vunpack.c.l.b16 %v3691
        %v3732 = vunpack.c.l.b16 %v3692
        %v3733 = vunpack.c.l.b16 %v3693
        %v3734 = vunpack.c.l.b16 %v3694
        %v3735 = vpack.c.b16 %v3720, %v3719
        %v3736 = vpack.c.b16 %v3722, %v3721
        %v3737 = vpack.c.b16 %v3724, %v3723
        %v3738 = vpack.c.b16 %v3726, %v3725
        %v3739 = vpack.c.b16 %v3728, %v3727
        %v3740 = vpack.c.b16 %v3730, %v3729
        %v3741 = vpack.c.b16 %v3732, %v3731
        %v3742 = vpack.c.b16 %v3734, %v3733
        %3751 = vmatprep.subr.bf16.mxu0 0
        %3752 = vmatpush1.bf16.msra.mxu0 %v3742
        %3753 = vmatprep.subr.bf16.mxu0 0
        %3754 = vmatpush1.bf16.msra.mxu0 %v3741
        %3755 = vmatprep.subr.bf16.mxu0 0
        %3756 = vmatpush1.bf16.msra.mxu0 %v3740
        %3757 = vmatprep.subr.bf16.mxu0 0
        %3758 = vmatpush1.bf16.msra.mxu0 %v3739
        %3759 = vmatprep.subr.bf16.mxu0 0
        %3760 = vmatpush1.bf16.msra.mxu0 %v3738
        %3761 = vmatprep.subr.bf16.mxu0 0
        %3762 = vmatpush1.bf16.msra.mxu0 %v3737
        %3763 = vmatprep.subr.bf16.mxu0 0
        %3764 = vmatpush1.bf16.msra.mxu0 %v3736
        %3765 = vmatprep.subr.bf16.mxu0 0
        %3766 = vmatpush1.bf16.msra.mxu0 %v3735
        %3767 = vmatprep.subr.bf16.mxu0 0
        %3768 = vmatpush2.bf16.msra.mxu0 0
        %3769 = vmatprep.subr.bf16.mxu0 0
        %3770 = vmatpush2.bf16.msra.mxu0 0
        %3771 = vmatprep.subr.bf16.mxu0 0
        %3772 = vmatpush2.bf16.msra.mxu0 0
        %3773 = vmatprep.subr.bf16.mxu0 0
        %3774 = vmatpush2.bf16.msra.mxu0 0
        %3775 = vmatprep.subr.bf16.mxu0 0
        %3776 = vmatpush2.bf16.msra.mxu0 0
        %3777 = vmatprep.subr.bf16.mxu0 0
        %3778 = vmatpush2.bf16.msra.mxu0 0
        %3779 = vmatprep.subr.bf16.mxu0 0
        %3780 = vmatpush2.bf16.msra.mxu0 0
        %3781 = vmatprep.subr.bf16.mxu0 0
        %3782 = vmatpush2.bf16.msra.mxu0 0
        %3783 = vmatprep.mubr.bf16.mxu0 0
        %3784 = vmatmul.mubr.bf16.gmra.mxu0 %v2333
        %v3785 = vpop.f32.mrf.mxu0
        %v3786 = vadd.f32 %v3701, %v3785
        %v3787 = vpop.f32.mrf.mxu0
        %v3788 = vpop.f32.mrf.mxu0
        %v3789 = vadd.f32 %v3701, %v3788
        %v3790 = vpop.f32.mrf.mxu0
        %3791 = vmatprep.mubr.bf16.mxu0 0
        %3792 = vmatmul.mubr.bf16.gmra.mxu0 %v2337
        %v3793 = vpop.f32.mrf.mxu0
        %v3794 = vadd.f32 %v3701, %v3793
        %v3795 = vpop.f32.mrf.mxu0
        %v3796 = vpop.f32.mrf.mxu0
        %v3797 = vadd.f32 %v3701, %v3796
        %v3798 = vpop.f32.mrf.mxu0
        %3799 = vmatprep.mubr.bf16.mxu0 0
        %3800 = vmatmul.mubr.bf16.gmra.mxu0 %v2341
        %v3801 = vpop.f32.mrf.mxu0
        %v3802 = vadd.f32 %v3701, %v3801
        %v3803 = vpop.f32.mrf.mxu0
        %v3804 = vpop.f32.mrf.mxu0
        %v3805 = vadd.f32 %v3701, %v3804
        %v3806 = vpop.f32.mrf.mxu0
        %3807 = vmatprep.mubr.bf16.mxu0 0
        %3808 = vmatmul.mubr.bf16.gmra.mxu0 %v2345
        %v3809 = vpop.f32.mrf.mxu0
        %v3810 = vadd.f32 %v3701, %v3809
        %v3811 = vpop.f32.mrf.mxu0
        %v3812 = vpop.f32.mrf.mxu0
        %v3813 = vadd.f32 %v3701, %v3812
        %v3814 = vpop.f32.mrf.mxu0
        %3815 = vmatprep.mubr.bf16.mxu0 0
        %3816 = vmatmul.mubr.bf16.gmra.mxu0 %v2349
        %v3817 = vpop.f32.mrf.mxu0
        %v3818 = vadd.f32 %v3701, %v3817
        %v3819 = vpop.f32.mrf.mxu0
        %v3820 = vpop.f32.mrf.mxu0
        %v3821 = vadd.f32 %v3701, %v3820
        %v3822 = vpop.f32.mrf.mxu0
        %3823 = vmatprep.mubr.bf16.mxu0 0
        %3824 = vmatmul.mubr.bf16.gmra.mxu0 %v2353
        %v3825 = vpop.f32.mrf.mxu0
        %v3826 = vadd.f32 %v3701, %v3825
        %v3827 = vpop.f32.mrf.mxu0
        %v3828 = vpop.f32.mrf.mxu0
        %v3829 = vadd.f32 %v3701, %v3828
        %v3830 = vpop.f32.mrf.mxu0
        %3831 = vmatprep.mubr.bf16.mxu0 0
        %3832 = vmatmul.mubr.bf16.gmra.mxu0 %v2357
        %v3833 = vpop.f32.mrf.mxu0
        %v3834 = vadd.f32 %v3701, %v3833
        %v3835 = vpop.f32.mrf.mxu0
        %v3836 = vpop.f32.mrf.mxu0
        %v3837 = vadd.f32 %v3701, %v3836
        %v3838 = vpop.f32.mrf.mxu0
        %3839 = vmatprep.mubr.bf16.mxu0 0
        %3840 = vmatmul.mubr.bf16.gmra.mxu0 %v2361
        %v3841 = vpop.f32.mrf.mxu0
        %v3842 = vadd.f32 %v3701, %v3841
        %v3843 = vpop.f32.mrf.mxu0
        %v3844 = vpop.f32.mrf.mxu0
        %v3845 = vadd.f32 %v3701, %v3844
        %v3846 = vpop.f32.mrf.mxu0
        %3847 = vdwg.mxu0
        %v3848 = vtanh.pop %v3786
        %v3849 = vtanh.pop %v3789
        %v3850 = vtanh.pop %v3794
        %v3851 = vtanh.pop %v3797
        %v3852 = vtanh.pop %v3802
        %v3853 = vtanh.pop %v3805
        %v3854 = vtanh.pop %v3810
        %v3855 = vtanh.pop %v3813
        %v3856 = vtanh.pop %v3818
        %v3857 = vtanh.pop %v3821
        %v3858 = vtanh.pop %v3826
        %v3859 = vtanh.pop %v3829
        %v3860 = vtanh.pop %v3834
        %v3861 = vtanh.pop %v3837
        %v3862 = vtanh.pop %v3842
        %v3863 = vtanh.pop %v3845
        %v3864 = vxor.u32 %v3786, 2147483648
        %v3865 = vxor.u32 %v3789, 2147483648
        %v3866 = vxor.u32 %v3794, 2147483648
        %v3867 = vxor.u32 %v3797, 2147483648
        %v3868 = vxor.u32 %v3802, 2147483648
        %v3869 = vxor.u32 %v3805, 2147483648
        %v3870 = vxor.u32 %v3810, 2147483648
        %v3871 = vxor.u32 %v3813, 2147483648
        %v3872 = vxor.u32 %v3818, 2147483648
        %v3873 = vxor.u32 %v3821, 2147483648
        %v3874 = vxor.u32 %v3826, 2147483648
        %v3875 = vxor.u32 %v3829, 2147483648
        %v3876 = vxor.u32 %v3834, 2147483648
        %v3877 = vxor.u32 %v3837, 2147483648
        %v3878 = vxor.u32 %v3842, 2147483648
        %v3879 = vxor.u32 %v3845, 2147483648
        %v3880 = vmul.f32 %v3864, 1.442695
        %v3881 = vpow.pop %v3880
        %v3882 = vmul.f32 %v3865, 1.442695
        %v3883 = vpow.pop %v3882
        %v3884 = vmul.f32 %v3866, 1.442695
        %v3885 = vpow.pop %v3884
        %v3886 = vmul.f32 %v3867, 1.442695
        %v3887 = vpow.pop %v3886
        %v3888 = vmul.f32 %v3868, 1.442695
        %v3889 = vpow.pop %v3888
        %v3890 = vmul.f32 %v3869, 1.442695
        %v3891 = vpow.pop %v3890
        %v3892 = vmul.f32 %v3870, 1.442695
        %v3893 = vpow.pop %v3892
        %v3894 = vmul.f32 %v3871, 1.442695
        %v3895 = vpow.pop %v3894
        %v3896 = vmul.f32 %v3872, 1.442695
        %v3897 = vpow.pop %v3896
        %v3898 = vmul.f32 %v3873, 1.442695
        %v3899 = vpow.pop %v3898
        %v3900 = vmul.f32 %v3874, 1.442695
        %v3901 = vpow.pop %v3900
        %v3902 = vmul.f32 %v3875, 1.442695
        %v3903 = vpow.pop %v3902
        %v3904 = vmul.f32 %v3876, 1.442695
        %v3905 = vpow.pop %v3904
        %v3906 = vmul.f32 %v3877, 1.442695
        %v3907 = vpow.pop %v3906
        %v3908 = vmul.f32 %v3878, 1.442695
        %v3909 = vpow.pop %v3908
        %v3910 = vmul.f32 %v3879, 1.442695
        %v3911 = vpow.pop %v3910
        %v3912 = vadd.f32 %v3881, 1.0
        %v3913 = vadd.f32 %v3883, 1.0
        %v3914 = vadd.f32 %v3885, 1.0
        %v3915 = vadd.f32 %v3887, 1.0
        %v3916 = vadd.f32 %v3889, 1.0
        %v3917 = vadd.f32 %v3891, 1.0
        %v3918 = vadd.f32 %v3893, 1.0
        %v3919 = vadd.f32 %v3895, 1.0
        %v3920 = vadd.f32 %v3897, 1.0
        %v3921 = vadd.f32 %v3899, 1.0
        %v3922 = vadd.f32 %v3901, 1.0
        %v3923 = vadd.f32 %v3903, 1.0
        %v3924 = vadd.f32 %v3905, 1.0
        %v3925 = vadd.f32 %v3907, 1.0
        %v3926 = vadd.f32 %v3909, 1.0
        %v3927 = vadd.f32 %v3911, 1.0
        %v3928 = vrcp.pop %v3912
        %v3929 = vmul.f32 1.0, %v3928
        %v3930 = vrcp.pop %v3913
        %v3931 = vmul.f32 1.0, %v3930
        %v3932 = vrcp.pop %v3914
        %v3933 = vmul.f32 1.0, %v3932
        %v3934 = vrcp.pop %v3915
        %v3935 = vmul.f32 1.0, %v3934
        %v3936 = vrcp.pop %v3916
        %v3937 = vmul.f32 1.0, %v3936
        %v3938 = vrcp.pop %v3917
        %v3939 = vmul.f32 1.0, %v3938
        %v3940 = vrcp.pop %v3918
        %v3941 = vmul.f32 1.0, %v3940
        %v3942 = vrcp.pop %v3919
        %v3943 = vmul.f32 1.0, %v3942
        %v3944 = vrcp.pop %v3920
        %v3945 = vmul.f32 1.0, %v3944
        %v3946 = vrcp.pop %v3921
        %v3947 = vmul.f32 1.0, %v3946
        %v3948 = vrcp.pop %v3922
        %v3949 = vmul.f32 1.0, %v3948
        %v3950 = vrcp.pop %v3923
        %v3951 = vmul.f32 1.0, %v3950
        %v3952 = vrcp.pop %v3924
        %v3953 = vmul.f32 1.0, %v3952
        %v3954 = vrcp.pop %v3925
        %v3955 = vmul.f32 1.0, %v3954
        %v3956 = vrcp.pop %v3926
        %v3957 = vmul.f32 1.0, %v3956
        %v3958 = vrcp.pop %v3927
        %v3959 = vmul.f32 1.0, %v3958
        %3976 = vrot.lane.b32.xlu0 %v3929, 64
        %v3977 = vpop.permute.xlu0 %3976
        %3978 = vrot.lane.b32.xlu0 %v3931, 64
        %v3979 = vpop.permute.xlu0 %3978
        %3980 = vrot.lane.b32.xlu0 %v3933, 64
        %v3981 = vpop.permute.xlu0 %3980
        %3982 = vrot.lane.b32.xlu0 %v3935, 64
        %v3983 = vpop.permute.xlu0 %3982
        %3984 = vrot.lane.b32.xlu0 %v3937, 64
        %v3985 = vpop.permute.xlu0 %3984
        %3986 = vrot.lane.b32.xlu0 %v3939, 64
        %v3987 = vpop.permute.xlu0 %3986
        %3988 = vrot.lane.b32.xlu0 %v3941, 64
        %v3989 = vpop.permute.xlu0 %3988
        %3990 = vrot.lane.b32.xlu0 %v3943, 64
        %v3991 = vpop.permute.xlu0 %3990
        %3992 = vrot.lane.b32.xlu0 %v3945, 64
        %v3993 = vpop.permute.xlu0 %3992
        %3994 = vrot.lane.b32.xlu0 %v3947, 64
        %v3995 = vpop.permute.xlu0 %3994
        %3996 = vrot.lane.b32.xlu0 %v3949, 64
        %v3997 = vpop.permute.xlu0 %3996
        %3998 = vrot.lane.b32.xlu0 %v3951, 64
        %v3999 = vpop.permute.xlu0 %3998
        %4000 = vrot.lane.b32.xlu0 %v3953, 64
        %v4001 = vpop.permute.xlu0 %4000
        %4002 = vrot.lane.b32.xlu0 %v3955, 64
        %v4003 = vpop.permute.xlu0 %4002
        %4004 = vrot.lane.b32.xlu0 %v3957, 64
        %v4005 = vpop.permute.xlu0 %4004
        %4006 = vrot.lane.b32.xlu0 %v3959, 64
        %v4007 = vpop.permute.xlu0 %4006
        %v4024 = vmul.f32 %v3848, %v3977
        %v4025 = vmul.f32 %v3849, %v3979
        %v4026 = vmul.f32 %v3850, %v3981
        %v4027 = vmul.f32 %v3851, %v3983
        %v4028 = vmul.f32 %v3852, %v3985
        %v4029 = vmul.f32 %v3853, %v3987
        %v4030 = vmul.f32 %v3854, %v3989
        %v4031 = vmul.f32 %v3855, %v3991
        %v4032 = vmul.f32 %v3856, %v3993
        %v4033 = vmul.f32 %v3857, %v3995
        %v4034 = vmul.f32 %v3858, %v3997
        %v4035 = vmul.f32 %v3859, %v3999
        %v4036 = vmul.f32 %v3860, %v4001
        %v4037 = vmul.f32 %v3861, %v4003
        %v4038 = vmul.f32 %v3862, %v4005
        %v4039 = vmul.f32 %v3863, %v4007
        %v4040 = vpack.c.bf16 %v4025, %v4024
        %v4041 = vpack.c.bf16 %v4027, %v4026
        %v4042 = vpack.c.bf16 %v4029, %v4028
        %v4043 = vpack.c.bf16 %v4031, %v4030
        %v4044 = vpack.c.bf16 %v4033, %v4032
        %v4045 = vpack.c.bf16 %v4035, %v4034
        %v4046 = vpack.c.bf16 %v4037, %v4036
        %v4047 = vpack.c.bf16 %v4039, %v4038
        %s4048 = scalar_lea.vmem %s8, 12
        %v4049 = vld [vmem:[%s4048] sm:$0xf]
        %v4051 = vsel %vm3103, %v4049, 0
        %v4054 = vsel %vm3103, %v4040, 0
        %v4057 = vsel %vm3103, %v4041, 0
        %v4060 = vsel %vm3103, %v4042, 0
        %v4063 = vsel %vm3103, %v4043, 0
        %v4066 = vsel %vm3103, %v4044, 0
        %v4069 = vsel %vm3103, %v4045, 0
        %v4072 = vsel %vm3103, %v4046, 0
        %v4075 = vsel %vm3103, %v4047, 0
        %4077 = vmatprep.subr.bf16.mxu0 0
        %4078 = vmatpush1.bf16.xpose.msra.mxu0 %v4075
        %4079 = vmatprep.subr.bf16.mxu0 0
        %4080 = vmatpush1.bf16.xpose.msra.mxu0 %v4072
        %4081 = vmatprep.subr.bf16.mxu0 0
        %4082 = vmatpush1.bf16.xpose.msra.mxu0 %v4069
        %4083 = vmatprep.subr.bf16.mxu0 0
        %4084 = vmatpush1.bf16.xpose.msra.mxu0 %v4066
        %4085 = vmatprep.subr.bf16.mxu0 0
        %4086 = vmatpush1.bf16.xpose.msra.mxu0 %v4063
        %4087 = vmatprep.subr.bf16.mxu0 0
        %4088 = vmatpush1.bf16.xpose.msra.mxu0 %v4060
        %4089 = vmatprep.subr.bf16.mxu0 0
        %4090 = vmatpush1.bf16.xpose.msra.mxu0 %v4057
        %4091 = vmatprep.subr.bf16.mxu0 0
        %4092 = vmatpush1.bf16.xpose.msra.mxu0 %v4054
        %4093 = vmatprep.subr.bf16.mxu0 0
        %4094 = vmatpush2.bf16.xpose.msra.mxu0 0
        %4095 = vmatprep.subr.bf16.mxu0 0
        %4096 = vmatpush2.bf16.xpose.msra.mxu0 0
        %4097 = vmatprep.subr.bf16.mxu0 0
        %4098 = vmatpush2.bf16.xpose.msra.mxu0 0
        %4099 = vmatprep.subr.bf16.mxu0 0
        %4100 = vmatpush2.bf16.xpose.msra.mxu0 0
        %4101 = vmatprep.subr.bf16.mxu0 0
        %4102 = vmatpush2.bf16.xpose.msra.mxu0 0
        %4103 = vmatprep.subr.bf16.mxu0 0
        %4104 = vmatpush2.bf16.xpose.msra.mxu0 0
        %4105 = vmatprep.subr.bf16.mxu0 0
        %4106 = vmatpush2.bf16.xpose.msra.mxu0 0
        %4107 = vmatprep.subr.bf16.mxu0 0
        %4108 = vmatpush2.bf16.xpose.msra.mxu0 0
        %4109 = vmatprep.mubr.bf16.mxu0 0
        %4110 = vmatmul.mubr.bf16.gmra.mxu0 %v4051
        %v4111 = vpop.f32.mrf.mxu0
        %v4112 = vadd.f32 0.0, %v4111
        %v4113 = vpop.f32.mrf.mxu0
        %v4114 = vpop.f32.mrf.mxu0
        %v4115 = vpop.f32.mrf.mxu0
        %4116 = vdwg.mxu0
        %v4117 = vadd.f32 %v3677, %v4112
        %v4118 = vld [vmem:[%s9] sm:$0xff]
        %4120 = vset.pattern.permute.xlu0 0
        %4121 = vperm.xlu0 %4120, %v4118
        %v4122 = vpop.permute.xlu0 %4121
        %v4124 = vadd.f32 %v4117, %v4122
        %4125 = vst [vmem:[%s531] sm:$0xff] %v4124
        %v4126 = vlaneseq
        %v4127 = vand.u32 %v4126, 127
        %vm4128 = vcmp.lt.s32.totalorder %v4127, %v867
        %v4129 = vsel %vm4128, 1, 0
        %vm4130 = vcmp.eq.s32.totalorder %v4129, 1
        %v4131 = vsel %vm4130, %v4124, -inf
        %4132 = vmax.xlane.f32.xlu0 %v4131
        %v4133 = vpop.xlane.xlu0 %4132
        %v4134 = vld [vmem:[#allocation2] sm:$0xff]
        %v4135 = vmax.f32 %v4134, %v4133
        %v4136 = vsub.f32 %v4134, %v4135
        %v4137 = vmul.f32 %v4136, 1.442695
        %v4138 = vpow.pop %v4137
        %4140 = vset.pattern.permute.xlu0 0
        %4141 = vperm.xlu0 %4140, %v4135
        %v4142 = vpop.permute.xlu0 %4141
        %v4144 = vsub.f32 %v4131, %v4142
        %v4145 = vmul.f32 %v4144, 1.442695
        %v4146 = vpow.pop %v4145
        %v4147 = vld [vmem:[#allocation3] sm:$0xff]
        %v4148 = vmul.f32 %v4138, %v4147
        %4149 = vadd.xlane.f32.xlu0 %v4146
        %v4150 = vpop.xlane.xlu0 %4149
        %v4151 = vadd.f32 %v4148, %v4150
        %vm4152 = vcmask 7168
        %4153 = vst.msk [vmem:[#allocation3] sm:$0xff] %vm4152, %v4151
        %v4154 = vld [vmem:[#allocation4] sm:$0xff]
        %4156 = vset.pattern.permute.xlu0 0
        %4157 = vperm.xlu0 %4156, %v4138
        %v4158 = vpop.permute.xlu0 %4157
        %v4160 = vmul.f32 %v4158, %v4154
        %v4161 = vpack.c.bf16 %v4146, %v4146
        %4162 = vmatprep.subr.bf16.mxu0 0
        %4163 = vmatpush1.bf16.msra.mxu0 %v939
        %4164 = vmatprep.subr.bf16.mxu0 0
        %4165 = vmatpush1.bf16.msra.mxu0 %v938
        %4166 = vmatprep.subr.bf16.mxu0 0
        %4167 = vmatpush1.bf16.msra.mxu0 %v937
        %4168 = vmatprep.subr.bf16.mxu0 0
        %4169 = vmatpush1.bf16.msra.mxu0 %v936
        %4170 = vmatprep.subr.bf16.mxu0 0
        %4171 = vmatpush1.bf16.msra.mxu0 %v935
        %4172 = vmatprep.subr.bf16.mxu0 0
        %4173 = vmatpush1.bf16.msra.mxu0 %v934
        %4174 = vmatprep.subr.bf16.mxu0 0
        %4175 = vmatpush1.bf16.msra.mxu0 %v933
        %4176 = vmatprep.subr.bf16.mxu0 0
        %4177 = vmatpush1.bf16.msra.mxu0 %v932
        %4178 = vmatprep.subr.bf16.mxu0 0
        %4179 = vmatpush2.bf16.msra.mxu0 0
        %4180 = vmatprep.subr.bf16.mxu0 0
        %4181 = vmatpush2.bf16.msra.mxu0 0
        %4182 = vmatprep.subr.bf16.mxu0 0
        %4183 = vmatpush2.bf16.msra.mxu0 0
        %4184 = vmatprep.subr.bf16.mxu0 0
        %4185 = vmatpush2.bf16.msra.mxu0 0
        %4186 = vmatprep.subr.bf16.mxu0 0
        %4187 = vmatpush2.bf16.msra.mxu0 0
        %4188 = vmatprep.subr.bf16.mxu0 0
        %4189 = vmatpush2.bf16.msra.mxu0 0
        %4190 = vmatprep.subr.bf16.mxu0 0
        %4191 = vmatpush2.bf16.msra.mxu0 0
        %4192 = vmatprep.subr.bf16.mxu0 0
        %4193 = vmatpush2.bf16.msra.mxu0 0
        %4194 = vmatprep.mubr.bf16.mxu0 0
        %4195 = vmatmul.mubr.bf16.gmra.mxu0 %v4161
        %v4196 = vpop.f32.mrf.mxu0
        %v4197 = vadd.f32 0.0, %v4196
        %v4198 = vpop.f32.mrf.mxu0
        %v4199 = vpop.f32.mrf.mxu0
        %v4200 = vpop.f32.mrf.mxu0
        %4201 = vdwg.mxu0
        %v4202 = vadd.f32 %v4160, %v4197
        %4203 = vst [vmem:[#allocation4] sm:$0xff] %v4202
        %4204 = vst.msk [vmem:[#allocation2] sm:$0xff] %vm4152, %v4135
        %p4205 = scmp.eq.s32.totalorder %s37, 3
        // Predicated region
        $region93: #{tpu_custom_call.1} parent=63 // pred_check
          %p4206 = pneg %p4205
        $region94: #{tpu_custom_call.1} parent=63 // pred_check_branch
          %4208 = sbr.rel (%p4206) target = $region96
        $region95: #{tpu_custom_call.1} parent=63 // pred_region
          %v4209 = vld [vmem:[#allocation3] sm:$0xff]
          %v4210 = vrcp.pop %v4209
          %v4211 = vld [vmem:[#allocation4] sm:$0xff]
          %4213 = vset.pattern.permute.xlu0 0
          %4214 = vperm.xlu0 %4213, %v4210
          %v4215 = vpop.permute.xlu0 %4214
          %v4217 = vmul.f32 %v4211, %v4215
          %4218 = vst [vmem:[#allocation19] sm:$0xff] %v4217
          %v4219 = vld [vmem:[%s10] sm:$0xff]
          %v4220 = vmul.f32 %v4217, %v4219
          %4221 = vadd.xlane.f32.xlu0 %v4220
          %v4222 = vpop.xlane.xlu0 %4221
          %v4223 = vld [vmem:[%s11] sm:$0xff]
          %v4224 = vadd.f32 %v4222, %v4223
          %4225 = vst.msk [vmem:[%s14] sm:$0xff] %vm4152, %v4224
        $region96: #{tpu_custom_call.1} parent=63 // pred_fallthru
          _
        %s4226 = sand.u32 %s281, 1
        %s4227 = scalar_lea.sflag [#allocation9], %s4226
        %s4228 = sand.u32 %s281, 1
        %s4229 = smul.addr %s4228, 8
        %s4230 = scalar_lea.vmem [#allocation18], %s4229
        // Predicated region
        $region97: #{tpu_custom_call.1} parent=63 // pred_check
          %p4231 = pneg %p291
        $region98: #{tpu_custom_call.1} parent=63 // pred_check_branch
          %4233 = sbr.rel (%p4231) target = $region100
        $region99: #{tpu_custom_call.1} parent=63 // pred_region
          %s4235 = ssub.s32 128, 128
          %4236 = vsyncadd %s4227, %s4235
          %s4237 = smul.addr %s37, 128
          %s4238 = scalar_lea.hbm %s12, %s4237
          %s4240 = sshll.u32 %s4230, 4
          %s4241 = int_to_ptr.vmem [resolvable:$true] %s4240
          %4243 = dma.vmem_to_hbm [thread:$0]  %s4241, 128, %s4238, %s4227
        $region100: #{tpu_custom_call.1} parent=63 // pred_fallthru
          _
        // Predicated region
        $region101: #{tpu_custom_call.1} parent=63 // pred_check
          %p4244 = pneg %p312
        $region102: #{tpu_custom_call.1} parent=63 // pred_check_branch
          %4246 = sbr.rel (%p4244) target = $region104
        $region103: #{tpu_custom_call.1} parent=63 // pred_region
          %s4248 = ssub.s32 128, 128
          %4249 = vsyncadd [#allocation20], %s4248
          %s4251 = sshll.u32 [#allocation19], 4
          %s4252 = int_to_ptr.vmem [resolvable:$true] %s4251
          %4254 = dma.vmem_to_hbm [thread:$0]  %s4252, 128, %s13, [#allocation20]
        $region104: #{tpu_custom_call.1} parent=63 // pred_fallthru
          _
        // Predicated region
        $region105: #{tpu_custom_call.1} parent=63 // pred_check
          %p4255 = pneg %p333
        $region106: #{tpu_custom_call.1} parent=63 // pred_check_branch
          %4257 = sbr.rel (%p4255) target = $region108
        $region107: #{tpu_custom_call.1} parent=63 // pred_region
          _
        $region108: #{tpu_custom_call.1} parent=63 // pred_fallthru
          _
        // Predicated region
        $region109: #{tpu_custom_call.1} parent=63 // pred_check
          %p4258 = pneg %p312
        $region110: #{tpu_custom_call.1} parent=63 // pred_check_branch
          %4260 = sbr.rel (%p4258) target = $region112
        $region111: #{tpu_custom_call.1} parent=63 // pred_region
          %4261 = dma.done [#allocation20], 128
        $region112: #{tpu_custom_call.1} parent=63 // pred_fallthru
          _
        // Predicated region
        $region113: #{tpu_custom_call.1} parent=63 // pred_check
          %p4262 = pneg %p333
        $region114: #{tpu_custom_call.1} parent=63 // pred_check_branch
          %4264 = sbr.rel (%p4262) target = $region116
        $region115: #{tpu_custom_call.1} parent=63 // pred_region
          _
        $region116: #{tpu_custom_call.1} parent=63 // pred_fallthru
          _
      $region64: #{tpu_custom_call.1} parent=5 // pred_fallthru
        _
      %p4265 = scmp.le.s32.totalorder 2, %s32
      // Predicated region
      $region117: #{tpu_custom_call.1} parent=5 // pred_check
        %p4266 = pneg %p4265
      $region118: #{tpu_custom_call.1} parent=5 // pred_check_branch
        %4268 = sbr.rel (%p4266) target = $region120
      $region119: #{tpu_custom_call.1} parent=5 // pred_region
        %s4269 = ssub.s32 %s32, 2
        // Predicated region
        $region121: #{tpu_custom_call.1} parent=119 // pred_check
          %p4270 = pneg %p297
        $region122: #{tpu_custom_call.1} parent=119 // pred_check_branch
          %4272 = sbr.rel (%p4270) target = $region124
        $region123: #{tpu_custom_call.1} parent=119 // pred_region
          %s4273 = sand.u32 %s282, 1
          %s4274 = scalar_lea.sflag [#allocation9], %s4273
          %s4275 = sand.u32 %s282, 1
          %s4276 = smul.addr %s4275, 8
          %s4277 = scalar_lea.vmem [#allocation18], %s4276
          %4278 = dma.done %s4274, 128
        $region124: #{tpu_custom_call.1} parent=119 // pred_fallthru
          _
      $region120: #{tpu_custom_call.1} parent=5 // pred_fallthru
        _
    $region6: #{tpu_custom_call.1} parent=1 // loop_footer
      %s36 = sadd.s32 1, %s32
    $region7: #{tpu_custom_call.1} parent=1 // loop_footer_branch
      %31 = sbr.rel target = $region3
    $region8: #{tpu_custom_call.1} parent=1 // loop_exit
      _
    %4279 = vsyncpa [#allocation8], 1
    %s4280 = scalar_lea.sflag [#allocation8], 1
    %4281 = vsyncpa %s4280, 1
    %4282 = vsyncpa [#allocation11], 1
    %4283 = vsyncpa [#allocation14], 1
    %4284 = vsyncpa [#allocation17], 1
    %4285 = vsyncpa [#allocation9], 1
    %s4286 = scalar_lea.sflag [#allocation9], 1
    %4287 = vsyncpa %s4286, 1
    %4288 = vsyncpa [#allocation20], 1

</llo_original>
